<compile_context>
chip_gen: v7x
topology: tpu7x:2x2x1
jax: 0.10.0
libtpu: 0.0.40
codegen_flags: <defaults>
</compile_context>

<pallas_src>
import math
import functools

import jax
import jax.numpy as jnp
from jax.experimental import pallas as pl
from jax.experimental.pallas import tpu as pltpu


def _layernorm(y, gamma, beta, eps=1e-5):
    mu = jnp.mean(y, axis=-1, keepdims=True)
    var = jnp.mean((y - mu) ** 2, axis=-1, keepdims=True)
    return (y - mu) / jnp.sqrt(var + eps) * gamma + beta


def encoder_layer_kernel(num_heads,
                         x_ref, mask_ref,
                         wq_ref, wk_ref, wv_ref, wo_ref,
                         w1_ref, b1_ref, w2_ref, b2_ref,
                         g1_ref, be1_ref, g2_ref, be2_ref,
                         o_ref,
                         out1_scr, acc_scr):
    df_idx = pl.program_id(1)
    n_df = pl.num_programs(1)

    # ---- Stage 1 (first DF step only): attention + out-proj + res + LN1 ----
    @pl.when(df_idx == 0)
    def _attention():
        x_bf = x_ref[0]                                    # (S, D) bf16
        S, D = x_bf.shape
        hd = D // num_heads
        scale = 1.0 / math.sqrt(hd)

        # key-padding mask bias, built once (hoisted out of the head loop)
        mask_row = mask_ref[0].astype(jnp.float32)         # (1, S)
        mask_bias = jnp.broadcast_to(
            jnp.where(mask_row == 0.0, -1.0e10, 0.0), (S, S))

        # QKV projections: bf16 inputs on the MXU, f32 accumulation
        q = jnp.dot(x_bf, wq_ref[...],
                    preferred_element_type=jnp.float32).astype(jnp.bfloat16)
        k = jnp.dot(x_bf, wk_ref[...],
                    preferred_element_type=jnp.float32).astype(jnp.bfloat16)
        v = jnp.dot(x_bf, wv_ref[...],
                    preferred_element_type=jnp.float32).astype(jnp.bfloat16)

        # Heads = contiguous column slices.  Fold the output projection into
        # the loop (sum over heads of o_h @ wo[h]) -> no concatenate.
        attn_proj = jnp.zeros((S, D), jnp.float32)
        for h in range(num_heads):
            sl = slice(h * hd, (h + 1) * hd)
            qh = q[:, sl]                                  # (S, hd) bf16
            kh = k[:, sl]
            vh = v[:, sl]
            s = jax.lax.dot_general(
                qh, kh, (((1,), (1,)), ((), ())),
                preferred_element_type=jnp.float32) * scale     # (S, S) f32
            s = s + mask_bias
            m = jnp.max(s, axis=-1, keepdims=True)
            e = jnp.exp(s - m)
            p = e * pl.reciprocal(jnp.sum(e, axis=-1, keepdims=True),
                                  approx=True)
            oh = jnp.dot(p.astype(jnp.bfloat16), vh,
                         preferred_element_type=jnp.float32)    # (S, hd) f32
            wo_h = wo_ref[pl.ds(h * hd, hd), :]                 # (hd, D) bf16
            attn_proj = attn_proj + jnp.dot(
                oh.astype(jnp.bfloat16), wo_h,
                preferred_element_type=jnp.float32)             # (S, D) f32

        out1 = _layernorm(x_bf.astype(jnp.float32) + attn_proj,
                          g1_ref[...], be1_ref[...])
        out1_scr[...] = out1.astype(jnp.bfloat16)
        acc_scr[...] = jnp.zeros_like(acc_scr)

    # ---- Stage 2 (every DF step): FFN chunk over the hidden dim ----
    out1_bf = out1_scr[...]                                # (S, D) bf16
    h1 = jnp.dot(out1_bf, w1_ref[...],
                 preferred_element_type=jnp.float32) + b1_ref[...]
    h1 = jnp.maximum(h1, 0.0)                              # ReLU, f32
    acc_scr[...] += jnp.dot(h1.astype(jnp.bfloat16), w2_ref[...],
                            preferred_element_type=jnp.float32)

    # ---- Finalize (last DF step): bias2 + residual + LN2, lane-dense store --
    @pl.when(df_idx == n_df - 1)
    def _finalize():
        out2 = acc_scr[...] + b2_ref[...]
        y = out1_scr[...].astype(jnp.float32) + out2
        o_ref[0] = _layernorm(y, g2_ref[...], be2_ref[...]).astype(o_ref.dtype)


def encoder_layer(x, mask, params, num_heads, df_tile=None):
    bs, S, D = x.shape
    DF = params["w1"].shape[1]
    if df_tile is None:
        df_tile = next((t for t in (512, 256, 128) if DF % t == 0), DF)
    assert DF % df_tile == 0
    n_df = DF // df_tile

    bf16 = jnp.bfloat16
    x_bf = x.astype(bf16)
    mask3 = mask.reshape(bs, 1, S).astype(jnp.float32)

    wq = params["wq"].astype(bf16)
    wk = params["wk"].astype(bf16)
    wv = params["wv"].astype(bf16)
    wo = params["wo"].astype(bf16)
    w1 = params["w1"].astype(bf16)
    w2 = params["w2"].astype(bf16)
    b1 = params["b1"].astype(jnp.float32)
    b2 = params["b2"].astype(jnp.float32)
    g1 = params["g1"].astype(jnp.float32)
    be1 = params["be1"].astype(jnp.float32)
    g2 = params["g2"].astype(jnp.float32)
    be2 = params["be2"].astype(jnp.float32)

    full = lambda shape: pl.BlockSpec(shape, lambda b, j: tuple(0 for _ in shape))
    in_specs = [
        pl.BlockSpec((1, S, D), lambda b, j: (b, 0, 0)),    # x
        pl.BlockSpec((1, 1, S), lambda b, j: (b, 0, 0)),    # mask
        full((D, D)), full((D, D)), full((D, D)), full((D, D)),  # wq wk wv wo
        pl.BlockSpec((D, df_tile), lambda b, j: (0, j)),    # w1 chunk
        pl.BlockSpec((1, df_tile), lambda b, j: (0, j)),    # b1 chunk
        pl.BlockSpec((df_tile, D), lambda b, j: (j, 0)),    # w2 chunk
        full((1, D)),                                       # b2
        full((1, D)), full((1, D)),                         # norm1 gamma/beta
        full((1, D)), full((1, D)),                         # norm2 gamma/beta
    ]
    out_spec = pl.BlockSpec((1, S, D), lambda b, j: (b, 0, 0))

    kernel = functools.partial(encoder_layer_kernel, num_heads)
    return pl.pallas_call(
        kernel,
        out_shape=jax.ShapeDtypeStruct((bs, S, D), jnp.float32),
        grid=(bs, n_df),
        in_specs=in_specs,
        out_specs=out_spec,
        scratch_shapes=[pltpu.VMEM((S, D), bf16),          # out1 (LN1 output)
                        pltpu.VMEM((S, D), jnp.float32)],  # FFN accumulator
        compiler_params=pltpu.CompilerParams(
            dimension_semantics=("parallel", "arbitrary"),
            # explicit VMEM budget; conservative enough for v7x's 64 MiB parts
            vmem_limit_bytes=48 * 1024 * 1024),
    )(x_bf, mask3, wq, wk, wv, wo, w1, b1, w2, b2, g1, be1, g2, be2)


def reference(x, mask, P, num_heads):
    """Pure-JAX f32 mirror of the PyTorch forward (dropout = identity)."""
    bs, S, D = x.shape
    hd = D // num_heads
    q = x @ P["wq"]
    k = x @ P["wk"]
    v = x @ P["wv"]
    madd = jnp.where(mask == 0, -1.0e10, 0.0)[:, None, :]   # (bs, 1, S)
    outs = []
    for h in range(num_heads):
        sl = slice(h * hd, (h + 1) * hd)
        s = jnp.einsum("bqd,bkd->bqk", q[..., sl], k[..., sl]) / math.sqrt(hd)
        s = s + madd
        p = jax.nn.softmax(s, axis=-1)
        outs.append(jnp.einsum("bqk,bkd->bqd", p, v[..., sl]))
    attn = jnp.concatenate(outs, axis=-1)
    o1 = attn @ P["wo"]
    out1 = _layernorm(x + o1, P["g1"], P["be1"])
    out2 = jax.nn.relu(out1 @ P["w1"] + P["b1"]) @ P["w2"] + P["b2"]
    return _layernorm(out1 + out2, P["g2"], P["be2"])


if __name__ == "__main__":
    # Small but TPU-lane-aligned shapes (D, DF multiples of 128, S >= 128).
    bs, S, D, H, DF = 2, 128, 128, 4, 256

    key = jax.random.PRNGKey(0)
    ks = jax.random.split(key, 8)

    def xavier(k, shape):
        fan_in, fan_out = shape
        lim = math.sqrt(6.0 / (fan_in + fan_out))
        return jax.random.uniform(k, shape, jnp.float32, -lim, lim)

    params = {
        "wq": xavier(ks[0], (D, D)),
        "wk": xavier(ks[1], (D, D)),
        "wv": xavier(ks[2], (D, D)),
        "wo": xavier(ks[3], (D, D)),
        "w1": xavier(ks[4], (D, DF)),
        "b1": jnp.zeros((1, DF), jnp.float32),
        "w2": xavier(ks[5], (DF, D)),
        "b2": jnp.zeros((1, D), jnp.float32),
        "g1": jnp.ones((1, D), jnp.float32),
        "be1": jnp.zeros((1, D), jnp.float32),
        "g2": jnp.ones((1, D), jnp.float32),
        "be2": jnp.zeros((1, D), jnp.float32),
    }

    x = jax.random.normal(ks[6], (bs, S, D), jnp.float32)
    # padding mask: 1 = keep, 0 = masked-out key positions
    mask = jnp.ones((bs, S), jnp.float32).at[1, 96:].set(0.0)

    out = encoder_layer(x, mask, params, H, df_tile=128)
    out = jax.block_until_ready(out)

    ref = reference(x, mask, params, H)
    assert out.shape == (bs, S, D)
    err = float(jnp.max(jnp.abs(out - ref)))
    # bf16 matmul inputs -> relaxed tolerance vs. the f32 reference
    assert jnp.allclose(out, ref, atol=5e-2, rtol=5e-2), f"max abs err = {err}"

    print("KERNEL_OK")
</pallas_src>

<mosaic_0001>
module attributes {stable_mosaic.version = 11 : i64} {
  func.func @encoder_layer_kernel(%arg0: i32, %arg1: i32, %arg2: memref<1x128x128xbf16, #tpu.memory_space<vmem>>, %arg3: memref<1x1x128xf32, #tpu.memory_space<vmem>>, %arg4: memref<128x128xbf16, #tpu.memory_space<vmem>>, %arg5: memref<128x128xbf16, #tpu.memory_space<vmem>>, %arg6: memref<128x128xbf16, #tpu.memory_space<vmem>>, %arg7: memref<128x128xbf16, #tpu.memory_space<vmem>>, %arg8: memref<128x128xbf16, #tpu.memory_space<vmem>>, %arg9: memref<1x128xf32, #tpu.memory_space<vmem>>, %arg10: memref<128x128xbf16, #tpu.memory_space<vmem>>, %arg11: memref<1x128xf32, #tpu.memory_space<vmem>>, %arg12: memref<1x128xf32, #tpu.memory_space<vmem>>, %arg13: memref<1x128xf32, #tpu.memory_space<vmem>>, %arg14: memref<1x128xf32, #tpu.memory_space<vmem>>, %arg15: memref<1x128xf32, #tpu.memory_space<vmem>>, %arg16: memref<1x128x128xf32, #tpu.memory_space<vmem>>, %arg17: memref<128x128xbf16, #tpu.memory_space<vmem>>, %arg18: memref<128x128xf32, #tpu.memory_space<vmem>>) attributes {dimension_semantics = [#tpu.dimension_semantics<parallel>, #tpu.dimension_semantics<arbitrary>], iteration_bounds = array<i64: 2, 2>, scalar_prefetch = 0 : i64, scratch_operands = 2 : i64, tpu.core_type = #tpu.core_type<tc>, window_params = [{transform_indices = @transform_0, window_bounds = array<i64: 1, 128, 128>}, {transform_indices = @transform_1, window_bounds = array<i64: 1, 1, 128>}, {pipeline_mode = #tpu.pipeline_mode<synchronous>, transform_indices = @transform_2, window_bounds = array<i64: 128, 128>}, {pipeline_mode = #tpu.pipeline_mode<synchronous>, transform_indices = @transform_3, window_bounds = array<i64: 128, 128>}, {pipeline_mode = #tpu.pipeline_mode<synchronous>, transform_indices = @transform_4, window_bounds = array<i64: 128, 128>}, {pipeline_mode = #tpu.pipeline_mode<synchronous>, transform_indices = @transform_5, window_bounds = array<i64: 128, 128>}, {transform_indices = @transform_6, window_bounds = array<i64: 128, 128>}, {transform_indices = @transform_7, window_bounds = array<i64: 1, 128>}, {transform_indices = @transform_8, window_bounds = array<i64: 128, 128>}, {pipeline_mode = #tpu.pipeline_mode<synchronous>, transform_indices = @transform_9, window_bounds = array<i64: 1, 128>}, {pipeline_mode = #tpu.pipeline_mode<synchronous>, transform_indices = @transform_10, window_bounds = array<i64: 1, 128>}, {pipeline_mode = #tpu.pipeline_mode<synchronous>, transform_indices = @transform_11, window_bounds = array<i64: 1, 128>}, {pipeline_mode = #tpu.pipeline_mode<synchronous>, transform_indices = @transform_12, window_bounds = array<i64: 1, 128>}, {pipeline_mode = #tpu.pipeline_mode<synchronous>, transform_indices = @transform_13, window_bounds = array<i64: 1, 128>}, {transform_indices = @transform_14, window_bounds = array<i64: 1, 128, 128>}]} {
    %c0_i32 = arith.constant 0 : i32
    %0 = arith.cmpi eq, %arg1, %c0_i32 : i32
    %1 = arith.extui %0 : i1 to i32
    %c0_i32_0 = arith.constant 0 : i32
    %2 = arith.cmpi ne, %1, %c0_i32_0 : i32
    scf.if %2 {
      %c0_15 = arith.constant 0 : index
      %c0_16 = arith.constant 0 : index
      %c0_17 = arith.constant 0 : index
      %20 = vector.load %arg2[%c0_15, %c0_16, %c0_17] : memref<1x128x128xbf16, #tpu.memory_space<vmem>>, vector<1x128x128xbf16>
      %21 = vector.shape_cast %20 : vector<1x128x128xbf16> to vector<128x128xbf16>
      %c0_18 = arith.constant 0 : index
      %c0_19 = arith.constant 0 : index
      %c0_20 = arith.constant 0 : index
      %22 = vector.load %arg3[%c0_18, %c0_19, %c0_20] : memref<1x1x128xf32, #tpu.memory_space<vmem>>, vector<1x1x128xf32>
      %23 = vector.shape_cast %22 : vector<1x1x128xf32> to vector<1x128xf32>
      %cst_21 = arith.constant 0.000000e+00 : f32
      %24 = vector.broadcast %cst_21 : f32 to vector<1x128xf32>
      %25 = arith.cmpf oeq, %23, %24 : vector<1x128xf32>
      %cst_22 = arith.constant -1.000000e+10 : f32
      %cst_23 = arith.constant 0.000000e+00 : f32
      %26 = vector.broadcast %cst_22 : f32 to vector<1x128xf32>
      %27 = vector.broadcast %cst_23 : f32 to vector<1x128xf32>
      %28 = arith.select %25, %26, %27 : vector<1x128xi1>, vector<1x128xf32>
      %29 = vector.shape_cast %28 : vector<1x128xf32> to vector<1x128xf32>
      %30 = vector.broadcast %29 : vector<1x128xf32> to vector<128x128xf32>
      %c0_24 = arith.constant 0 : index
      %c0_25 = arith.constant 0 : index
      %31 = vector.load %arg4[%c0_24, %c0_25] : memref<128x128xbf16, #tpu.memory_space<vmem>>, vector<128x128xbf16>
      %cst_26 = arith.constant dense<0.000000e+00> : vector<128x128xf32>
      %32 = tpu.matmul %21, %31, %cst_26 {dimension_numbers = #tpu.dot_dimension_numbers<[1], [0], [0], [1], [0, 0, 1, 1], [], []>} : vector<128x128xbf16>, vector<128x128xbf16>, vector<128x128xf32> -> vector<128x128xf32>
      %33 = arith.truncf %32 : vector<128x128xf32> to vector<128x128xbf16>
      %c0_27 = arith.constant 0 : index
      %c0_28 = arith.constant 0 : index
      %34 = vector.load %arg5[%c0_27, %c0_28] : memref<128x128xbf16, #tpu.memory_space<vmem>>, vector<128x128xbf16>
      %cst_29 = arith.constant dense<0.000000e+00> : vector<128x128xf32>
      %35 = tpu.matmul %21, %34, %cst_29 {dimension_numbers = #tpu.dot_dimension_numbers<[1], [0], [0], [1], [0, 0, 1, 1], [], []>} : vector<128x128xbf16>, vector<128x128xbf16>, vector<128x128xf32> -> vector<128x128xf32>
      %36 = arith.truncf %35 : vector<128x128xf32> to vector<128x128xbf16>
      %c0_30 = arith.constant 0 : index
      %c0_31 = arith.constant 0 : index
      %37 = vector.load %arg6[%c0_30, %c0_31] : memref<128x128xbf16, #tpu.memory_space<vmem>>, vector<128x128xbf16>
      %cst_32 = arith.constant dense<0.000000e+00> : vector<128x128xf32>
      %38 = tpu.matmul %21, %37, %cst_32 {dimension_numbers = #tpu.dot_dimension_numbers<[1], [0], [0], [1], [0, 0, 1, 1], [], []>} : vector<128x128xbf16>, vector<128x128xbf16>, vector<128x128xf32> -> vector<128x128xf32>
      %39 = arith.truncf %38 : vector<128x128xf32> to vector<128x128xbf16>
      %cst_33 = arith.constant 0.000000e+00 : f32
      %40 = vector.broadcast %cst_33 : f32 to vector<128x128xf32>
      %41 = vector.extract_strided_slice %33 {offsets = [0, 0], sizes = [128, 32], strides = [1, 1]} : vector<128x128xbf16> to vector<128x32xbf16>
      %42 = vector.extract_strided_slice %36 {offsets = [0, 0], sizes = [128, 32], strides = [1, 1]} : vector<128x128xbf16> to vector<128x32xbf16>
      %43 = vector.extract_strided_slice %39 {offsets = [0, 0], sizes = [128, 32], strides = [1, 1]} : vector<128x128xbf16> to vector<128x32xbf16>
      %cst_34 = arith.constant dense<0.000000e+00> : vector<128x128xf32>
      %44 = tpu.matmul %41, %42, %cst_34 {dimension_numbers = #tpu.dot_dimension_numbers<[1], [1], [0], [0], [0, 0, 1, 0], [], []>} : vector<128x32xbf16>, vector<128x32xbf16>, vector<128x128xf32> -> vector<128x128xf32>
      %cst_35 = arith.constant 0.176776692 : f32
      %45 = vector.broadcast %cst_35 : f32 to vector<128x128xf32>
      %46 = arith.mulf %44, %45 : vector<128x128xf32>
      %47 = arith.addf %46, %30 : vector<128x128xf32>
      %cst_36 = arith.constant dense<0xFF800000> : vector<128xf32>
      %48 = vector.multi_reduction <maximumf>, %47, %cst_36 [1] : vector<128x128xf32> to vector<128xf32>
      %49 = vector.shape_cast %48 : vector<128xf32> to vector<128x1xf32>
      %50 = vector.broadcast %49 : vector<128x1xf32> to vector<128x128xf32>
      %51 = arith.subf %47, %50 : vector<128x128xf32>
      %52 = math.exp %51 : vector<128x128xf32>
      %cst_37 = arith.constant dense<0.000000e+00> : vector<128xf32>
      %53 = vector.multi_reduction <add>, %52, %cst_37 [1] : vector<128x128xf32> to vector<128xf32>
      %54 = vector.shape_cast %53 : vector<128xf32> to vector<128x1xf32>
      %55 = tpu.reciprocal %54 {approx = true} : vector<128x1xf32> -> vector<128x1xf32>
      %56 = vector.broadcast %55 : vector<128x1xf32> to vector<128x128xf32>
      %57 = arith.mulf %52, %56 : vector<128x128xf32>
      %58 = arith.truncf %57 : vector<128x128xf32> to vector<128x128xbf16>
      %cst_38 = arith.constant dense<0.000000e+00> : vector<128x32xf32>
      %59 = tpu.matmul %58, %43, %cst_38 {dimension_numbers = #tpu.dot_dimension_numbers<[1], [0], [0], [1], [0, 0, 1, 1], [], []>} : vector<128x128xbf16>, vector<128x32xbf16>, vector<128x32xf32> -> vector<128x32xf32>
      %c0_39 = arith.constant 0 : index
      %c0_40 = arith.constant 0 : index
      %60 = vector.load %arg7[%c0_39, %c0_40] : memref<128x128xbf16, #tpu.memory_space<vmem>>, vector<32x128xbf16>
      %61 = arith.truncf %59 : vector<128x32xf32> to vector<128x32xbf16>
      %cst_41 = arith.constant dense<0.000000e+00> : vector<128x128xf32>
      %62 = tpu.matmul %61, %60, %cst_41 {dimension_numbers = #tpu.dot_dimension_numbers<[1], [0], [0], [1], [0, 0, 1, 1], [], []>} : vector<128x32xbf16>, vector<32x128xbf16>, vector<128x128xf32> -> vector<128x128xf32>
      %63 = arith.addf %40, %62 : vector<128x128xf32>
      %64 = vector.extract_strided_slice %33 {offsets = [0, 32], sizes = [128, 32], strides = [1, 1]} : vector<128x128xbf16> to vector<128x32xbf16>
      %65 = vector.extract_strided_slice %36 {offsets = [0, 32], sizes = [128, 32], strides = [1, 1]} : vector<128x128xbf16> to vector<128x32xbf16>
      %66 = vector.extract_strided_slice %39 {offsets = [0, 32], sizes = [128, 32], strides = [1, 1]} : vector<128x128xbf16> to vector<128x32xbf16>
      %cst_42 = arith.constant dense<0.000000e+00> : vector<128x128xf32>
      %67 = tpu.matmul %64, %65, %cst_42 {dimension_numbers = #tpu.dot_dimension_numbers<[1], [1], [0], [0], [0, 0, 1, 0], [], []>} : vector<128x32xbf16>, vector<128x32xbf16>, vector<128x128xf32> -> vector<128x128xf32>
      %cst_43 = arith.constant 0.176776692 : f32
      %68 = vector.broadcast %cst_43 : f32 to vector<128x128xf32>
      %69 = arith.mulf %67, %68 : vector<128x128xf32>
      %70 = arith.addf %69, %30 : vector<128x128xf32>
      %cst_44 = arith.constant dense<0xFF800000> : vector<128xf32>
      %71 = vector.multi_reduction <maximumf>, %70, %cst_44 [1] : vector<128x128xf32> to vector<128xf32>
      %72 = vector.shape_cast %71 : vector<128xf32> to vector<128x1xf32>
      %73 = vector.broadcast %72 : vector<128x1xf32> to vector<128x128xf32>
      %74 = arith.subf %70, %73 : vector<128x128xf32>
      %75 = math.exp %74 : vector<128x128xf32>
      %cst_45 = arith.constant dense<0.000000e+00> : vector<128xf32>
      %76 = vector.multi_reduction <add>, %75, %cst_45 [1] : vector<128x128xf32> to vector<128xf32>
      %77 = vector.shape_cast %76 : vector<128xf32> to vector<128x1xf32>
      %78 = tpu.reciprocal %77 {approx = true} : vector<128x1xf32> -> vector<128x1xf32>
      %79 = vector.broadcast %78 : vector<128x1xf32> to vector<128x128xf32>
      %80 = arith.mulf %75, %79 : vector<128x128xf32>
      %81 = arith.truncf %80 : vector<128x128xf32> to vector<128x128xbf16>
      %cst_46 = arith.constant dense<0.000000e+00> : vector<128x32xf32>
      %82 = tpu.matmul %81, %66, %cst_46 {dimension_numbers = #tpu.dot_dimension_numbers<[1], [0], [0], [1], [0, 0, 1, 1], [], []>} : vector<128x128xbf16>, vector<128x32xbf16>, vector<128x32xf32> -> vector<128x32xf32>
      %c32 = arith.constant 32 : index
      %c0_47 = arith.constant 0 : index
      %83 = vector.load %arg7[%c32, %c0_47] : memref<128x128xbf16, #tpu.memory_space<vmem>>, vector<32x128xbf16>
      %84 = arith.truncf %82 : vector<128x32xf32> to vector<128x32xbf16>
      %cst_48 = arith.constant dense<0.000000e+00> : vector<128x128xf32>
      %85 = tpu.matmul %84, %83, %cst_48 {dimension_numbers = #tpu.dot_dimension_numbers<[1], [0], [0], [1], [0, 0, 1, 1], [], []>} : vector<128x32xbf16>, vector<32x128xbf16>, vector<128x128xf32> -> vector<128x128xf32>
      %86 = arith.addf %63, %85 : vector<128x128xf32>
      %87 = vector.extract_strided_slice %33 {offsets = [0, 64], sizes = [128, 32], strides = [1, 1]} : vector<128x128xbf16> to vector<128x32xbf16>
      %88 = vector.extract_strided_slice %36 {offsets = [0, 64], sizes = [128, 32], strides = [1, 1]} : vector<128x128xbf16> to vector<128x32xbf16>
      %89 = vector.extract_strided_slice %39 {offsets = [0, 64], sizes = [128, 32], strides = [1, 1]} : vector<128x128xbf16> to vector<128x32xbf16>
      %cst_49 = arith.constant dense<0.000000e+00> : vector<128x128xf32>
      %90 = tpu.matmul %87, %88, %cst_49 {dimension_numbers = #tpu.dot_dimension_numbers<[1], [1], [0], [0], [0, 0, 1, 0], [], []>} : vector<128x32xbf16>, vector<128x32xbf16>, vector<128x128xf32> -> vector<128x128xf32>
      %cst_50 = arith.constant 0.176776692 : f32
      %91 = vector.broadcast %cst_50 : f32 to vector<128x128xf32>
      %92 = arith.mulf %90, %91 : vector<128x128xf32>
      %93 = arith.addf %92, %30 : vector<128x128xf32>
      %cst_51 = arith.constant dense<0xFF800000> : vector<128xf32>
      %94 = vector.multi_reduction <maximumf>, %93, %cst_51 [1] : vector<128x128xf32> to vector<128xf32>
      %95 = vector.shape_cast %94 : vector<128xf32> to vector<128x1xf32>
      %96 = vector.broadcast %95 : vector<128x1xf32> to vector<128x128xf32>
      %97 = arith.subf %93, %96 : vector<128x128xf32>
      %98 = math.exp %97 : vector<128x128xf32>
      %cst_52 = arith.constant dense<0.000000e+00> : vector<128xf32>
      %99 = vector.multi_reduction <add>, %98, %cst_52 [1] : vector<128x128xf32> to vector<128xf32>
      %100 = vector.shape_cast %99 : vector<128xf32> to vector<128x1xf32>
      %101 = tpu.reciprocal %100 {approx = true} : vector<128x1xf32> -> vector<128x1xf32>
      %102 = vector.broadcast %101 : vector<128x1xf32> to vector<128x128xf32>
      %103 = arith.mulf %98, %102 : vector<128x128xf32>
      %104 = arith.truncf %103 : vector<128x128xf32> to vector<128x128xbf16>
      %cst_53 = arith.constant dense<0.000000e+00> : vector<128x32xf32>
      %105 = tpu.matmul %104, %89, %cst_53 {dimension_numbers = #tpu.dot_dimension_numbers<[1], [0], [0], [1], [0, 0, 1, 1], [], []>} : vector<128x128xbf16>, vector<128x32xbf16>, vector<128x32xf32> -> vector<128x32xf32>
      %c64 = arith.constant 64 : index
      %c0_54 = arith.constant 0 : index
      %106 = vector.load %arg7[%c64, %c0_54] : memref<128x128xbf16, #tpu.memory_space<vmem>>, vector<32x128xbf16>
      %107 = arith.truncf %105 : vector<128x32xf32> to vector<128x32xbf16>
      %cst_55 = arith.constant dense<0.000000e+00> : vector<128x128xf32>
      %108 = tpu.matmul %107, %106, %cst_55 {dimension_numbers = #tpu.dot_dimension_numbers<[1], [0], [0], [1], [0, 0, 1, 1], [], []>} : vector<128x32xbf16>, vector<32x128xbf16>, vector<128x128xf32> -> vector<128x128xf32>
      %109 = arith.addf %86, %108 : vector<128x128xf32>
      %110 = vector.extract_strided_slice %33 {offsets = [0, 96], sizes = [128, 32], strides = [1, 1]} : vector<128x128xbf16> to vector<128x32xbf16>
      %111 = vector.extract_strided_slice %36 {offsets = [0, 96], sizes = [128, 32], strides = [1, 1]} : vector<128x128xbf16> to vector<128x32xbf16>
      %112 = vector.extract_strided_slice %39 {offsets = [0, 96], sizes = [128, 32], strides = [1, 1]} : vector<128x128xbf16> to vector<128x32xbf16>
      %cst_56 = arith.constant dense<0.000000e+00> : vector<128x128xf32>
      %113 = tpu.matmul %110, %111, %cst_56 {dimension_numbers = #tpu.dot_dimension_numbers<[1], [1], [0], [0], [0, 0, 1, 0], [], []>} : vector<128x32xbf16>, vector<128x32xbf16>, vector<128x128xf32> -> vector<128x128xf32>
      %cst_57 = arith.constant 0.176776692 : f32
      %114 = vector.broadcast %cst_57 : f32 to vector<128x128xf32>
      %115 = arith.mulf %113, %114 : vector<128x128xf32>
      %116 = arith.addf %115, %30 : vector<128x128xf32>
      %cst_58 = arith.constant dense<0xFF800000> : vector<128xf32>
      %117 = vector.multi_reduction <maximumf>, %116, %cst_58 [1] : vector<128x128xf32> to vector<128xf32>
      %118 = vector.shape_cast %117 : vector<128xf32> to vector<128x1xf32>
      %119 = vector.broadcast %118 : vector<128x1xf32> to vector<128x128xf32>
      %120 = arith.subf %116, %119 : vector<128x128xf32>
      %121 = math.exp %120 : vector<128x128xf32>
      %cst_59 = arith.constant dense<0.000000e+00> : vector<128xf32>
      %122 = vector.multi_reduction <add>, %121, %cst_59 [1] : vector<128x128xf32> to vector<128xf32>
      %123 = vector.shape_cast %122 : vector<128xf32> to vector<128x1xf32>
      %124 = tpu.reciprocal %123 {approx = true} : vector<128x1xf32> -> vector<128x1xf32>
      %125 = vector.broadcast %124 : vector<128x1xf32> to vector<128x128xf32>
      %126 = arith.mulf %121, %125 : vector<128x128xf32>
      %127 = arith.truncf %126 : vector<128x128xf32> to vector<128x128xbf16>
      %cst_60 = arith.constant dense<0.000000e+00> : vector<128x32xf32>
      %128 = tpu.matmul %127, %112, %cst_60 {dimension_numbers = #tpu.dot_dimension_numbers<[1], [0], [0], [1], [0, 0, 1, 1], [], []>} : vector<128x128xbf16>, vector<128x32xbf16>, vector<128x32xf32> -> vector<128x32xf32>
      %c96 = arith.constant 96 : index
      %c0_61 = arith.constant 0 : index
      %129 = vector.load %arg7[%c96, %c0_61] : memref<128x128xbf16, #tpu.memory_space<vmem>>, vector<32x128xbf16>
      %130 = arith.truncf %128 : vector<128x32xf32> to vector<128x32xbf16>
      %cst_62 = arith.constant dense<0.000000e+00> : vector<128x128xf32>
      %131 = tpu.matmul %130, %129, %cst_62 {dimension_numbers = #tpu.dot_dimension_numbers<[1], [0], [0], [1], [0, 0, 1, 1], [], []>} : vector<128x32xbf16>, vector<32x128xbf16>, vector<128x128xf32> -> vector<128x128xf32>
      %132 = arith.addf %109, %131 : vector<128x128xf32>
      %133 = arith.extf %21 : vector<128x128xbf16> to vector<128x128xf32>
      %134 = arith.addf %133, %132 : vector<128x128xf32>
      %c0_63 = arith.constant 0 : index
      %c0_64 = arith.constant 0 : index
      %135 = vector.load %arg12[%c0_63, %c0_64] : memref<1x128xf32, #tpu.memory_space<vmem>>, vector<1x128xf32>
      %c0_65 = arith.constant 0 : index
      %c0_66 = arith.constant 0 : index
      %136 = vector.load %arg13[%c0_65, %c0_66] : memref<1x128xf32, #tpu.memory_space<vmem>>, vector<1x128xf32>
      %cst_67 = arith.constant dense<0.000000e+00> : vector<128xf32>
      %137 = vector.multi_reduction <add>, %134, %cst_67 [1] : vector<128x128xf32> to vector<128xf32>
      %138 = vector.shape_cast %137 : vector<128xf32> to vector<128x1xf32>
      %cst_68 = arith.constant 1.280000e+02 : f32
      %139 = vector.broadcast %cst_68 : f32 to vector<128x1xf32>
      %140 = arith.divf %138, %139 : vector<128x1xf32>
      %141 = vector.broadcast %140 : vector<128x1xf32> to vector<128x128xf32>
      %142 = arith.subf %134, %141 : vector<128x128xf32>
      %143 = arith.mulf %142, %142 : vector<128x128xf32>
      %cst_69 = arith.constant dense<0.000000e+00> : vector<128xf32>
      %144 = vector.multi_reduction <add>, %143, %cst_69 [1] : vector<128x128xf32> to vector<128xf32>
      %145 = vector.shape_cast %144 : vector<128xf32> to vector<128x1xf32>
      %cst_70 = arith.constant 1.280000e+02 : f32
      %146 = vector.broadcast %cst_70 : f32 to vector<128x1xf32>
      %147 = arith.divf %145, %146 : vector<128x1xf32>
      %148 = vector.broadcast %140 : vector<128x1xf32> to vector<128x128xf32>
      %149 = arith.subf %134, %148 : vector<128x128xf32>
      %cst_71 = arith.constant 9.99999974E-6 : f32
      %150 = vector.broadcast %cst_71 : f32 to vector<128x1xf32>
      %151 = arith.addf %147, %150 : vector<128x1xf32>
      %152 = math.sqrt %151 : vector<128x1xf32>
      %153 = vector.broadcast %152 : vector<128x1xf32> to vector<128x128xf32>
      %154 = arith.divf %149, %153 : vector<128x128xf32>
      %155 = vector.broadcast %135 : vector<1x128xf32> to vector<128x128xf32>
      %156 = arith.mulf %154, %155 : vector<128x128xf32>
      %157 = vector.broadcast %136 : vector<1x128xf32> to vector<128x128xf32>
      %158 = arith.addf %156, %157 : vector<128x128xf32>
      %159 = arith.truncf %158 : vector<128x128xf32> to vector<128x128xbf16>
      %c0_72 = arith.constant 0 : index
      %c0_73 = arith.constant 0 : index
      %160 = vector.load %arg17[%c0_72, %c0_73] : memref<128x128xbf16, #tpu.memory_space<vmem>>, vector<128x128xbf16>
      tpu.vector_store %arg17[%c0_72, %c0_73], %159 {strides = array<i32>} : memref<128x128xbf16, #tpu.memory_space<vmem>>, vector<128x128xbf16>,
      %cst_74 = arith.constant 0.000000e+00 : f32
      %161 = vector.broadcast %cst_74 : f32 to vector<128x128xf32>
      %c0_75 = arith.constant 0 : index
      %c0_76 = arith.constant 0 : index
      %162 = vector.load %arg18[%c0_75, %c0_76] : memref<128x128xf32, #tpu.memory_space<vmem>>, vector<128x128xf32>
      tpu.vector_store %arg18[%c0_75, %c0_76], %161 {strides = array<i32>} : memref<128x128xf32, #tpu.memory_space<vmem>>, vector<128x128xf32>,
    } else {
    }
    %c0 = arith.constant 0 : index
    %c0_1 = arith.constant 0 : index
    %3 = vector.load %arg17[%c0, %c0_1] : memref<128x128xbf16, #tpu.memory_space<vmem>>, vector<128x128xbf16>
    %c0_2 = arith.constant 0 : index
    %c0_3 = arith.constant 0 : index
    %4 = vector.load %arg8[%c0_2, %c0_3] : memref<128x128xbf16, #tpu.memory_space<vmem>>, vector<128x128xbf16>
    %cst = arith.constant dense<0.000000e+00> : vector<128x128xf32>
    %5 = tpu.matmul %3, %4, %cst {dimension_numbers = #tpu.dot_dimension_numbers<[1], [0], [0], [1], [0, 0, 1, 1], [], []>} : vector<128x128xbf16>, vector<128x128xbf16>, vector<128x128xf32> -> vector<128x128xf32>
    %c0_4 = arith.constant 0 : index
    %c0_5 = arith.constant 0 : index
    %6 = vector.load %arg9[%c0_4, %c0_5] : memref<1x128xf32, #tpu.memory_space<vmem>>, vector<1x128xf32>
    %7 = vector.broadcast %6 : vector<1x128xf32> to vector<128x128xf32>
    %8 = arith.addf %5, %7 : vector<128x128xf32>
    %cst_6 = arith.constant 0.000000e+00 : f32
    %9 = vector.broadcast %cst_6 : f32 to vector<128x128xf32>
    %10 = arith.maximumf %8, %9 : vector<128x128xf32>
    %c0_7 = arith.constant 0 : index
    %c0_8 = arith.constant 0 : index
    %11 = vector.load %arg18[%c0_7, %c0_8] : memref<128x128xf32, #tpu.memory_space<vmem>>, vector<128x128xf32>
    %12 = arith.truncf %10 : vector<128x128xf32> to vector<128x128xbf16>
    %c0_9 = arith.constant 0 : index
    %c0_10 = arith.constant 0 : index
    %13 = vector.load %arg10[%c0_9, %c0_10] : memref<128x128xbf16, #tpu.memory_space<vmem>>, vector<128x128xbf16>
    %cst_11 = arith.constant dense<0.000000e+00> : vector<128x128xf32>
    %14 = tpu.matmul %12, %13, %cst_11 {dimension_numbers = #tpu.dot_dimension_numbers<[1], [0], [0], [1], [0, 0, 1, 1], [], []>} : vector<128x128xbf16>, vector<128x128xbf16>, vector<128x128xf32> -> vector<128x128xf32>
    %15 = arith.addf %11, %14 : vector<128x128xf32>
    %c0_12 = arith.constant 0 : index
    %c0_13 = arith.constant 0 : index
    %16 = vector.load %arg18[%c0_12, %c0_13] : memref<128x128xf32, #tpu.memory_space<vmem>>, vector<128x128xf32>
    tpu.vector_store %arg18[%c0_12, %c0_13], %15 {strides = array<i32>} : memref<128x128xf32, #tpu.memory_space<vmem>>, vector<128x128xf32>,
    %c1_i32 = arith.constant 1 : i32
    %17 = arith.cmpi eq, %arg1, %c1_i32 : i32
    %18 = arith.extui %17 : i1 to i32
    %c0_i32_14 = arith.constant 0 : i32
    %19 = arith.cmpi ne, %18, %c0_i32_14 : i32
    scf.if %19 {
      %c0_15 = arith.constant 0 : index
      %c0_16 = arith.constant 0 : index
      %20 = vector.load %arg18[%c0_15, %c0_16] : memref<128x128xf32, #tpu.memory_space<vmem>>, vector<128x128xf32>
      %c0_17 = arith.constant 0 : index
      %c0_18 = arith.constant 0 : index
      %21 = vector.load %arg11[%c0_17, %c0_18] : memref<1x128xf32, #tpu.memory_space<vmem>>, vector<1x128xf32>
      %22 = vector.broadcast %21 : vector<1x128xf32> to vector<128x128xf32>
      %23 = arith.addf %20, %22 : vector<128x128xf32>
      %c0_19 = arith.constant 0 : index
      %c0_20 = arith.constant 0 : index
      %24 = vector.load %arg17[%c0_19, %c0_20] : memref<128x128xbf16, #tpu.memory_space<vmem>>, vector<128x128xbf16>
      %25 = arith.extf %24 : vector<128x128xbf16> to vector<128x128xf32>
      %26 = arith.addf %25, %23 : vector<128x128xf32>
      %c0_21 = arith.constant 0 : index
      %c0_22 = arith.constant 0 : index
      %27 = vector.load %arg14[%c0_21, %c0_22] : memref<1x128xf32, #tpu.memory_space<vmem>>, vector<1x128xf32>
      %c0_23 = arith.constant 0 : index
      %c0_24 = arith.constant 0 : index
      %28 = vector.load %arg15[%c0_23, %c0_24] : memref<1x128xf32, #tpu.memory_space<vmem>>, vector<1x128xf32>
      %cst_25 = arith.constant dense<0.000000e+00> : vector<128xf32>
      %29 = vector.multi_reduction <add>, %26, %cst_25 [1] : vector<128x128xf32> to vector<128xf32>
      %30 = vector.shape_cast %29 : vector<128xf32> to vector<128x1xf32>
      %cst_26 = arith.constant 1.280000e+02 : f32
      %31 = vector.broadcast %cst_26 : f32 to vector<128x1xf32>
      %32 = arith.divf %30, %31 : vector<128x1xf32>
      %33 = vector.broadcast %32 : vector<128x1xf32> to vector<128x128xf32>
      %34 = arith.subf %26, %33 : vector<128x128xf32>
      %35 = arith.mulf %34, %34 : vector<128x128xf32>
      %cst_27 = arith.constant dense<0.000000e+00> : vector<128xf32>
      %36 = vector.multi_reduction <add>, %35, %cst_27 [1] : vector<128x128xf32> to vector<128xf32>
      %37 = vector.shape_cast %36 : vector<128xf32> to vector<128x1xf32>
      %cst_28 = arith.constant 1.280000e+02 : f32
      %38 = vector.broadcast %cst_28 : f32 to vector<128x1xf32>
      %39 = arith.divf %37, %38 : vector<128x1xf32>
      %40 = vector.broadcast %32 : vector<128x1xf32> to vector<128x128xf32>
      %41 = arith.subf %26, %40 : vector<128x128xf32>
      %cst_29 = arith.constant 9.99999974E-6 : f32
      %42 = vector.broadcast %cst_29 : f32 to vector<128x1xf32>
      %43 = arith.addf %39, %42 : vector<128x1xf32>
      %44 = math.sqrt %43 : vector<128x1xf32>
      %45 = vector.broadcast %44 : vector<128x1xf32> to vector<128x128xf32>
      %46 = arith.divf %41, %45 : vector<128x128xf32>
      %47 = vector.broadcast %27 : vector<1x128xf32> to vector<128x128xf32>
      %48 = arith.mulf %46, %47 : vector<128x128xf32>
      %49 = vector.broadcast %28 : vector<1x128xf32> to vector<128x128xf32>
      %50 = arith.addf %48, %49 : vector<128x128xf32>
      %c0_30 = arith.constant 0 : index
      %c0_31 = arith.constant 0 : index
      %c0_32 = arith.constant 0 : index
      %51 = vector.load %arg16[%c0_30, %c0_31, %c0_32] : memref<1x128x128xf32, #tpu.memory_space<vmem>>, vector<1x128x128xf32>
      %52 = vector.shape_cast %51 : vector<1x128x128xf32> to vector<128x128xf32>
      %53 = vector.shape_cast %50 : vector<128x128xf32> to vector<1x128x128xf32>
      tpu.vector_store %arg16[%c0_30, %c0_31, %c0_32], %53 {strides = array<i32>} : memref<1x128x128xf32, #tpu.memory_space<vmem>>, vector<1x128x128xf32>,
    } else {
    }
    return
  }
  func.func @transform_0(%arg0: i32, %arg1: i32) -> (i32, i32, i32) {
    %c0_i32 = arith.constant 0 : i32
    %c0_i32_0 = arith.constant 0 : i32
    %c0_i32_1 = arith.constant 0 : i32
    return %arg0, %c0_i32, %c0_i32_0 : i32, i32, i32
  }
  func.func @transform_1(%arg0: i32, %arg1: i32) -> (i32, i32, i32) {
    %c0_i32 = arith.constant 0 : i32
    %c0_i32_0 = arith.constant 0 : i32
    %c0_i32_1 = arith.constant 0 : i32
    return %arg0, %c0_i32, %c0_i32_0 : i32, i32, i32
  }
  func.func @transform_2(%arg0: i32, %arg1: i32) -> (i32, i32) {
    %c0_i32 = arith.constant 0 : i32
    %c0_i32_0 = arith.constant 0 : i32
    %c0_i32_1 = arith.constant 0 : i32
    return %c0_i32, %c0_i32_0 : i32, i32
  }
  func.func @transform_3(%arg0: i32, %arg1: i32) -> (i32, i32) {
    %c0_i32 = arith.constant 0 : i32
    %c0_i32_0 = arith.constant 0 : i32
    %c0_i32_1 = arith.constant 0 : i32
    return %c0_i32, %c0_i32_0 : i32, i32
  }
  func.func @transform_4(%arg0: i32, %arg1: i32) -> (i32, i32) {
    %c0_i32 = arith.constant 0 : i32
    %c0_i32_0 = arith.constant 0 : i32
    %c0_i32_1 = arith.constant 0 : i32
    return %c0_i32, %c0_i32_0 : i32, i32
  }
  func.func @transform_5(%arg0: i32, %arg1: i32) -> (i32, i32) {
    %c0_i32 = arith.constant 0 : i32
    %c0_i32_0 = arith.constant 0 : i32
    %c0_i32_1 = arith.constant 0 : i32
    return %c0_i32, %c0_i32_0 : i32, i32
  }
  func.func @transform_6(%arg0: i32, %arg1: i32) -> (i32, i32) {
    %c0_i32 = arith.constant 0 : i32
    %c0_i32_0 = arith.constant 0 : i32
    return %c0_i32, %arg1 : i32, i32
  }
  func.func @transform_7(%arg0: i32, %arg1: i32) -> (i32, i32) {
    %c0_i32 = arith.constant 0 : i32
    %c0_i32_0 = arith.constant 0 : i32
    return %c0_i32, %arg1 : i32, i32
  }
  func.func @transform_8(%arg0: i32, %arg1: i32) -> (i32, i32) {
    %c0_i32 = arith.constant 0 : i32
    %c0_i32_0 = arith.constant 0 : i32
    return %arg1, %c0_i32 : i32, i32
  }
  func.func @transform_9(%arg0: i32, %arg1: i32) -> (i32, i32) {
    %c0_i32 = arith.constant 0 : i32
    %c0_i32_0 = arith.constant 0 : i32
    %c0_i32_1 = arith.constant 0 : i32
    return %c0_i32, %c0_i32_0 : i32, i32
  }
  func.func @transform_10(%arg0: i32, %arg1: i32) -> (i32, i32) {
    %c0_i32 = arith.constant 0 : i32
    %c0_i32_0 = arith.constant 0 : i32
    %c0_i32_1 = arith.constant 0 : i32
    return %c0_i32, %c0_i32_0 : i32, i32
  }
  func.func @transform_11(%arg0: i32, %arg1: i32) -> (i32, i32) {
    %c0_i32 = arith.constant 0 : i32
    %c0_i32_0 = arith.constant 0 : i32
    %c0_i32_1 = arith.constant 0 : i32
    return %c0_i32, %c0_i32_0 : i32, i32
  }
  func.func @transform_12(%arg0: i32, %arg1: i32) -> (i32, i32) {
    %c0_i32 = arith.constant 0 : i32
    %c0_i32_0 = arith.constant 0 : i32
    %c0_i32_1 = arith.constant 0 : i32
    return %c0_i32, %c0_i32_0 : i32, i32
  }
  func.func @transform_13(%arg0: i32, %arg1: i32) -> (i32, i32) {
    %c0_i32 = arith.constant 0 : i32
    %c0_i32_0 = arith.constant 0 : i32
    %c0_i32_1 = arith.constant 0 : i32
    return %c0_i32, %c0_i32_0 : i32, i32
  }
  func.func @transform_14(%arg0: i32, %arg1: i32) -> (i32, i32, i32) {
    %c0_i32 = arith.constant 0 : i32
    %c0_i32_0 = arith.constant 0 : i32
    %c0_i32_1 = arith.constant 0 : i32
    return %arg0, %c0_i32, %c0_i32_0 : i32, i32, i32
  }
}

</mosaic_0001>

<llo_original>
// kernel: tpu_custom_call.1
$region0: #{tpu_custom_call.1}
  #allocation0 [shape = 'u32[]', space=smem, size = 0x4, offset = 0x4, fixed_abs, tag = 'smem constant byte address 0x4 - core index']
  #allocation1 [shape = 'u32[144,128]{1,0:T(1,128)}', space=vmem, size = 0x12000, scoped, tag = 'internal scratch']
  #allocation2 [shape = 'bf16[128,128]{1,0:T(16,128)(2,1)}', space=vmem, size = 0x8000, scoped, tag = 'scratch operand']
  #allocation3 [shape = 'f32[128,128]{1,0:T(8,128)}', space=vmem, size = 0x10000, scoped, tag = 'scratch operand']
  %s0 = inlined_call_operand.hbm [shape: bf16[2,128,128], index: 0, kind: input, shape index: {}]
  %s1 = inlined_call_operand.vmem [shape: f32[2,1,128], index: 1, kind: input, shape index: {}]
  %s2 = inlined_call_operand.hbm [shape: bf16[128,128], index: 2, kind: input, shape index: {}]
  %s3 = inlined_call_operand.hbm [shape: bf16[128,128], index: 3, kind: input, shape index: {}]
  %s4 = inlined_call_operand.hbm [shape: bf16[128,128], index: 4, kind: input, shape index: {}]
  %s5 = inlined_call_operand.hbm [shape: bf16[128,128], index: 5, kind: input, shape index: {}]
  %s6 = inlined_call_operand.hbm [shape: bf16[128,256], index: 6, kind: input, shape index: {}]
  %s7 = inlined_call_operand.vmem [shape: f32[1,256], index: 7, kind: input, shape index: {}]
  %s8 = inlined_call_operand.hbm [shape: bf16[256,128], index: 8, kind: input, shape index: {}]
  %s9 = inlined_call_operand.vmem [shape: f32[1,128], index: 9, kind: input, shape index: {}]
  %s10 = inlined_call_operand.vmem [shape: f32[1,128], index: 10, kind: input, shape index: {}]
  %s11 = inlined_call_operand.vmem [shape: f32[1,128], index: 11, kind: input, shape index: {}]
  %s12 = inlined_call_operand.vmem [shape: f32[1,128], index: 12, kind: input, shape index: {}]
  %s13 = inlined_call_operand.vmem [shape: f32[1,128], index: 13, kind: input, shape index: {}]
  %s14 = inlined_call_operand.hbm [shape: f32[2,128,128], index: 14, kind: output, shape index: {}]
  %s15 = sld [smem:[#allocation0]]
  $region125: #{tpu_custom_call.1} parent=0
    _
  %s17 = ssub.s32 1, %s15
  %s18 = scalar_select 0, %s17, %s15
  $region1: #{tpu_custom_call.1} parent=0
    #allocation4 [shape = 'u8[65536]{0}', space=vmem, size = 0x10000, scoped, tag = 'input window, operand 0']
    #allocation5 [shape = 's32[2]{0}', space=sflag, size = 0x8, scoped, tag = 'scoped memory for tpu_custom_call.1']
    #allocation6 [shape = 's32[2]{0}', space=sflag, size = 0x8, scoped, tag = 'scoped memory for tpu_custom_call.1']
    #allocation7 [shape = 'u8[32768]{0}', space=vmem, size = 0x8000, scoped, tag = 'input window, operand 2, single buffered']
    #allocation8 [shape = 's32[1]{0}', space=sflag, size = 0x4, scoped, tag = 'scoped memory for tpu_custom_call.1']
    #allocation9 [shape = 'u8[32768]{0}', space=vmem, size = 0x8000, scoped, tag = 'input window, operand 3, single buffered']
    #allocation10 [shape = 'u8[32768]{0}', space=vmem, size = 0x8000, scoped, tag = 'input window, operand 4, single buffered']
    #allocation11 [shape = 's32[1]{0}', space=sflag, size = 0x4, scoped, tag = 'scoped memory for tpu_custom_call.1']
    #allocation12 [shape = 'u8[32768]{0}', space=vmem, size = 0x8000, scoped, tag = 'input window, operand 5, single buffered']
    #allocation13 [shape = 'u8[65536]{0}', space=vmem, size = 0x10000, scoped, tag = 'input window, operand 6']
    #allocation14 [shape = 's32[2]{0}', space=sflag, size = 0x8, scoped, tag = 'scoped memory for tpu_custom_call.1']
    #allocation15 [shape = 'u8[65536]{0}', space=vmem, size = 0x10000, scoped, tag = 'input window, operand 8']
    #allocation16 [shape = 'u8[131072]{0}', space=vmem, size = 0x20000, scoped, tag = 'output window, operand 0']
    %19 = vsyncpa [#allocation5], 0
    %s20 = scalar_lea.sflag [#allocation5], 1
    %21 = vsyncpa %s20, 0
    %22 = vsyncpa [#allocation8], 0
    %23 = vsyncpa [#allocation11], 0
    %24 = vsyncpa [#allocation14], 0
    %s25 = scalar_lea.sflag [#allocation14], 1
    %26 = vsyncpa %s25, 0
    %27 = vsyncpa [#allocation6], 0
    %s28 = scalar_lea.sflag [#allocation6], 1
    %29 = vsyncpa %s28, 0
    loop: start=0, step=1, limit=6
    $region2: #{tpu_custom_call.1} parent=1 // loop_pre_header
      _
    $region3: #{tpu_custom_call.1} parent=1 // loop_header
      %s31 = sphi 0, %s35
      %p32 = scmp.ge.s32.totalorder %s31, 6
      %s38 = sphi 0, %s50
      %s39 = sphi 0, %s46
      %s40 = sphi 0, %s38
      %s41 = sphi 0, %s39
      %s42 = sphi 0, %s40
      %s43 = sphi 0, %s41
      %s53 = sphi 0, %s55
      %s56 = sphi 0, %s53
      %s57 = sphi 0, %s56
      %s73 = sphi 0, %s57
      %s79 = sphi 0, %s81
      %s82 = sphi 0, %s79
      %s83 = sphi 0, %s82
      %s99 = sphi 0, %s83
      %s103 = sphi 0, %s103
      %s105 = sphi 0, %s103
      %s106 = sphi 0, %s105
      %s120 = sphi 0, %s106
      %s124 = sphi 0, %s124
      %s126 = sphi 0, %s124
      %s127 = sphi 0, %s126
      %s141 = sphi 0, %s127
      %s145 = sphi 0, %s145
      %s147 = sphi 0, %s145
      %s148 = sphi 0, %s147
      %s162 = sphi 0, %s148
      %s166 = sphi 0, %s166
      %s168 = sphi 0, %s166
      %s169 = sphi 0, %s168
      %s183 = sphi 0, %s169
      %s189 = sphi 0, %s191
      %s192 = sphi 0, %s189
      %s193 = sphi 0, %s192
      %s209 = sphi 0, %s193
      %s215 = sphi 0, %s217
      %s218 = sphi 0, %s215
      %s219 = sphi 0, %s218
      %s235 = sphi 0, %s219
      %s241 = sphi 0, %s243
      %s244 = sphi 0, %s241
      %s245 = sphi 0, %s244
      %s261 = sphi 0, %s245
      %s265 = sphi 0, %s265
      %s267 = sphi 0, %s265
      %s268 = sphi 0, %s267
      %s282 = sphi 0, %s268
      %s286 = sphi 0, %s286
      %s288 = sphi 0, %s286
      %s289 = sphi 0, %s288
      %s303 = sphi 0, %s289
      %s307 = sphi 0, %s307
      %s309 = sphi 0, %s307
      %s310 = sphi 0, %s309
      %s324 = sphi 0, %s310
      %s328 = sphi 0, %s328
      %s330 = sphi 0, %s328
      %s331 = sphi 0, %s330
      %s345 = sphi 0, %s331
      %s349 = sphi 0, %s349
      %s351 = sphi 0, %s349
      %s352 = sphi 0, %s351
      %s366 = sphi 0, %s352
      %s372 = sphi 0, %s374
      %s375 = sphi 0, %s372
      %s376 = sphi 0, %s375
      %s392 = sphi 0, %s376
    $region4: #{tpu_custom_call.1} parent=1 // loop_header_branch
      %34 = sbr.rel (%p32) target = $region8
    $region5: #{tpu_custom_call.1} parent=1 // loop_body
      %s36 = ssub.s32 %s31, 1
      %s37 = ssub.s32 %s31, 2
      %s44 = sadd.s32 1, %s39
      %p45 = scmp.ge.s32.totalorder %s44, 2
      %s46 = scalar_select %p45, 0, %s44
      %s47 = sadd.s32 1, %s38
      %s48 = scalar_select %p45, %s47, %s38
      %p49 = scmp.ge.s32.totalorder %s48, 2
      %s50 = scalar_select %p49, 0, %s48
      %s51 = ssub.s32 %s38, %s50
      %p52 = scmp.eq.s32.totalorder %s51, 0
      %s54 = sadd.s32 %s53, 1
      %s55 = scalar_select %p52, %s53, %s54
      %p58 = pneg %p52
      %p59 = scmp.eq.s32.totalorder %s31, 3
      %p60 = por %p58, %p59
      %p61 = scmp.ne.s32.totalorder %s53, %s56
      %p62 = scmp.eq.s32.totalorder %s31, 0
      %p63 = por %p61, %p62
      %p64 = scmp.ne.s32.totalorder %s53, %s56
      %p65 = scmp.eq.s32.totalorder %s36, 3
      %p66 = por %p64, %p65
      %p67 = scmp.ne.s32.totalorder %s56, %s57
      %p68 = scmp.eq.s32.totalorder %s36, 0
      %p69 = por %p67, %p68
      %p70 = scmp.ne.s32.totalorder %s56, %s57
      %p71 = scmp.eq.s32.totalorder %s37, 3
      %p72 = por %p70, %p71
      %p74 = scmp.ne.s32.totalorder %s57, %s73
      %p75 = scmp.eq.s32.totalorder %s37, 0
      %p76 = por %p74, %p75
      %s77 = ssub.s32 %s38, %s50
      %p78 = scmp.eq.s32.totalorder %s77, 0
      %s80 = sadd.s32 %s79, 1
      %s81 = scalar_select %p78, %s79, %s80
      %p84 = pneg %p78
      %p85 = scmp.eq.s32.totalorder %s31, 3
      %p86 = por %p84, %p85
      %p87 = scmp.ne.s32.totalorder %s79, %s82
      %p88 = scmp.eq.s32.totalorder %s31, 0
      %p89 = por %p87, %p88
      %p90 = scmp.ne.s32.totalorder %s79, %s82
      %p91 = scmp.eq.s32.totalorder %s36, 3
      %p92 = por %p90, %p91
      %p93 = scmp.ne.s32.totalorder %s82, %s83
      %p94 = scmp.eq.s32.totalorder %s36, 0
      %p95 = por %p93, %p94
      %p96 = scmp.ne.s32.totalorder %s82, %s83
      %p97 = scmp.eq.s32.totalorder %s37, 3
      %p98 = por %p96, %p97
      %p100 = scmp.ne.s32.totalorder %s83, %s99
      %p101 = scmp.eq.s32.totalorder %s37, 0
      %p102 = por %p100, %p101
      %s104 = sadd.s32 %s103, 1
      %p107 = scmp.eq.s32.totalorder %s31, 3
      %p108 = scmp.ne.s32.totalorder %s103, %s105
      %p109 = scmp.eq.s32.totalorder %s31, 0
      %p110 = por %p108, %p109
      %p111 = scmp.ne.s32.totalorder %s103, %s105
      %p112 = scmp.eq.s32.totalorder %s36, 3
      %p113 = por %p111, %p112
      %p114 = scmp.ne.s32.totalorder %s105, %s106
      %p115 = scmp.eq.s32.totalorder %s36, 0
      %p116 = por %p114, %p115
      %p117 = scmp.ne.s32.totalorder %s105, %s106
      %p118 = scmp.eq.s32.totalorder %s37, 3
      %p119 = por %p117, %p118
      %p121 = scmp.ne.s32.totalorder %s106, %s120
      %p122 = scmp.eq.s32.totalorder %s37, 0
      %p123 = por %p121, %p122
      %s125 = sadd.s32 %s124, 1
      %p128 = scmp.eq.s32.totalorder %s31, 3
      %p129 = scmp.ne.s32.totalorder %s124, %s126
      %p130 = scmp.eq.s32.totalorder %s31, 0
      %p131 = por %p129, %p130
      %p132 = scmp.ne.s32.totalorder %s124, %s126
      %p133 = scmp.eq.s32.totalorder %s36, 3
      %p134 = por %p132, %p133
      %p135 = scmp.ne.s32.totalorder %s126, %s127
      %p136 = scmp.eq.s32.totalorder %s36, 0
      %p137 = por %p135, %p136
      %p138 = scmp.ne.s32.totalorder %s126, %s127
      %p139 = scmp.eq.s32.totalorder %s37, 3
      %p140 = por %p138, %p139
      %p142 = scmp.ne.s32.totalorder %s127, %s141
      %p143 = scmp.eq.s32.totalorder %s37, 0
      %p144 = por %p142, %p143
      %s146 = sadd.s32 %s145, 1
      %p149 = scmp.eq.s32.totalorder %s31, 3
      %p150 = scmp.ne.s32.totalorder %s145, %s147
      %p151 = scmp.eq.s32.totalorder %s31, 0
      %p152 = por %p150, %p151
      %p153 = scmp.ne.s32.totalorder %s145, %s147
      %p154 = scmp.eq.s32.totalorder %s36, 3
      %p155 = por %p153, %p154
      %p156 = scmp.ne.s32.totalorder %s147, %s148
      %p157 = scmp.eq.s32.totalorder %s36, 0
      %p158 = por %p156, %p157
      %p159 = scmp.ne.s32.totalorder %s147, %s148
      %p160 = scmp.eq.s32.totalorder %s37, 3
      %p161 = por %p159, %p160
      %p163 = scmp.ne.s32.totalorder %s148, %s162
      %p164 = scmp.eq.s32.totalorder %s37, 0
      %p165 = por %p163, %p164
      %s167 = sadd.s32 %s166, 1
      %p170 = scmp.eq.s32.totalorder %s31, 3
      %p171 = scmp.ne.s32.totalorder %s166, %s168
      %p172 = scmp.eq.s32.totalorder %s31, 0
      %p173 = por %p171, %p172
      %p174 = scmp.ne.s32.totalorder %s166, %s168
      %p175 = scmp.eq.s32.totalorder %s36, 3
      %p176 = por %p174, %p175
      %p177 = scmp.ne.s32.totalorder %s168, %s169
      %p178 = scmp.eq.s32.totalorder %s36, 0
      %p179 = por %p177, %p178
      %p180 = scmp.ne.s32.totalorder %s168, %s169
      %p181 = scmp.eq.s32.totalorder %s37, 3
      %p182 = por %p180, %p181
      %p184 = scmp.ne.s32.totalorder %s169, %s183
      %p185 = scmp.eq.s32.totalorder %s37, 0
      %p186 = por %p184, %p185
      %s187 = ssub.s32 %s39, %s46
      %p188 = scmp.eq.s32.totalorder %s187, 0
      %s190 = sadd.s32 %s189, 1
      %s191 = scalar_select %p188, %s189, %s190
      %p194 = pneg %p188
      %p195 = scmp.eq.s32.totalorder %s31, 3
      %p196 = por %p194, %p195
      %p197 = scmp.ne.s32.totalorder %s189, %s192
      %p198 = scmp.eq.s32.totalorder %s31, 0
      %p199 = por %p197, %p198
      %p200 = scmp.ne.s32.totalorder %s189, %s192
      %p201 = scmp.eq.s32.totalorder %s36, 3
      %p202 = por %p200, %p201
      %p203 = scmp.ne.s32.totalorder %s192, %s193
      %p204 = scmp.eq.s32.totalorder %s36, 0
      %p205 = por %p203, %p204
      %p206 = scmp.ne.s32.totalorder %s192, %s193
      %p207 = scmp.eq.s32.totalorder %s37, 3
      %p208 = por %p206, %p207
      %p210 = scmp.ne.s32.totalorder %s193, %s209
      %p211 = scmp.eq.s32.totalorder %s37, 0
      %p212 = por %p210, %p211
      %s213 = ssub.s32 %s39, %s46
      %p214 = scmp.eq.s32.totalorder %s213, 0
      %s216 = sadd.s32 %s215, 1
      %s217 = scalar_select %p214, %s215, %s216
      %p220 = pneg %p214
      %p221 = scmp.eq.s32.totalorder %s31, 3
      %p222 = por %p220, %p221
      %p223 = scmp.ne.s32.totalorder %s215, %s218
      %p224 = scmp.eq.s32.totalorder %s31, 0
      %p225 = por %p223, %p224
      %p226 = scmp.ne.s32.totalorder %s215, %s218
      %p227 = scmp.eq.s32.totalorder %s36, 3
      %p228 = por %p226, %p227
      %p229 = scmp.ne.s32.totalorder %s218, %s219
      %p230 = scmp.eq.s32.totalorder %s36, 0
      %p231 = por %p229, %p230
      %p232 = scmp.ne.s32.totalorder %s218, %s219
      %p233 = scmp.eq.s32.totalorder %s37, 3
      %p234 = por %p232, %p233
      %p236 = scmp.ne.s32.totalorder %s219, %s235
      %p237 = scmp.eq.s32.totalorder %s37, 0
      %p238 = por %p236, %p237
      %s239 = ssub.s32 %s39, %s46
      %p240 = scmp.eq.s32.totalorder %s239, 0
      %s242 = sadd.s32 %s241, 1
      %s243 = scalar_select %p240, %s241, %s242
      %p246 = pneg %p240
      %p247 = scmp.eq.s32.totalorder %s31, 3
      %p248 = por %p246, %p247
      %p249 = scmp.ne.s32.totalorder %s241, %s244
      %p250 = scmp.eq.s32.totalorder %s31, 0
      %p251 = por %p249, %p250
      %p252 = scmp.ne.s32.totalorder %s241, %s244
      %p253 = scmp.eq.s32.totalorder %s36, 3
      %p254 = por %p252, %p253
      %p255 = scmp.ne.s32.totalorder %s244, %s245
      %p256 = scmp.eq.s32.totalorder %s36, 0
      %p257 = por %p255, %p256
      %p258 = scmp.ne.s32.totalorder %s244, %s245
      %p259 = scmp.eq.s32.totalorder %s37, 3
      %p260 = por %p258, %p259
      %p262 = scmp.ne.s32.totalorder %s245, %s261
      %p263 = scmp.eq.s32.totalorder %s37, 0
      %p264 = por %p262, %p263
      %s266 = sadd.s32 %s265, 1
      %p269 = scmp.eq.s32.totalorder %s31, 3
      %p270 = scmp.ne.s32.totalorder %s265, %s267
      %p271 = scmp.eq.s32.totalorder %s31, 0
      %p272 = por %p270, %p271
      %p273 = scmp.ne.s32.totalorder %s265, %s267
      %p274 = scmp.eq.s32.totalorder %s36, 3
      %p275 = por %p273, %p274
      %p276 = scmp.ne.s32.totalorder %s267, %s268
      %p277 = scmp.eq.s32.totalorder %s36, 0
      %p278 = por %p276, %p277
      %p279 = scmp.ne.s32.totalorder %s267, %s268
      %p280 = scmp.eq.s32.totalorder %s37, 3
      %p281 = por %p279, %p280
      %p283 = scmp.ne.s32.totalorder %s268, %s282
      %p284 = scmp.eq.s32.totalorder %s37, 0
      %p285 = por %p283, %p284
      %s287 = sadd.s32 %s286, 1
      %p290 = scmp.eq.s32.totalorder %s31, 3
      %p291 = scmp.ne.s32.totalorder %s286, %s288
      %p292 = scmp.eq.s32.totalorder %s31, 0
      %p293 = por %p291, %p292
      %p294 = scmp.ne.s32.totalorder %s286, %s288
      %p295 = scmp.eq.s32.totalorder %s36, 3
      %p296 = por %p294, %p295
      %p297 = scmp.ne.s32.totalorder %s288, %s289
      %p298 = scmp.eq.s32.totalorder %s36, 0
      %p299 = por %p297, %p298
      %p300 = scmp.ne.s32.totalorder %s288, %s289
      %p301 = scmp.eq.s32.totalorder %s37, 3
      %p302 = por %p300, %p301
      %p304 = scmp.ne.s32.totalorder %s289, %s303
      %p305 = scmp.eq.s32.totalorder %s37, 0
      %p306 = por %p304, %p305
      %s308 = sadd.s32 %s307, 1
      %p311 = scmp.eq.s32.totalorder %s31, 3
      %p312 = scmp.ne.s32.totalorder %s307, %s309
      %p313 = scmp.eq.s32.totalorder %s31, 0
      %p314 = por %p312, %p313
      %p315 = scmp.ne.s32.totalorder %s307, %s309
      %p316 = scmp.eq.s32.totalorder %s36, 3
      %p317 = por %p315, %p316
      %p318 = scmp.ne.s32.totalorder %s309, %s310
      %p319 = scmp.eq.s32.totalorder %s36, 0
      %p320 = por %p318, %p319
      %p321 = scmp.ne.s32.totalorder %s309, %s310
      %p322 = scmp.eq.s32.totalorder %s37, 3
      %p323 = por %p321, %p322
      %p325 = scmp.ne.s32.totalorder %s310, %s324
      %p326 = scmp.eq.s32.totalorder %s37, 0
      %p327 = por %p325, %p326
      %s329 = sadd.s32 %s328, 1
      %p332 = scmp.eq.s32.totalorder %s31, 3
      %p333 = scmp.ne.s32.totalorder %s328, %s330
      %p334 = scmp.eq.s32.totalorder %s31, 0
      %p335 = por %p333, %p334
      %p336 = scmp.ne.s32.totalorder %s328, %s330
      %p337 = scmp.eq.s32.totalorder %s36, 3
      %p338 = por %p336, %p337
      %p339 = scmp.ne.s32.totalorder %s330, %s331
      %p340 = scmp.eq.s32.totalorder %s36, 0
      %p341 = por %p339, %p340
      %p342 = scmp.ne.s32.totalorder %s330, %s331
      %p343 = scmp.eq.s32.totalorder %s37, 3
      %p344 = por %p342, %p343
      %p346 = scmp.ne.s32.totalorder %s331, %s345
      %p347 = scmp.eq.s32.totalorder %s37, 0
      %p348 = por %p346, %p347
      %s350 = sadd.s32 %s349, 1
      %p353 = scmp.eq.s32.totalorder %s31, 3
      %p354 = scmp.ne.s32.totalorder %s349, %s351
      %p355 = scmp.eq.s32.totalorder %s31, 0
      %p356 = por %p354, %p355
      %p357 = scmp.ne.s32.totalorder %s349, %s351
      %p358 = scmp.eq.s32.totalorder %s36, 3
      %p359 = por %p357, %p358
      %p360 = scmp.ne.s32.totalorder %s351, %s352
      %p361 = scmp.eq.s32.totalorder %s36, 0
      %p362 = por %p360, %p361
      %p363 = scmp.ne.s32.totalorder %s351, %s352
      %p364 = scmp.eq.s32.totalorder %s37, 3
      %p365 = por %p363, %p364
      %p367 = scmp.ne.s32.totalorder %s352, %s366
      %p368 = scmp.eq.s32.totalorder %s37, 0
      %p369 = por %p367, %p368
      %s370 = ssub.s32 %s38, %s50
      %p371 = scmp.eq.s32.totalorder %s370, 0
      %s373 = sadd.s32 %s372, 1
      %s374 = scalar_select %p371, %s372, %s373
      %p377 = pneg %p371
      %p378 = scmp.eq.s32.totalorder %s31, 3
      %p379 = por %p377, %p378
      %p380 = scmp.ne.s32.totalorder %s372, %s375
      %p381 = scmp.eq.s32.totalorder %s31, 0
      %p382 = por %p380, %p381
      %p383 = scmp.ne.s32.totalorder %s372, %s375
      %p384 = scmp.eq.s32.totalorder %s36, 3
      %p385 = por %p383, %p384
      %p386 = scmp.ne.s32.totalorder %s375, %s376
      %p387 = scmp.eq.s32.totalorder %s36, 0
      %p388 = por %p386, %p387
      %p389 = scmp.ne.s32.totalorder %s375, %s376
      %p390 = scmp.eq.s32.totalorder %s37, 3
      %p391 = por %p389, %p390
      %p393 = scmp.ne.s32.totalorder %s376, %s392
      %p394 = scmp.eq.s32.totalorder %s37, 0
      %p395 = por %p393, %p394
      %p396 = scmp.le.s32.totalorder 1, %s31
      %p397 = scmp.lt.s32.totalorder %s31, 5
      %p398 = pnand %p396, %p397
      %p399 = pneg %p398
      // Predicated region
      $region9: #{tpu_custom_call.1} parent=5 // pred_check
        _
      $region10: #{tpu_custom_call.1} parent=5 // pred_check_branch
        %401 = sbr.rel (%p398) target = $region12
      $region11: #{tpu_custom_call.1} parent=5 // pred_region
        %s402 = ssub.s32 %s31, 1
        // Predicated region
        $region13: #{tpu_custom_call.1} parent=11 // pred_check
          %p403 = pneg %p116
        $region14: #{tpu_custom_call.1} parent=11 // pred_check_branch
          %405 = sbr.rel (%p403) target = $region16
        $region15: #{tpu_custom_call.1} parent=11 // pred_region
          %s407 = ssub.s32 1024, 1024
          %408 = vsyncadd [#allocation8], %s407
          %s409 = sshll.u32 [#allocation7], 4
          %s410 = int_to_ptr.vmem [resolvable:$true] %s409
          %415 = dma.hbm_to_vmem [thread:$0]  %s2, 1024, %s410, [#allocation8], 64, 64, 4
        $region16: #{tpu_custom_call.1} parent=11 // pred_fallthru
          _
        // Predicated region
        $region17: #{tpu_custom_call.1} parent=11 // pred_check
          %p416 = pneg %p137
        $region18: #{tpu_custom_call.1} parent=11 // pred_check_branch
          %418 = sbr.rel (%p416) target = $region20
        $region19: #{tpu_custom_call.1} parent=11 // pred_region
          %s420 = ssub.s32 1024, 1024
          %421 = vsyncadd [#allocation8], %s420
          %s422 = sshll.u32 [#allocation9], 4
          %s423 = int_to_ptr.vmem [resolvable:$true] %s422
          %428 = dma.hbm_to_vmem [thread:$0]  %s3, 1024, %s423, [#allocation8], 64, 64, 4
        $region20: #{tpu_custom_call.1} parent=11 // pred_fallthru
          _
        // Predicated region
        $region21: #{tpu_custom_call.1} parent=11 // pred_check
          %p429 = pneg %p158
        $region22: #{tpu_custom_call.1} parent=11 // pred_check_branch
          %431 = sbr.rel (%p429) target = $region24
        $region23: #{tpu_custom_call.1} parent=11 // pred_region
          %s433 = ssub.s32 1024, 1024
          %434 = vsyncadd [#allocation11], %s433
          %s435 = sshll.u32 [#allocation10], 4
          %s436 = int_to_ptr.vmem [resolvable:$true] %s435
          %441 = dma.hbm_to_vmem [thread:$0]  %s4, 1024, %s436, [#allocation11], 64, 64, 4
        $region24: #{tpu_custom_call.1} parent=11 // pred_fallthru
          _
        // Predicated region
        $region25: #{tpu_custom_call.1} parent=11 // pred_check
          %p442 = pneg %p179
        $region26: #{tpu_custom_call.1} parent=11 // pred_check_branch
          %444 = sbr.rel (%p442) target = $region28
        $region27: #{tpu_custom_call.1} parent=11 // pred_region
          %s446 = ssub.s32 1024, 1024
          %447 = vsyncadd [#allocation11], %s446
          %s448 = sshll.u32 [#allocation12], 4
          %s449 = int_to_ptr.vmem [resolvable:$true] %s448
          %454 = dma.hbm_to_vmem [thread:$0]  %s5, 1024, %s449, [#allocation11], 64, 64, 4
        $region28: #{tpu_custom_call.1} parent=11 // pred_fallthru
          _
        // Predicated region
        $region29: #{tpu_custom_call.1} parent=11 // pred_check
          %p455 = pneg %p278
        $region30: #{tpu_custom_call.1} parent=11 // pred_check_branch
          %457 = sbr.rel (%p455) target = $region32
        $region31: #{tpu_custom_call.1} parent=11 // pred_region
          _
        $region32: #{tpu_custom_call.1} parent=11 // pred_fallthru
          _
        // Predicated region
        $region33: #{tpu_custom_call.1} parent=11 // pred_check
          %p458 = pneg %p299
        $region34: #{tpu_custom_call.1} parent=11 // pred_check_branch
          %460 = sbr.rel (%p458) target = $region36
        $region35: #{tpu_custom_call.1} parent=11 // pred_region
          _
        $region36: #{tpu_custom_call.1} parent=11 // pred_fallthru
          _
        // Predicated region
        $region37: #{tpu_custom_call.1} parent=11 // pred_check
          %p461 = pneg %p320
        $region38: #{tpu_custom_call.1} parent=11 // pred_check_branch
          %463 = sbr.rel (%p461) target = $region40
        $region39: #{tpu_custom_call.1} parent=11 // pred_region
          _
        $region40: #{tpu_custom_call.1} parent=11 // pred_fallthru
          _
        // Predicated region
        $region41: #{tpu_custom_call.1} parent=11 // pred_check
          %p464 = pneg %p341
        $region42: #{tpu_custom_call.1} parent=11 // pred_check_branch
          %466 = sbr.rel (%p464) target = $region44
        $region43: #{tpu_custom_call.1} parent=11 // pred_region
          _
        $region44: #{tpu_custom_call.1} parent=11 // pred_fallthru
          _
        // Predicated region
        $region45: #{tpu_custom_call.1} parent=11 // pred_check
          %p467 = pneg %p362
        $region46: #{tpu_custom_call.1} parent=11 // pred_check_branch
          %469 = sbr.rel (%p467) target = $region48
        $region47: #{tpu_custom_call.1} parent=11 // pred_region
          _
        $region48: #{tpu_custom_call.1} parent=11 // pred_fallthru
          _
      $region12: #{tpu_custom_call.1} parent=5 // pred_fallthru
        _
      %p470 = scmp.lt.s32.totalorder %s31, 4
      // Predicated region
      $region49: #{tpu_custom_call.1} parent=5 // pred_check
        %p471 = pneg %p470
      $region50: #{tpu_custom_call.1} parent=5 // pred_check_branch
        %473 = sbr.rel (%p471) target = $region52
      $region51: #{tpu_custom_call.1} parent=5 // pred_region
        // Predicated region
        $region53: #{tpu_custom_call.1} parent=51 // pred_check
          %p474 = pneg %p63
        $region54: #{tpu_custom_call.1} parent=51 // pred_check_branch
          %476 = sbr.rel (%p474) target = $region56
        $region55: #{tpu_custom_call.1} parent=51 // pred_region
          %s477 = sand.u32 %s53, 1
          %s478 = scalar_lea.sflag [#allocation5], %s477
          %s479 = sand.u32 %s53, 1
          %s480 = smul.addr %s479, 64
          %s481 = scalar_lea.vmem [#allocation4], %s480
          %s483 = ssub.s32 1024, 1024
          %484 = vsyncadd %s478, %s483
          %s485 = smul.addr %s38, 16
          %s486 = smul.addr %s485, 64
          %s487 = scalar_lea.hbm %s0, %s486
          %s488 = sshll.u32 %s481, 4
          %s489 = int_to_ptr.vmem [resolvable:$true] %s488
          %494 = dma.hbm_to_vmem [thread:$0]  %s487, 1024, %s489, %s478, 64, 64, 4
        $region56: #{tpu_custom_call.1} parent=51 // pred_fallthru
          _
        // Predicated region
        $region57: #{tpu_custom_call.1} parent=51 // pred_check
          %p495 = pneg %p89
        $region58: #{tpu_custom_call.1} parent=51 // pred_check_branch
          %497 = sbr.rel (%p495) target = $region60
        $region59: #{tpu_custom_call.1} parent=51 // pred_region
          %p498 = scmp.lt.s32.totalorder %s38, 1
          %s499 = scalar_select %p498, %s38, 1
          %s500 = scalar_lea.vmem %s1, %s499
        $region60: #{tpu_custom_call.1} parent=51 // pred_fallthru
          _
        // Predicated region
        $region61: #{tpu_custom_call.1} parent=51 // pred_check
          %p501 = pneg %p199
        $region62: #{tpu_custom_call.1} parent=51 // pred_check_branch
          %503 = sbr.rel (%p501) target = $region64
        $region63: #{tpu_custom_call.1} parent=51 // pred_region
          %s504 = sand.u32 %s31, 1
          %s505 = scalar_lea.sflag [#allocation14], %s504
          %s506 = sand.u32 %s189, 1
          %s507 = smul.addr %s506, 64
          %s508 = scalar_lea.vmem [#allocation13], %s507
          %s510 = ssub.s32 1024, 1024
          %511 = vsyncadd %s505, %s510
          %s512 = smul.addr %s39, 64
          %s513 = scalar_lea.hbm %s6, %s512
          %s514 = sshll.u32 %s508, 4
          %s515 = int_to_ptr.vmem [resolvable:$true] %s514
          %520 = dma.hbm_to_vmem [thread:$0]  %s513, 1024, %s515, %s505, 128, 64, 4
        $region64: #{tpu_custom_call.1} parent=51 // pred_fallthru
          _
        // Predicated region
        $region65: #{tpu_custom_call.1} parent=51 // pred_check
          %p521 = pneg %p225
        $region66: #{tpu_custom_call.1} parent=51 // pred_check_branch
          %523 = sbr.rel (%p521) target = $region68
        $region67: #{tpu_custom_call.1} parent=51 // pred_region
          %p524 = scmp.lt.s32.totalorder %s39, 1
          %s525 = scalar_select %p524, %s39, 1
          %s526 = scalar_lea.vmem %s7, %s525
        $region68: #{tpu_custom_call.1} parent=51 // pred_fallthru
          _
        // Predicated region
        $region69: #{tpu_custom_call.1} parent=51 // pred_check
          %p527 = pneg %p251
        $region70: #{tpu_custom_call.1} parent=51 // pred_check_branch
          %529 = sbr.rel (%p527) target = $region72
        $region71: #{tpu_custom_call.1} parent=51 // pred_region
          %s530 = sand.u32 %s31, 1
          %s531 = scalar_lea.sflag [#allocation14], %s530
          %s532 = sand.u32 %s241, 1
          %s533 = smul.addr %s532, 64
          %s534 = scalar_lea.vmem [#allocation15], %s533
          %s535 = smul.u32 16, %s39
          %s537 = ssub.s32 1024, 1024
          %538 = vsyncadd %s531, %s537
          %s539 = smul.addr %s535, 64
          %s540 = scalar_lea.hbm %s8, %s539
          %s541 = sshll.u32 %s534, 4
          %s542 = int_to_ptr.vmem [resolvable:$true] %s541
          %547 = dma.hbm_to_vmem [thread:$0]  %s540, 1024, %s542, %s531, 64, 64, 4
        $region72: #{tpu_custom_call.1} parent=51 // pred_fallthru
          _
      $region52: #{tpu_custom_call.1} parent=5 // pred_fallthru
        _
      %p548 = scmp.le.s32.totalorder 1, %s31
      %p549 = scmp.lt.s32.totalorder %s31, 5
      %p550 = pnand %p548, %p549
      %p551 = pneg %p550
      // Predicated region
      $region73: #{tpu_custom_call.1} parent=5 // pred_check
        _
      $region74: #{tpu_custom_call.1} parent=5 // pred_check_branch
        %553 = sbr.rel (%p550) target = $region76
      $region75: #{tpu_custom_call.1} parent=5 // pred_region
        %s554 = ssub.s32 %s31, 1
        %s555 = sand.u32 %s56, 1
        %s556 = scalar_lea.sflag [#allocation5], %s555
        %s557 = sand.u32 %s56, 1
        %s558 = smul.addr %s557, 64
        %s559 = scalar_lea.vmem [#allocation4], %s558
        // Predicated region
        $region77: #{tpu_custom_call.1} parent=75 // pred_check
          %p560 = pneg %p69
        $region78: #{tpu_custom_call.1} parent=75 // pred_check_branch
          %562 = sbr.rel (%p560) target = $region80
        $region79: #{tpu_custom_call.1} parent=75 // pred_region
          %563 = dma.done %s556, 1024
        $region80: #{tpu_custom_call.1} parent=75 // pred_fallthru
          _
        // Predicated region
        $region81: #{tpu_custom_call.1} parent=75 // pred_check
          %p564 = pneg %p116
        $region82: #{tpu_custom_call.1} parent=75 // pred_check_branch
          %566 = sbr.rel (%p564) target = $region84
        $region83: #{tpu_custom_call.1} parent=75 // pred_region
          %567 = dma.done [#allocation8], 1024
        $region84: #{tpu_custom_call.1} parent=75 // pred_fallthru
          _
        // Predicated region
        $region85: #{tpu_custom_call.1} parent=75 // pred_check
          %p568 = pneg %p137
        $region86: #{tpu_custom_call.1} parent=75 // pred_check_branch
          %570 = sbr.rel (%p568) target = $region88
        $region87: #{tpu_custom_call.1} parent=75 // pred_region
          %571 = dma.done [#allocation8], 1024
        $region88: #{tpu_custom_call.1} parent=75 // pred_fallthru
          _
        // Predicated region
        $region89: #{tpu_custom_call.1} parent=75 // pred_check
          %p572 = pneg %p158
        $region90: #{tpu_custom_call.1} parent=75 // pred_check_branch
          %574 = sbr.rel (%p572) target = $region92
        $region91: #{tpu_custom_call.1} parent=75 // pred_region
          %575 = dma.done [#allocation11], 1024
        $region92: #{tpu_custom_call.1} parent=75 // pred_fallthru
          _
        // Predicated region
        $region93: #{tpu_custom_call.1} parent=75 // pred_check
          %p576 = pneg %p179
        $region94: #{tpu_custom_call.1} parent=75 // pred_check_branch
          %578 = sbr.rel (%p576) target = $region96
        $region95: #{tpu_custom_call.1} parent=75 // pred_region
          %579 = dma.done [#allocation11], 1024
        $region96: #{tpu_custom_call.1} parent=75 // pred_fallthru
          _
        %s580 = sand.u32 %s36, 1
        %s581 = scalar_lea.sflag [#allocation14], %s580
        %s582 = sand.u32 %s192, 1
        %s583 = smul.addr %s582, 64
        %s584 = scalar_lea.vmem [#allocation13], %s583
        // Predicated region
        $region97: #{tpu_custom_call.1} parent=75 // pred_check
          %p585 = pneg %p205
        $region98: #{tpu_custom_call.1} parent=75 // pred_check_branch
          %587 = sbr.rel (%p585) target = $region100
        $region99: #{tpu_custom_call.1} parent=75 // pred_region
          %588 = dma.done %s581, 1024
        $region100: #{tpu_custom_call.1} parent=75 // pred_fallthru
          _
        %s589 = sand.u32 %s36, 1
        %s590 = scalar_lea.sflag [#allocation14], %s589
        %s591 = sand.u32 %s244, 1
        %s592 = smul.addr %s591, 64
        %s593 = scalar_lea.vmem [#allocation15], %s592
        // Predicated region
        $region101: #{tpu_custom_call.1} parent=75 // pred_check
          %p594 = pneg %p257
        $region102: #{tpu_custom_call.1} parent=75 // pred_check_branch
          %596 = sbr.rel (%p594) target = $region104
        $region103: #{tpu_custom_call.1} parent=75 // pred_region
          %597 = dma.done %s590, 1024
        $region104: #{tpu_custom_call.1} parent=75 // pred_fallthru
          _
        %s598 = sand.u32 %s56, 1
        %s599 = scalar_lea.sflag [#allocation5], %s598
        %s600 = sand.u32 %s56, 1
        %s601 = smul.addr %s600, 64
        %s602 = scalar_lea.vmem [#allocation4], %s601
        %p603 = pneg %p69
        %p604 = pneg %p66
        %p605 = scmp.lt.s32.totalorder %s40, 1
        %s606 = scalar_select %p605, %s40, 1
        %s607 = scalar_lea.vmem %s1, %s606
        %p608 = pneg %p95
        %p609 = pneg %p92
        %p610 = pneg %p116
        %p611 = pneg %p113
        %p612 = pneg %p137
        %p613 = pneg %p134
        %p614 = pneg %p158
        %p615 = pneg %p155
        %p616 = pneg %p179
        %p617 = pneg %p176
        %s618 = sand.u32 %s36, 1
        %s619 = scalar_lea.sflag [#allocation14], %s618
        %s620 = sand.u32 %s192, 1
        %s621 = smul.addr %s620, 64
        %s622 = scalar_lea.vmem [#allocation13], %s621
        %p623 = pneg %p205
        %p624 = pneg %p202
        %p625 = scmp.lt.s32.totalorder %s41, 1
        %s626 = scalar_select %p625, %s41, 1
        %s627 = scalar_lea.vmem %s7, %s626
        %p628 = pneg %p231
        %p629 = pneg %p228
        %s630 = sand.u32 %s36, 1
        %s631 = scalar_lea.sflag [#allocation14], %s630
        %s632 = sand.u32 %s244, 1
        %s633 = smul.addr %s632, 64
        %s634 = scalar_lea.vmem [#allocation15], %s633
        %p635 = pneg %p257
        %p636 = pneg %p254
        %p637 = pneg %p278
        %p638 = pneg %p275
        %p639 = pneg %p299
        %p640 = pneg %p296
        %p641 = pneg %p320
        %p642 = pneg %p317
        %p643 = pneg %p341
        %p644 = pneg %p338
        %p645 = pneg %p362
        %p646 = pneg %p359
        %p647 = pneg %p388
        %p648 = pneg %p385
        %s649 = sand.u32 %s375, 1
        %s650 = scalar_lea.sflag [#allocation6], %s649
        %s651 = sand.u32 %s375, 1
        %s652 = smul.addr %s651, 128
        %s653 = scalar_lea.vmem [#allocation16], %s652
        %p654 = scmp.lt.s32.totalorder %s40, 1
        %s655 = scalar_select %p654, %s40, 1
        %s656 = scalar_lea.vmem %s1, %s655
        %p657 = scmp.lt.s32.totalorder %s41, 1
        %s658 = scalar_select %p657, %s41, 1
        %s659 = scalar_lea.vmem %s7, %s658
        %s660 = smul.u32 16, %s41
        %p662 = scmp.eq.s32.totalorder %s41, 0
        // Predicated region
        $region105: #{tpu_custom_call.1} parent=75 // pred_check
          %p663 = pneg %p662
        $region106: #{tpu_custom_call.1} parent=75 // pred_check_branch
          %665 = sbr.rel (%p663) target = $region108
        $region107: #{tpu_custom_call.1} parent=75 // pred_region
          %v666 = vld [vmem:[%s559] sm:$0xf]
          %v667 = vld [vmem:[%s559 + $0x4] sm:$0xf]
          %v668 = vld [vmem:[%s559 + $0x8] sm:$0xf]
          %v669 = vld [vmem:[%s559 + $0xc] sm:$0xf]
          %v670 = vld [vmem:[%s559 + $0x10] sm:$0xf]
          %v671 = vld [vmem:[%s559 + $0x14] sm:$0xf]
          %v672 = vld [vmem:[%s559 + $0x18] sm:$0xf]
          %v673 = vld [vmem:[%s559 + $0x1c] sm:$0xf]
          %v674 = vld [vmem:[%s559 + $0x20] sm:$0xf]
          %v675 = vld [vmem:[%s559 + $0x24] sm:$0xf]
          %v676 = vld [vmem:[%s559 + $0x28] sm:$0xf]
          %v677 = vld [vmem:[%s559 + $0x2c] sm:$0xf]
          %v678 = vld [vmem:[%s559 + $0x30] sm:$0xf]
          %v679 = vld [vmem:[%s559 + $0x34] sm:$0xf]
          %v680 = vld [vmem:[%s559 + $0x38] sm:$0xf]
          %v681 = vld [vmem:[%s559 + $0x3c] sm:$0xf]
          %v682 = vld [vmem:[%s656] sm:$0x1]
          %vm683 = vcmp.eq.f32.partialorder %v682, 0.0
          %v684 = vsel %vm683, -1e+10, 0.0
          %v686 = vlaneseq
          %v687 = vshrl.u32 %v686, 7
          %v688 = vsub.s32 0, %v687
          %v689 = vrot.slane %v684, %v688
          %v691 = vld [vmem:[#allocation7] sm:$0xf]
          %v692 = vld [vmem:[#allocation7 + $0x4] sm:$0xf]
          %v693 = vld [vmem:[#allocation7 + $0x8] sm:$0xf]
          %v694 = vld [vmem:[#allocation7 + $0xc] sm:$0xf]
          %v695 = vld [vmem:[#allocation7 + $0x10] sm:$0xf]
          %v696 = vld [vmem:[#allocation7 + $0x14] sm:$0xf]
          %v697 = vld [vmem:[#allocation7 + $0x18] sm:$0xf]
          %v698 = vld [vmem:[#allocation7 + $0x1c] sm:$0xf]
          %v699 = vld [vmem:[#allocation7 + $0x20] sm:$0xf]
          %v700 = vld [vmem:[#allocation7 + $0x24] sm:$0xf]
          %v701 = vld [vmem:[#allocation7 + $0x28] sm:$0xf]
          %v702 = vld [vmem:[#allocation7 + $0x2c] sm:$0xf]
          %v703 = vld [vmem:[#allocation7 + $0x30] sm:$0xf]
          %v704 = vld [vmem:[#allocation7 + $0x34] sm:$0xf]
          %v705 = vld [vmem:[#allocation7 + $0x38] sm:$0xf]
          %v706 = vld [vmem:[#allocation7 + $0x3c] sm:$0xf]
          %v723 = vunpack.c.l.b16 %v666
          %v724 = vunpack.c.l.b16 %v667
          %v725 = vunpack.c.l.b16 %v668
          %v726 = vunpack.c.l.b16 %v669
          %v727 = vunpack.c.l.b16 %v670
          %v728 = vunpack.c.l.b16 %v671
          %v729 = vunpack.c.l.b16 %v672
          %v730 = vunpack.c.l.b16 %v673
          %v731 = vunpack.c.l.b16 %v674
          %v732 = vunpack.c.l.b16 %v675
          %v733 = vunpack.c.l.b16 %v676
          %v734 = vunpack.c.l.b16 %v677
          %v735 = vunpack.c.l.b16 %v678
          %v736 = vunpack.c.l.b16 %v679
          %v737 = vunpack.c.l.b16 %v680
          %v738 = vunpack.c.l.b16 %v681
          %v739 = vpack.c.b16 %v724, %v723
          %v740 = vpack.c.b16 %v726, %v725
          %v741 = vpack.c.b16 %v728, %v727
          %v742 = vpack.c.b16 %v730, %v729
          %v743 = vpack.c.b16 %v732, %v731
          %v744 = vpack.c.b16 %v734, %v733
          %v745 = vpack.c.b16 %v736, %v735
          %v746 = vpack.c.b16 %v738, %v737
          %v771 = vunpack.c.l.b16 %v691
          %v772 = vunpack.c.l.b16 %v692
          %v773 = vunpack.c.l.b16 %v693
          %v774 = vunpack.c.l.b16 %v694
          %v775 = vunpack.c.l.b16 %v695
          %v776 = vunpack.c.l.b16 %v696
          %v777 = vunpack.c.l.b16 %v697
          %v778 = vunpack.c.l.b16 %v698
          %v779 = vunpack.c.l.b16 %v699
          %v780 = vunpack.c.l.b16 %v700
          %v781 = vunpack.c.l.b16 %v701
          %v782 = vunpack.c.l.b16 %v702
          %v783 = vunpack.c.l.b16 %v703
          %v784 = vunpack.c.l.b16 %v704
          %v785 = vunpack.c.l.b16 %v705
          %v786 = vunpack.c.l.b16 %v706
          %v787 = vpack.c.b16 %v772, %v771
          %v788 = vpack.c.b16 %v774, %v773
          %v789 = vpack.c.b16 %v776, %v775
          %v790 = vpack.c.b16 %v778, %v777
          %v791 = vpack.c.b16 %v780, %v779
          %v792 = vpack.c.b16 %v782, %v781
          %v793 = vpack.c.b16 %v784, %v783
          %v794 = vpack.c.b16 %v786, %v785
          %803 = vmatprep.subr.bf16.mxu0 0
          %804 = vmatpush1.bf16.msra.mxu0 %v787
          %805 = vmatprep.subr.bf16.mxu0 0
          %806 = vmatpush1.bf16.msra.mxu0 %v788
          %807 = vmatprep.subr.bf16.mxu0 0
          %808 = vmatpush1.bf16.msra.mxu0 %v789
          %809 = vmatprep.subr.bf16.mxu0 0
          %810 = vmatpush1.bf16.msra.mxu0 %v790
          %811 = vmatprep.subr.bf16.mxu0 0
          %812 = vmatpush1.bf16.msra.mxu0 %v791
          %813 = vmatprep.subr.bf16.mxu0 0
          %814 = vmatpush1.bf16.msra.mxu0 %v792
          %815 = vmatprep.subr.bf16.mxu0 0
          %816 = vmatpush1.bf16.msra.mxu0 %v793
          %817 = vmatprep.subr.bf16.mxu0 0
          %818 = vmatpush1.bf16.msra.mxu0 %v794
          %819 = vmatprep.subr.bf16.mxu0 0
          %820 = vmatpush1.bf16.msra.mxu0 0
          %821 = vmatprep.subr.bf16.mxu0 0
          %822 = vmatpush1.bf16.msra.mxu0 0
          %823 = vmatprep.subr.bf16.mxu0 0
          %824 = vmatpush1.bf16.msra.mxu0 0
          %825 = vmatprep.subr.bf16.mxu0 0
          %826 = vmatpush1.bf16.msra.mxu0 0
          %827 = vmatprep.subr.bf16.mxu0 0
          %828 = vmatpush1.bf16.msra.mxu0 0
          %829 = vmatprep.subr.bf16.mxu0 0
          %830 = vmatpush1.bf16.msra.mxu0 0
          %831 = vmatprep.subr.bf16.mxu0 0
          %832 = vmatpush1.bf16.msra.mxu0 0
          %833 = vmatprep.subr.bf16.mxu0 0
          %834 = vmatpush1.bf16.msra.mxu0 0
          %835 = vmatprep.mubr.bf16.mxu0 0
          %836 = vmatmul.mubr.bf16.gmra.mrb[0].mxu0 %v739
          %v837 = vpop.f32.mrb[0].mxu0
          %v838 = vadd.f32 0.0, %v837
          %v839 = vpop.f32.mrb[0].mxu0
          %v840 = vpop.f32.mrb[0].mxu0
          %v841 = vadd.f32 0.0, %v840
          %v842 = vpop.f32.mrb[0].mxu0
          %843 = vmatprep.mubr.bf16.mxu0 0
          %844 = vmatmul.mubr.bf16.gmra.mrb[0].mxu0 %v740
          %v845 = vpop.f32.mrb[0].mxu0
          %v846 = vadd.f32 0.0, %v845
          %v847 = vpop.f32.mrb[0].mxu0
          %v848 = vpop.f32.mrb[0].mxu0
          %v849 = vadd.f32 0.0, %v848
          %v850 = vpop.f32.mrb[0].mxu0
          %851 = vmatprep.mubr.bf16.mxu0 0
          %852 = vmatmul.mubr.bf16.gmra.mrb[0].mxu0 %v741
          %v853 = vpop.f32.mrb[0].mxu0
          %v854 = vadd.f32 0.0, %v853
          %v855 = vpop.f32.mrb[0].mxu0
          %v856 = vpop.f32.mrb[0].mxu0
          %v857 = vadd.f32 0.0, %v856
          %v858 = vpop.f32.mrb[0].mxu0
          %859 = vmatprep.mubr.bf16.mxu0 0
          %860 = vmatmul.mubr.bf16.gmra.mrb[0].mxu0 %v742
          %v861 = vpop.f32.mrb[0].mxu0
          %v862 = vadd.f32 0.0, %v861
          %v863 = vpop.f32.mrb[0].mxu0
          %v864 = vpop.f32.mrb[0].mxu0
          %v865 = vadd.f32 0.0, %v864
          %v866 = vpop.f32.mrb[0].mxu0
          %867 = vmatprep.mubr.bf16.mxu0 0
          %868 = vmatmul.mubr.bf16.gmra.mrb[0].mxu0 %v743
          %v869 = vpop.f32.mrb[0].mxu0
          %v870 = vadd.f32 0.0, %v869
          %v871 = vpop.f32.mrb[0].mxu0
          %v872 = vpop.f32.mrb[0].mxu0
          %v873 = vadd.f32 0.0, %v872
          %v874 = vpop.f32.mrb[0].mxu0
          %875 = vmatprep.mubr.bf16.mxu0 0
          %876 = vmatmul.mubr.bf16.gmra.mrb[0].mxu0 %v744
          %v877 = vpop.f32.mrb[0].mxu0
          %v878 = vadd.f32 0.0, %v877
          %v879 = vpop.f32.mrb[0].mxu0
          %v880 = vpop.f32.mrb[0].mxu0
          %v881 = vadd.f32 0.0, %v880
          %v882 = vpop.f32.mrb[0].mxu0
          %883 = vmatprep.mubr.bf16.mxu0 0
          %884 = vmatmul.mubr.bf16.gmra.mrb[0].mxu0 %v745
          %v885 = vpop.f32.mrb[0].mxu0
          %v886 = vadd.f32 0.0, %v885
          %v887 = vpop.f32.mrb[0].mxu0
          %v888 = vpop.f32.mrb[0].mxu0
          %v889 = vadd.f32 0.0, %v888
          %v890 = vpop.f32.mrb[0].mxu0
          %891 = vmatprep.mubr.bf16.mxu0 0
          %892 = vmatmul.mubr.bf16.gmra.mrb[0].mxu0 %v746
          %v893 = vpop.f32.mrb[0].mxu0
          %v894 = vadd.f32 0.0, %v893
          %v895 = vpop.f32.mrb[0].mxu0
          %v896 = vpop.f32.mrb[0].mxu0
          %v897 = vadd.f32 0.0, %v896
          %v898 = vpop.f32.mrb[0].mxu0
          %899 = vdwg.mxu0
          %v900 = vpack.c.bf16 %v841, %v838
          %v901 = vpack.c.bf16 %v849, %v846
          %v902 = vpack.c.bf16 %v857, %v854
          %v903 = vpack.c.bf16 %v865, %v862
          %v904 = vpack.c.bf16 %v873, %v870
          %v905 = vpack.c.bf16 %v881, %v878
          %v906 = vpack.c.bf16 %v889, %v886
          %v907 = vpack.c.bf16 %v897, %v894
          %v908 = vld [vmem:[#allocation9] sm:$0xf]
          %v909 = vld [vmem:[#allocation9 + $0x4] sm:$0xf]
          %v910 = vld [vmem:[#allocation9 + $0x8] sm:$0xf]
          %v911 = vld [vmem:[#allocation9 + $0xc] sm:$0xf]
          %v912 = vld [vmem:[#allocation9 + $0x10] sm:$0xf]
          %v913 = vld [vmem:[#allocation9 + $0x14] sm:$0xf]
          %v914 = vld [vmem:[#allocation9 + $0x18] sm:$0xf]
          %v915 = vld [vmem:[#allocation9 + $0x1c] sm:$0xf]
          %v916 = vld [vmem:[#allocation9 + $0x20] sm:$0xf]
          %v917 = vld [vmem:[#allocation9 + $0x24] sm:$0xf]
          %v918 = vld [vmem:[#allocation9 + $0x28] sm:$0xf]
          %v919 = vld [vmem:[#allocation9 + $0x2c] sm:$0xf]
          %v920 = vld [vmem:[#allocation9 + $0x30] sm:$0xf]
          %v921 = vld [vmem:[#allocation9 + $0x34] sm:$0xf]
          %v922 = vld [vmem:[#allocation9 + $0x38] sm:$0xf]
          %v923 = vld [vmem:[#allocation9 + $0x3c] sm:$0xf]
          %v940 = vunpack.c.l.b16 %v908
          %v941 = vunpack.c.l.b16 %v909
          %v942 = vunpack.c.l.b16 %v910
          %v943 = vunpack.c.l.b16 %v911
          %v944 = vunpack.c.l.b16 %v912
          %v945 = vunpack.c.l.b16 %v913
          %v946 = vunpack.c.l.b16 %v914
          %v947 = vunpack.c.l.b16 %v915
          %v948 = vunpack.c.l.b16 %v916
          %v949 = vunpack.c.l.b16 %v917
          %v950 = vunpack.c.l.b16 %v918
          %v951 = vunpack.c.l.b16 %v919
          %v952 = vunpack.c.l.b16 %v920
          %v953 = vunpack.c.l.b16 %v921
          %v954 = vunpack.c.l.b16 %v922
          %v955 = vunpack.c.l.b16 %v923
          %v956 = vpack.c.b16 %v941, %v940
          %v957 = vpack.c.b16 %v943, %v942
          %v958 = vpack.c.b16 %v945, %v944
          %v959 = vpack.c.b16 %v947, %v946
          %v960 = vpack.c.b16 %v949, %v948
          %v961 = vpack.c.b16 %v951, %v950
          %v962 = vpack.c.b16 %v953, %v952
          %v963 = vpack.c.b16 %v955, %v954
          %972 = vmatprep.subr.bf16.mxu0 0
          %973 = vmatpush1.bf16.msra.mxu0 %v956
          %974 = vmatprep.subr.bf16.mxu0 0
          %975 = vmatpush1.bf16.msra.mxu0 %v957
          %976 = vmatprep.subr.bf16.mxu0 0
          %977 = vmatpush1.bf16.msra.mxu0 %v958
          %978 = vmatprep.subr.bf16.mxu0 0
          %979 = vmatpush1.bf16.msra.mxu0 %v959
          %980 = vmatprep.subr.bf16.mxu0 0
          %981 = vmatpush1.bf16.msra.mxu0 %v960
          %982 = vmatprep.subr.bf16.mxu0 0
          %983 = vmatpush1.bf16.msra.mxu0 %v961
          %984 = vmatprep.subr.bf16.mxu0 0
          %985 = vmatpush1.bf16.msra.mxu0 %v962
          %986 = vmatprep.subr.bf16.mxu0 0
          %987 = vmatpush1.bf16.msra.mxu0 %v963
          %988 = vmatprep.subr.bf16.mxu0 0
          %989 = vmatpush1.bf16.msra.mxu0 0
          %990 = vmatprep.subr.bf16.mxu0 0
          %991 = vmatpush1.bf16.msra.mxu0 0
          %992 = vmatprep.subr.bf16.mxu0 0
          %993 = vmatpush1.bf16.msra.mxu0 0
          %994 = vmatprep.subr.bf16.mxu0 0
          %995 = vmatpush1.bf16.msra.mxu0 0
          %996 = vmatprep.subr.bf16.mxu0 0
          %997 = vmatpush1.bf16.msra.mxu0 0
          %998 = vmatprep.subr.bf16.mxu0 0
          %999 = vmatpush1.bf16.msra.mxu0 0
          %1000 = vmatprep.subr.bf16.mxu0 0
          %1001 = vmatpush1.bf16.msra.mxu0 0
          %1002 = vmatprep.subr.bf16.mxu0 0
          %1003 = vmatpush1.bf16.msra.mxu0 0
          %1004 = vmatprep.mubr.bf16.mxu0 0
          %1005 = vmatmul.mubr.bf16.gmra.mrb[0].mxu0 %v739
          %v1006 = vpop.f32.mrb[0].mxu0
          %v1007 = vadd.f32 0.0, %v1006
          %v1008 = vpop.f32.mrb[0].mxu0
          %v1009 = vpop.f32.mrb[0].mxu0
          %v1010 = vadd.f32 0.0, %v1009
          %v1011 = vpop.f32.mrb[0].mxu0
          %1012 = vmatprep.mubr.bf16.mxu0 0
          %1013 = vmatmul.mubr.bf16.gmra.mrb[0].mxu0 %v740
          %v1014 = vpop.f32.mrb[0].mxu0
          %v1015 = vadd.f32 0.0, %v1014
          %v1016 = vpop.f32.mrb[0].mxu0
          %v1017 = vpop.f32.mrb[0].mxu0
          %v1018 = vadd.f32 0.0, %v1017
          %v1019 = vpop.f32.mrb[0].mxu0
          %1020 = vmatprep.mubr.bf16.mxu0 0
          %1021 = vmatmul.mubr.bf16.gmra.mrb[0].mxu0 %v741
          %v1022 = vpop.f32.mrb[0].mxu0
          %v1023 = vadd.f32 0.0, %v1022
          %v1024 = vpop.f32.mrb[0].mxu0
          %v1025 = vpop.f32.mrb[0].mxu0
          %v1026 = vadd.f32 0.0, %v1025
          %v1027 = vpop.f32.mrb[0].mxu0
          %1028 = vmatprep.mubr.bf16.mxu0 0
          %1029 = vmatmul.mubr.bf16.gmra.mrb[0].mxu0 %v742
          %v1030 = vpop.f32.mrb[0].mxu0
          %v1031 = vadd.f32 0.0, %v1030
          %v1032 = vpop.f32.mrb[0].mxu0
          %v1033 = vpop.f32.mrb[0].mxu0
          %v1034 = vadd.f32 0.0, %v1033
          %v1035 = vpop.f32.mrb[0].mxu0
          %1036 = vmatprep.mubr.bf16.mxu0 0
          %1037 = vmatmul.mubr.bf16.gmra.mrb[0].mxu0 %v743
          %v1038 = vpop.f32.mrb[0].mxu0
          %v1039 = vadd.f32 0.0, %v1038
          %v1040 = vpop.f32.mrb[0].mxu0
          %v1041 = vpop.f32.mrb[0].mxu0
          %v1042 = vadd.f32 0.0, %v1041
          %v1043 = vpop.f32.mrb[0].mxu0
          %1044 = vmatprep.mubr.bf16.mxu0 0
          %1045 = vmatmul.mubr.bf16.gmra.mrb[0].mxu0 %v744
          %v1046 = vpop.f32.mrb[0].mxu0
          %v1047 = vadd.f32 0.0, %v1046
          %v1048 = vpop.f32.mrb[0].mxu0
          %v1049 = vpop.f32.mrb[0].mxu0
          %v1050 = vadd.f32 0.0, %v1049
          %v1051 = vpop.f32.mrb[0].mxu0
          %1052 = vmatprep.mubr.bf16.mxu0 0
          %1053 = vmatmul.mubr.bf16.gmra.mrb[0].mxu0 %v745
          %v1054 = vpop.f32.mrb[0].mxu0
          %v1055 = vadd.f32 0.0, %v1054
          %v1056 = vpop.f32.mrb[0].mxu0
          %v1057 = vpop.f32.mrb[0].mxu0
          %v1058 = vadd.f32 0.0, %v1057
          %v1059 = vpop.f32.mrb[0].mxu0
          %1060 = vmatprep.mubr.bf16.mxu0 0
          %1061 = vmatmul.mubr.bf16.gmra.mrb[0].mxu0 %v746
          %v1062 = vpop.f32.mrb[0].mxu0
          %v1063 = vadd.f32 0.0, %v1062
          %v1064 = vpop.f32.mrb[0].mxu0
          %v1065 = vpop.f32.mrb[0].mxu0
          %v1066 = vadd.f32 0.0, %v1065
          %v1067 = vpop.f32.mrb[0].mxu0
          %1068 = vdwg.mxu0
          %v1069 = vpack.c.bf16 %v1010, %v1007
          %v1070 = vpack.c.bf16 %v1018, %v1015
          %v1071 = vpack.c.bf16 %v1026, %v1023
          %v1072 = vpack.c.bf16 %v1034, %v1031
          %v1073 = vpack.c.bf16 %v1042, %v1039
          %v1074 = vpack.c.bf16 %v1050, %v1047
          %v1075 = vpack.c.bf16 %v1058, %v1055
          %v1076 = vpack.c.bf16 %v1066, %v1063
          %v1077 = vld [vmem:[#allocation10] sm:$0xf]
          %v1078 = vld [vmem:[#allocation10 + $0x4] sm:$0xf]
          %v1079 = vld [vmem:[#allocation10 + $0x8] sm:$0xf]
          %v1080 = vld [vmem:[#allocation10 + $0xc] sm:$0xf]
          %v1081 = vld [vmem:[#allocation10 + $0x10] sm:$0xf]
          %v1082 = vld [vmem:[#allocation10 + $0x14] sm:$0xf]
          %v1083 = vld [vmem:[#allocation10 + $0x18] sm:$0xf]
          %v1084 = vld [vmem:[#allocation10 + $0x1c] sm:$0xf]
          %v1085 = vld [vmem:[#allocation10 + $0x20] sm:$0xf]
          %v1086 = vld [vmem:[#allocation10 + $0x24] sm:$0xf]
          %v1087 = vld [vmem:[#allocation10 + $0x28] sm:$0xf]
          %v1088 = vld [vmem:[#allocation10 + $0x2c] sm:$0xf]
          %v1089 = vld [vmem:[#allocation10 + $0x30] sm:$0xf]
          %v1090 = vld [vmem:[#allocation10 + $0x34] sm:$0xf]
          %v1091 = vld [vmem:[#allocation10 + $0x38] sm:$0xf]
          %v1092 = vld [vmem:[#allocation10 + $0x3c] sm:$0xf]
          %v1109 = vunpack.c.l.b16 %v1077
          %v1110 = vunpack.c.l.b16 %v1078
          %v1111 = vunpack.c.l.b16 %v1079
          %v1112 = vunpack.c.l.b16 %v1080
          %v1113 = vunpack.c.l.b16 %v1081
          %v1114 = vunpack.c.l.b16 %v1082
          %v1115 = vunpack.c.l.b16 %v1083
          %v1116 = vunpack.c.l.b16 %v1084
          %v1117 = vunpack.c.l.b16 %v1085
          %v1118 = vunpack.c.l.b16 %v1086
          %v1119 = vunpack.c.l.b16 %v1087
          %v1120 = vunpack.c.l.b16 %v1088
          %v1121 = vunpack.c.l.b16 %v1089
          %v1122 = vunpack.c.l.b16 %v1090
          %v1123 = vunpack.c.l.b16 %v1091
          %v1124 = vunpack.c.l.b16 %v1092
          %v1125 = vpack.c.b16 %v1110, %v1109
          %v1126 = vpack.c.b16 %v1112, %v1111
          %v1127 = vpack.c.b16 %v1114, %v1113
          %v1128 = vpack.c.b16 %v1116, %v1115
          %v1129 = vpack.c.b16 %v1118, %v1117
          %v1130 = vpack.c.b16 %v1120, %v1119
          %v1131 = vpack.c.b16 %v1122, %v1121
          %v1132 = vpack.c.b16 %v1124, %v1123
          %1141 = vmatprep.subr.bf16.mxu0 0
          %1142 = vmatpush1.bf16.msra.mxu0 %v1125
          %1143 = vmatprep.subr.bf16.mxu0 0
          %1144 = vmatpush1.bf16.msra.mxu0 %v1126
          %1145 = vmatprep.subr.bf16.mxu0 0
          %1146 = vmatpush1.bf16.msra.mxu0 %v1127
          %1147 = vmatprep.subr.bf16.mxu0 0
          %1148 = vmatpush1.bf16.msra.mxu0 %v1128
          %1149 = vmatprep.subr.bf16.mxu0 0
          %1150 = vmatpush1.bf16.msra.mxu0 %v1129
          %1151 = vmatprep.subr.bf16.mxu0 0
          %1152 = vmatpush1.bf16.msra.mxu0 %v1130
          %1153 = vmatprep.subr.bf16.mxu0 0
          %1154 = vmatpush1.bf16.msra.mxu0 %v1131
          %1155 = vmatprep.subr.bf16.mxu0 0
          %1156 = vmatpush1.bf16.msra.mxu0 %v1132
          %1157 = vmatprep.subr.bf16.mxu0 0
          %1158 = vmatpush1.bf16.msra.mxu0 0
          %1159 = vmatprep.subr.bf16.mxu0 0
          %1160 = vmatpush1.bf16.msra.mxu0 0
          %1161 = vmatprep.subr.bf16.mxu0 0
          %1162 = vmatpush1.bf16.msra.mxu0 0
          %1163 = vmatprep.subr.bf16.mxu0 0
          %1164 = vmatpush1.bf16.msra.mxu0 0
          %1165 = vmatprep.subr.bf16.mxu0 0
          %1166 = vmatpush1.bf16.msra.mxu0 0
          %1167 = vmatprep.subr.bf16.mxu0 0
          %1168 = vmatpush1.bf16.msra.mxu0 0
          %1169 = vmatprep.subr.bf16.mxu0 0
          %1170 = vmatpush1.bf16.msra.mxu0 0
          %1171 = vmatprep.subr.bf16.mxu0 0
          %1172 = vmatpush1.bf16.msra.mxu0 0
          %1173 = vmatprep.mubr.bf16.mxu0 0
          %1174 = vmatmul.mubr.bf16.gmra.mrb[0].mxu0 %v739
          %v1175 = vpop.f32.mrb[0].mxu0
          %v1176 = vadd.f32 0.0, %v1175
          %v1177 = vpop.f32.mrb[0].mxu0
          %v1178 = vpop.f32.mrb[0].mxu0
          %v1179 = vadd.f32 0.0, %v1178
          %v1180 = vpop.f32.mrb[0].mxu0
          %1181 = vmatprep.mubr.bf16.mxu0 0
          %1182 = vmatmul.mubr.bf16.gmra.mrb[0].mxu0 %v740
          %v1183 = vpop.f32.mrb[0].mxu0
          %v1184 = vadd.f32 0.0, %v1183
          %v1185 = vpop.f32.mrb[0].mxu0
          %v1186 = vpop.f32.mrb[0].mxu0
          %v1187 = vadd.f32 0.0, %v1186
          %v1188 = vpop.f32.mrb[0].mxu0
          %1189 = vmatprep.mubr.bf16.mxu0 0
          %1190 = vmatmul.mubr.bf16.gmra.mrb[0].mxu0 %v741
          %v1191 = vpop.f32.mrb[0].mxu0
          %v1192 = vadd.f32 0.0, %v1191
          %v1193 = vpop.f32.mrb[0].mxu0
          %v1194 = vpop.f32.mrb[0].mxu0
          %v1195 = vadd.f32 0.0, %v1194
          %v1196 = vpop.f32.mrb[0].mxu0
          %1197 = vmatprep.mubr.bf16.mxu0 0
          %1198 = vmatmul.mubr.bf16.gmra.mrb[0].mxu0 %v742
          %v1199 = vpop.f32.mrb[0].mxu0
          %v1200 = vadd.f32 0.0, %v1199
          %v1201 = vpop.f32.mrb[0].mxu0
          %v1202 = vpop.f32.mrb[0].mxu0
          %v1203 = vadd.f32 0.0, %v1202
          %v1204 = vpop.f32.mrb[0].mxu0
          %1205 = vmatprep.mubr.bf16.mxu0 0
          %1206 = vmatmul.mubr.bf16.gmra.mrb[0].mxu0 %v743
          %v1207 = vpop.f32.mrb[0].mxu0
          %v1208 = vadd.f32 0.0, %v1207
          %v1209 = vpop.f32.mrb[0].mxu0
          %v1210 = vpop.f32.mrb[0].mxu0
          %v1211 = vadd.f32 0.0, %v1210
          %v1212 = vpop.f32.mrb[0].mxu0
          %1213 = vmatprep.mubr.bf16.mxu0 0
          %1214 = vmatmul.mubr.bf16.gmra.mrb[0].mxu0 %v744
          %v1215 = vpop.f32.mrb[0].mxu0
          %v1216 = vadd.f32 0.0, %v1215
          %v1217 = vpop.f32.mrb[0].mxu0
          %v1218 = vpop.f32.mrb[0].mxu0
          %v1219 = vadd.f32 0.0, %v1218
          %v1220 = vpop.f32.mrb[0].mxu0
          %1221 = vmatprep.mubr.bf16.mxu0 0
          %1222 = vmatmul.mubr.bf16.gmra.mrb[0].mxu0 %v745
          %v1223 = vpop.f32.mrb[0].mxu0
          %v1224 = vadd.f32 0.0, %v1223
          %v1225 = vpop.f32.mrb[0].mxu0
          %v1226 = vpop.f32.mrb[0].mxu0
          %v1227 = vadd.f32 0.0, %v1226
          %v1228 = vpop.f32.mrb[0].mxu0
          %1229 = vmatprep.mubr.bf16.mxu0 0
          %1230 = vmatmul.mubr.bf16.gmra.mrb[0].mxu0 %v746
          %v1231 = vpop.f32.mrb[0].mxu0
          %v1232 = vadd.f32 0.0, %v1231
          %v1233 = vpop.f32.mrb[0].mxu0
          %v1234 = vpop.f32.mrb[0].mxu0
          %v1235 = vadd.f32 0.0, %v1234
          %v1236 = vpop.f32.mrb[0].mxu0
          %1237 = vdwg.mxu0
          %v1238 = vpack.c.bf16 %v1179, %v1176
          %v1239 = vpack.c.bf16 %v1187, %v1184
          %v1240 = vpack.c.bf16 %v1195, %v1192
          %v1241 = vpack.c.bf16 %v1203, %v1200
          %v1242 = vpack.c.bf16 %v1211, %v1208
          %v1243 = vpack.c.bf16 %v1219, %v1216
          %v1244 = vpack.c.bf16 %v1227, %v1224
          %v1245 = vpack.c.bf16 %v1235, %v1232
          %vm1246 = vcmask 261120
          %v1248 = vsel %vm1246, %v900, 0
          %v1251 = vsel %vm1246, %v901, 0
          %v1254 = vsel %vm1246, %v902, 0
          %v1257 = vsel %vm1246, %v903, 0
          %v1260 = vsel %vm1246, %v904, 0
          %v1263 = vsel %vm1246, %v905, 0
          %v1266 = vsel %vm1246, %v906, 0
          %v1269 = vsel %vm1246, %v907, 0
          %v1272 = vsel %vm1246, %v1069, 0
          %v1275 = vsel %vm1246, %v1070, 0
          %v1278 = vsel %vm1246, %v1071, 0
          %v1281 = vsel %vm1246, %v1072, 0
          %v1284 = vsel %vm1246, %v1073, 0
          %v1287 = vsel %vm1246, %v1074, 0
          %v1290 = vsel %vm1246, %v1075, 0
          %v1293 = vsel %vm1246, %v1076, 0
          %1295 = vmatprep.subr.bf16.mxu0 0
          %1296 = vmatpush1.bf16.xpose.msra.mxu0 %v1272
          %1297 = vmatprep.subr.bf16.mxu0 0
          %1298 = vmatpush1.bf16.xpose.msra.mxu0 %v1275
          %1299 = vmatprep.subr.bf16.mxu0 0
          %1300 = vmatpush1.bf16.xpose.msra.mxu0 %v1278
          %1301 = vmatprep.subr.bf16.mxu0 0
          %1302 = vmatpush1.bf16.xpose.msra.mxu0 %v1281
          %1303 = vmatprep.subr.bf16.mxu0 0
          %1304 = vmatpush1.bf16.xpose.msra.mxu0 %v1284
          %1305 = vmatprep.subr.bf16.mxu0 0
          %1306 = vmatpush1.bf16.xpose.msra.mxu0 %v1287
          %1307 = vmatprep.subr.bf16.mxu0 0
          %1308 = vmatpush1.bf16.xpose.msra.mxu0 %v1290
          %1309 = vmatprep.subr.bf16.mxu0 0
          %1310 = vmatpush1.bf16.xpose.msra.mxu0 %v1293
          %1311 = vmatprep.subr.bf16.mxu0 0
          %1312 = vmatpush1.bf16.xpose.msra.mxu0 0
          %1313 = vmatprep.subr.bf16.mxu0 0
          %1314 = vmatpush1.bf16.xpose.msra.mxu0 0
          %1315 = vmatprep.subr.bf16.mxu0 0
          %1316 = vmatpush1.bf16.xpose.msra.mxu0 0
          %1317 = vmatprep.subr.bf16.mxu0 0
          %1318 = vmatpush1.bf16.xpose.msra.mxu0 0
          %1319 = vmatprep.subr.bf16.mxu0 0
          %1320 = vmatpush1.bf16.xpose.msra.mxu0 0
          %1321 = vmatprep.subr.bf16.mxu0 0
          %1322 = vmatpush1.bf16.xpose.msra.mxu0 0
          %1323 = vmatprep.subr.bf16.mxu0 0
          %1324 = vmatpush1.bf16.xpose.msra.mxu0 0
          %1325 = vmatprep.subr.bf16.mxu0 0
          %1326 = vmatpush1.bf16.xpose.msra.mxu0 0
          %1327 = vmatprep.mubr.bf16.mxu0 0
          %1328 = vmatmul.mubr.bf16.gmra.mrb[0].mxu0 %v1248
          %v1329 = vpop.f32.mrb[0].mxu0
          %v1330 = vadd.f32 0.0, %v1329
          %v1331 = vpop.f32.mrb[0].mxu0
          %v1332 = vpop.f32.mrb[0].mxu0
          %v1333 = vadd.f32 0.0, %v1332
          %v1334 = vpop.f32.mrb[0].mxu0
          %1335 = vmatprep.mubr.bf16.mxu0 0
          %1336 = vmatmul.mubr.bf16.gmra.mrb[0].mxu0 %v1251
          %v1337 = vpop.f32.mrb[0].mxu0
          %v1338 = vadd.f32 0.0, %v1337
          %v1339 = vpop.f32.mrb[0].mxu0
          %v1340 = vpop.f32.mrb[0].mxu0
          %v1341 = vadd.f32 0.0, %v1340
          %v1342 = vpop.f32.mrb[0].mxu0
          %1343 = vmatprep.mubr.bf16.mxu0 0
          %1344 = vmatmul.mubr.bf16.gmra.mrb[0].mxu0 %v1254
          %v1345 = vpop.f32.mrb[0].mxu0
          %v1346 = vadd.f32 0.0, %v1345
          %v1347 = vpop.f32.mrb[0].mxu0
          %v1348 = vpop.f32.mrb[0].mxu0
          %v1349 = vadd.f32 0.0, %v1348
          %v1350 = vpop.f32.mrb[0].mxu0
          %1351 = vmatprep.mubr.bf16.mxu0 0
          %1352 = vmatmul.mubr.bf16.gmra.mrb[0].mxu0 %v1257
          %v1353 = vpop.f32.mrb[0].mxu0
          %v1354 = vadd.f32 0.0, %v1353
          %v1355 = vpop.f32.mrb[0].mxu0
          %v1356 = vpop.f32.mrb[0].mxu0
          %v1357 = vadd.f32 0.0, %v1356
          %v1358 = vpop.f32.mrb[0].mxu0
          %1359 = vmatprep.mubr.bf16.mxu0 0
          %1360 = vmatmul.mubr.bf16.gmra.mrb[0].mxu0 %v1260
          %v1361 = vpop.f32.mrb[0].mxu0
          %v1362 = vadd.f32 0.0, %v1361
          %v1363 = vpop.f32.mrb[0].mxu0
          %v1364 = vpop.f32.mrb[0].mxu0
          %v1365 = vadd.f32 0.0, %v1364
          %v1366 = vpop.f32.mrb[0].mxu0
          %1367 = vmatprep.mubr.bf16.mxu0 0
          %1368 = vmatmul.mubr.bf16.gmra.mrb[0].mxu0 %v1263
          %v1369 = vpop.f32.mrb[0].mxu0
          %v1370 = vadd.f32 0.0, %v1369
          %v1371 = vpop.f32.mrb[0].mxu0
          %v1372 = vpop.f32.mrb[0].mxu0
          %v1373 = vadd.f32 0.0, %v1372
          %v1374 = vpop.f32.mrb[0].mxu0
          %1375 = vmatprep.mubr.bf16.mxu0 0
          %1376 = vmatmul.mubr.bf16.gmra.mrb[0].mxu0 %v1266
          %v1377 = vpop.f32.mrb[0].mxu0
          %v1378 = vadd.f32 0.0, %v1377
          %v1379 = vpop.f32.mrb[0].mxu0
          %v1380 = vpop.f32.mrb[0].mxu0
          %v1381 = vadd.f32 0.0, %v1380
          %v1382 = vpop.f32.mrb[0].mxu0
          %1383 = vmatprep.mubr.bf16.mxu0 0
          %1384 = vmatmul.mubr.bf16.gmra.mrb[0].mxu0 %v1269
          %v1385 = vpop.f32.mrb[0].mxu0
          %v1386 = vadd.f32 0.0, %v1385
          %v1387 = vpop.f32.mrb[0].mxu0
          %v1388 = vpop.f32.mrb[0].mxu0
          %v1389 = vadd.f32 0.0, %v1388
          %v1390 = vpop.f32.mrb[0].mxu0
          %1391 = vdwg.mxu0
          %v1392 = vmul.f32 %v1330, 0.17677669
          %v1393 = vmul.f32 %v1333, 0.17677669
          %v1394 = vmul.f32 %v1338, 0.17677669
          %v1395 = vmul.f32 %v1341, 0.17677669
          %v1396 = vmul.f32 %v1346, 0.17677669
          %v1397 = vmul.f32 %v1349, 0.17677669
          %v1398 = vmul.f32 %v1354, 0.17677669
          %v1399 = vmul.f32 %v1357, 0.17677669
          %v1400 = vmul.f32 %v1362, 0.17677669
          %v1401 = vmul.f32 %v1365, 0.17677669
          %v1402 = vmul.f32 %v1370, 0.17677669
          %v1403 = vmul.f32 %v1373, 0.17677669
          %v1404 = vmul.f32 %v1378, 0.17677669
          %v1405 = vmul.f32 %v1381, 0.17677669
          %v1406 = vmul.f32 %v1386, 0.17677669
          %v1407 = vmul.f32 %v1389, 0.17677669
          %v1408 = vadd.f32 %v1392, %v689
          %v1409 = vadd.f32 %v1393, %v689
          %v1410 = vadd.f32 %v1394, %v689
          %v1411 = vadd.f32 %v1395, %v689
          %v1412 = vadd.f32 %v1396, %v689
          %v1413 = vadd.f32 %v1397, %v689
          %v1414 = vadd.f32 %v1398, %v689
          %v1415 = vadd.f32 %v1399, %v689
          %v1416 = vadd.f32 %v1400, %v689
          %v1417 = vadd.f32 %v1401, %v689
          %v1418 = vadd.f32 %v1402, %v689
          %v1419 = vadd.f32 %v1403, %v689
          %v1420 = vadd.f32 %v1404, %v689
          %v1421 = vadd.f32 %v1405, %v689
          %v1422 = vadd.f32 %v1406, %v689
          %v1423 = vadd.f32 %v1407, %v689
          %1424 = vmax.xlane.f32.xlu0 %v1408
          %v1425 = vpop.xlane.xlu0 %1424
          %1426 = vmax.xlane.f32.xlu0 %v1409
          %v1427 = vpop.xlane.xlu0 %1426
          %1428 = vmax.xlane.f32.xlu0 %v1410
          %v1429 = vpop.xlane.xlu0 %1428
          %1430 = vmax.xlane.f32.xlu0 %v1411
          %v1431 = vpop.xlane.xlu0 %1430
          %1432 = vmax.xlane.f32.xlu0 %v1412
          %v1433 = vpop.xlane.xlu0 %1432
          %1434 = vmax.xlane.f32.xlu0 %v1413
          %v1435 = vpop.xlane.xlu0 %1434
          %1436 = vmax.xlane.f32.xlu0 %v1414
          %v1437 = vpop.xlane.xlu0 %1436
          %1438 = vmax.xlane.f32.xlu0 %v1415
          %v1439 = vpop.xlane.xlu0 %1438
          %1440 = vmax.xlane.f32.xlu0 %v1416
          %v1441 = vpop.xlane.xlu0 %1440
          %1442 = vmax.xlane.f32.xlu0 %v1417
          %v1443 = vpop.xlane.xlu0 %1442
          %1444 = vmax.xlane.f32.xlu0 %v1418
          %v1445 = vpop.xlane.xlu0 %1444
          %1446 = vmax.xlane.f32.xlu0 %v1419
          %v1447 = vpop.xlane.xlu0 %1446
          %1448 = vmax.xlane.f32.xlu0 %v1420
          %v1449 = vpop.xlane.xlu0 %1448
          %1450 = vmax.xlane.f32.xlu0 %v1421
          %v1451 = vpop.xlane.xlu0 %1450
          %1452 = vmax.xlane.f32.xlu0 %v1422
          %v1453 = vpop.xlane.xlu0 %1452
          %1454 = vmax.xlane.f32.xlu0 %v1423
          %v1455 = vpop.xlane.xlu0 %1454
          %v1456 = vsub.f32 %v1408, %v1425
          %v1457 = vsub.f32 %v1409, %v1427
          %v1458 = vsub.f32 %v1410, %v1429
          %v1459 = vsub.f32 %v1411, %v1431
          %v1460 = vsub.f32 %v1412, %v1433
          %v1461 = vsub.f32 %v1413, %v1435
          %v1462 = vsub.f32 %v1414, %v1437
          %v1463 = vsub.f32 %v1415, %v1439
          %v1464 = vsub.f32 %v1416, %v1441
          %v1465 = vsub.f32 %v1417, %v1443
          %v1466 = vsub.f32 %v1418, %v1445
          %v1467 = vsub.f32 %v1419, %v1447
          %v1468 = vsub.f32 %v1420, %v1449
          %v1469 = vsub.f32 %v1421, %v1451
          %v1470 = vsub.f32 %v1422, %v1453
          %v1471 = vsub.f32 %v1423, %v1455
          %v1472 = vmul.f32 %v1456, 1.442695
          %v1473 = vpow.pop %v1472
          %v1474 = vmul.f32 %v1457, 1.442695
          %v1475 = vpow.pop %v1474
          %v1476 = vmul.f32 %v1458, 1.442695
          %v1477 = vpow.pop %v1476
          %v1478 = vmul.f32 %v1459, 1.442695
          %v1479 = vpow.pop %v1478
          %v1480 = vmul.f32 %v1460, 1.442695
          %v1481 = vpow.pop %v1480
          %v1482 = vmul.f32 %v1461, 1.442695
          %v1483 = vpow.pop %v1482
          %v1484 = vmul.f32 %v1462, 1.442695
          %v1485 = vpow.pop %v1484
          %v1486 = vmul.f32 %v1463, 1.442695
          %v1487 = vpow.pop %v1486
          %v1488 = vmul.f32 %v1464, 1.442695
          %v1489 = vpow.pop %v1488
          %v1490 = vmul.f32 %v1465, 1.442695
          %v1491 = vpow.pop %v1490
          %v1492 = vmul.f32 %v1466, 1.442695
          %v1493 = vpow.pop %v1492
          %v1494 = vmul.f32 %v1467, 1.442695
          %v1495 = vpow.pop %v1494
          %v1496 = vmul.f32 %v1468, 1.442695
          %v1497 = vpow.pop %v1496
          %v1498 = vmul.f32 %v1469, 1.442695
          %v1499 = vpow.pop %v1498
          %v1500 = vmul.f32 %v1470, 1.442695
          %v1501 = vpow.pop %v1500
          %v1502 = vmul.f32 %v1471, 1.442695
          %v1503 = vpow.pop %v1502
          %1504 = vadd.xlane.f32.xlu0 %v1473
          %v1505 = vpop.xlane.xlu0 %1504
          %1506 = vadd.xlane.f32.xlu0 %v1475
          %v1507 = vpop.xlane.xlu0 %1506
          %1508 = vadd.xlane.f32.xlu0 %v1477
          %v1509 = vpop.xlane.xlu0 %1508
          %1510 = vadd.xlane.f32.xlu0 %v1479
          %v1511 = vpop.xlane.xlu0 %1510
          %1512 = vadd.xlane.f32.xlu0 %v1481
          %v1513 = vpop.xlane.xlu0 %1512
          %1514 = vadd.xlane.f32.xlu0 %v1483
          %v1515 = vpop.xlane.xlu0 %1514
          %1516 = vadd.xlane.f32.xlu0 %v1485
          %v1517 = vpop.xlane.xlu0 %1516
          %1518 = vadd.xlane.f32.xlu0 %v1487
          %v1519 = vpop.xlane.xlu0 %1518
          %1520 = vadd.xlane.f32.xlu0 %v1489
          %v1521 = vpop.xlane.xlu0 %1520
          %1522 = vadd.xlane.f32.xlu0 %v1491
          %v1523 = vpop.xlane.xlu0 %1522
          %1524 = vadd.xlane.f32.xlu0 %v1493
          %v1525 = vpop.xlane.xlu0 %1524
          %1526 = vadd.xlane.f32.xlu0 %v1495
          %v1527 = vpop.xlane.xlu0 %1526
          %1528 = vadd.xlane.f32.xlu0 %v1497
          %v1529 = vpop.xlane.xlu0 %1528
          %1530 = vadd.xlane.f32.xlu0 %v1499
          %v1531 = vpop.xlane.xlu0 %1530
          %1532 = vadd.xlane.f32.xlu0 %v1501
          %v1533 = vpop.xlane.xlu0 %1532
          %1534 = vadd.xlane.f32.xlu0 %v1503
          %v1535 = vpop.xlane.xlu0 %1534
          %v1536 = vrcp.pop %v1505
          %v1537 = vrcp.pop %v1507
          %v1538 = vrcp.pop %v1509
          %v1539 = vrcp.pop %v1511
          %v1540 = vrcp.pop %v1513
          %v1541 = vrcp.pop %v1515
          %v1542 = vrcp.pop %v1517
          %v1543 = vrcp.pop %v1519
          %v1544 = vrcp.pop %v1521
          %v1545 = vrcp.pop %v1523
          %v1546 = vrcp.pop %v1525
          %v1547 = vrcp.pop %v1527
          %v1548 = vrcp.pop %v1529
          %v1549 = vrcp.pop %v1531
          %v1550 = vrcp.pop %v1533
          %v1551 = vrcp.pop %v1535
          %v1552 = vmul.f32 %v1473, %v1536
          %v1553 = vmul.f32 %v1475, %v1537
          %v1554 = vmul.f32 %v1477, %v1538
          %v1555 = vmul.f32 %v1479, %v1539
          %v1556 = vmul.f32 %v1481, %v1540
          %v1557 = vmul.f32 %v1483, %v1541
          %v1558 = vmul.f32 %v1485, %v1542
          %v1559 = vmul.f32 %v1487, %v1543
          %v1560 = vmul.f32 %v1489, %v1544
          %v1561 = vmul.f32 %v1491, %v1545
          %v1562 = vmul.f32 %v1493, %v1546
          %v1563 = vmul.f32 %v1495, %v1547
          %v1564 = vmul.f32 %v1497, %v1548
          %v1565 = vmul.f32 %v1499, %v1549
          %v1566 = vmul.f32 %v1501, %v1550
          %v1567 = vmul.f32 %v1503, %v1551
          %v1568 = vpack.c.bf16 %v1553, %v1552
          %v1569 = vpack.c.bf16 %v1555, %v1554
          %v1570 = vpack.c.bf16 %v1557, %v1556
          %v1571 = vpack.c.bf16 %v1559, %v1558
          %v1572 = vpack.c.bf16 %v1561, %v1560
          %v1573 = vpack.c.bf16 %v1563, %v1562
          %v1574 = vpack.c.bf16 %v1565, %v1564
          %v1575 = vpack.c.bf16 %v1567, %v1566
          %1576 = vmatprep.subr.bf16.mxu0 0
          %1577 = vmatpush1.bf16.msra.mxu0 %v1238
          %1578 = vmatprep.subr.bf16.mxu0 0
          %1579 = vmatpush1.bf16.msra.mxu0 %v1239
          %1580 = vmatprep.subr.bf16.mxu0 0
          %1581 = vmatpush1.bf16.msra.mxu0 %v1240
          %1582 = vmatprep.subr.bf16.mxu0 0
          %1583 = vmatpush1.bf16.msra.mxu0 %v1241
          %1584 = vmatprep.subr.bf16.mxu0 0
          %1585 = vmatpush1.bf16.msra.mxu0 %v1242
          %1586 = vmatprep.subr.bf16.mxu0 0
          %1587 = vmatpush1.bf16.msra.mxu0 %v1243
          %1588 = vmatprep.subr.bf16.mxu0 0
          %1589 = vmatpush1.bf16.msra.mxu0 %v1244
          %1590 = vmatprep.subr.bf16.mxu0 0
          %1591 = vmatpush1.bf16.msra.mxu0 %v1245
          %1592 = vmatprep.subr.bf16.mxu0 0
          %1593 = vmatpush1.bf16.msra.mxu0 0
          %1594 = vmatprep.subr.bf16.mxu0 0
          %1595 = vmatpush1.bf16.msra.mxu0 0
          %1596 = vmatprep.subr.bf16.mxu0 0
          %1597 = vmatpush1.bf16.msra.mxu0 0
          %1598 = vmatprep.subr.bf16.mxu0 0
          %1599 = vmatpush1.bf16.msra.mxu0 0
          %1600 = vmatprep.subr.bf16.mxu0 0
          %1601 = vmatpush1.bf16.msra.mxu0 0
          %1602 = vmatprep.subr.bf16.mxu0 0
          %1603 = vmatpush1.bf16.msra.mxu0 0
          %1604 = vmatprep.subr.bf16.mxu0 0
          %1605 = vmatpush1.bf16.msra.mxu0 0
          %1606 = vmatprep.subr.bf16.mxu0 0
          %1607 = vmatpush1.bf16.msra.mxu0 0
          %1608 = vmatprep.mubr.bf16.mxu0 0
          %1609 = vmatmul.mubr.bf16.gmra.mrb[0].mxu0 %v1568
          %v1610 = vpop.f32.mrb[0].mxu0
          %v1611 = vadd.f32 0.0, %v1610
          %v1612 = vpop.f32.mrb[0].mxu0
          %v1613 = vpop.f32.mrb[0].mxu0
          %v1614 = vadd.f32 0.0, %v1613
          %v1615 = vpop.f32.mrb[0].mxu0
          %1616 = vmatprep.mubr.bf16.mxu0 0
          %1617 = vmatmul.mubr.bf16.gmra.mrb[0].mxu0 %v1569
          %v1618 = vpop.f32.mrb[0].mxu0
          %v1619 = vadd.f32 0.0, %v1618
          %v1620 = vpop.f32.mrb[0].mxu0
          %v1621 = vpop.f32.mrb[0].mxu0
          %v1622 = vadd.f32 0.0, %v1621
          %v1623 = vpop.f32.mrb[0].mxu0
          %1624 = vmatprep.mubr.bf16.mxu0 0
          %1625 = vmatmul.mubr.bf16.gmra.mrb[0].mxu0 %v1570
          %v1626 = vpop.f32.mrb[0].mxu0
          %v1627 = vadd.f32 0.0, %v1626
          %v1628 = vpop.f32.mrb[0].mxu0
          %v1629 = vpop.f32.mrb[0].mxu0
          %v1630 = vadd.f32 0.0, %v1629
          %v1631 = vpop.f32.mrb[0].mxu0
          %1632 = vmatprep.mubr.bf16.mxu0 0
          %1633 = vmatmul.mubr.bf16.gmra.mrb[0].mxu0 %v1571
          %v1634 = vpop.f32.mrb[0].mxu0
          %v1635 = vadd.f32 0.0, %v1634
          %v1636 = vpop.f32.mrb[0].mxu0
          %v1637 = vpop.f32.mrb[0].mxu0
          %v1638 = vadd.f32 0.0, %v1637
          %v1639 = vpop.f32.mrb[0].mxu0
          %1640 = vmatprep.mubr.bf16.mxu0 0
          %1641 = vmatmul.mubr.bf16.gmra.mrb[0].mxu0 %v1572
          %v1642 = vpop.f32.mrb[0].mxu0
          %v1643 = vadd.f32 0.0, %v1642
          %v1644 = vpop.f32.mrb[0].mxu0
          %v1645 = vpop.f32.mrb[0].mxu0
          %v1646 = vadd.f32 0.0, %v1645
          %v1647 = vpop.f32.mrb[0].mxu0
          %1648 = vmatprep.mubr.bf16.mxu0 0
          %1649 = vmatmul.mubr.bf16.gmra.mrb[0].mxu0 %v1573
          %v1650 = vpop.f32.mrb[0].mxu0
          %v1651 = vadd.f32 0.0, %v1650
          %v1652 = vpop.f32.mrb[0].mxu0
          %v1653 = vpop.f32.mrb[0].mxu0
          %v1654 = vadd.f32 0.0, %v1653
          %v1655 = vpop.f32.mrb[0].mxu0
          %1656 = vmatprep.mubr.bf16.mxu0 0
          %1657 = vmatmul.mubr.bf16.gmra.mrb[0].mxu0 %v1574
          %v1658 = vpop.f32.mrb[0].mxu0
          %v1659 = vadd.f32 0.0, %v1658
          %v1660 = vpop.f32.mrb[0].mxu0
          %v1661 = vpop.f32.mrb[0].mxu0
          %v1662 = vadd.f32 0.0, %v1661
          %v1663 = vpop.f32.mrb[0].mxu0
          %1664 = vmatprep.mubr.bf16.mxu0 0
          %1665 = vmatmul.mubr.bf16.gmra.mrb[0].mxu0 %v1575
          %v1666 = vpop.f32.mrb[0].mxu0
          %v1667 = vadd.f32 0.0, %v1666
          %v1668 = vpop.f32.mrb[0].mxu0
          %v1669 = vpop.f32.mrb[0].mxu0
          %v1670 = vadd.f32 0.0, %v1669
          %v1671 = vpop.f32.mrb[0].mxu0
          %1672 = vdwg.mxu0
          %v1673 = vld [vmem:[#allocation12] sm:$0xf]
          %v1674 = vld [vmem:[#allocation12 + $0x4] sm:$0xf]
          %v1675 = vld [vmem:[#allocation12 + $0x8] sm:$0xf]
          %v1676 = vld [vmem:[#allocation12 + $0xc] sm:$0xf]
          %v1677 = vpack.c.bf16 %v1614, %v1611
          %v1678 = vpack.c.bf16 %v1622, %v1619
          %v1679 = vpack.c.bf16 %v1630, %v1627
          %v1680 = vpack.c.bf16 %v1638, %v1635
          %v1681 = vpack.c.bf16 %v1646, %v1643
          %v1682 = vpack.c.bf16 %v1654, %v1651
          %v1683 = vpack.c.bf16 %v1662, %v1659
          %v1684 = vpack.c.bf16 %v1670, %v1667
          %1693 = vrot.lane.b32.xlu0 %v900, 96
          %v1694 = vpop.permute.xlu0 %1693
          %1695 = vrot.lane.b32.xlu0 %v901, 96
          %v1696 = vpop.permute.xlu0 %1695
          %1697 = vrot.lane.b32.xlu0 %v902, 96
          %v1698 = vpop.permute.xlu0 %1697
          %1699 = vrot.lane.b32.xlu0 %v903, 96
          %v1700 = vpop.permute.xlu0 %1699
          %1701 = vrot.lane.b32.xlu0 %v904, 96
          %v1702 = vpop.permute.xlu0 %1701
          %1703 = vrot.lane.b32.xlu0 %v905, 96
          %v1704 = vpop.permute.xlu0 %1703
          %1705 = vrot.lane.b32.xlu0 %v906, 96
          %v1706 = vpop.permute.xlu0 %1705
          %1707 = vrot.lane.b32.xlu0 %v907, 96
          %v1708 = vpop.permute.xlu0 %1707
          %1717 = vrot.lane.b32.xlu0 %v1069, 96
          %v1718 = vpop.permute.xlu0 %1717
          %1719 = vrot.lane.b32.xlu0 %v1070, 96
          %v1720 = vpop.permute.xlu0 %1719
          %1721 = vrot.lane.b32.xlu0 %v1071, 96
          %v1722 = vpop.permute.xlu0 %1721
          %1723 = vrot.lane.b32.xlu0 %v1072, 96
          %v1724 = vpop.permute.xlu0 %1723
          %1725 = vrot.lane.b32.xlu0 %v1073, 96
          %v1726 = vpop.permute.xlu0 %1725
          %1727 = vrot.lane.b32.xlu0 %v1074, 96
          %v1728 = vpop.permute.xlu0 %1727
          %1729 = vrot.lane.b32.xlu0 %v1075, 96
          %v1730 = vpop.permute.xlu0 %1729
          %1731 = vrot.lane.b32.xlu0 %v1076, 96
          %v1732 = vpop.permute.xlu0 %1731
          %v1734 = vsel %vm1246, %v1694, 0
          %v1737 = vsel %vm1246, %v1696, 0
          %v1740 = vsel %vm1246, %v1698, 0
          %v1743 = vsel %vm1246, %v1700, 0
          %v1746 = vsel %vm1246, %v1702, 0
          %v1749 = vsel %vm1246, %v1704, 0
          %v1752 = vsel %vm1246, %v1706, 0
          %v1755 = vsel %vm1246, %v1708, 0
          %v1758 = vsel %vm1246, %v1718, 0
          %v1761 = vsel %vm1246, %v1720, 0
          %v1764 = vsel %vm1246, %v1722, 0
          %v1767 = vsel %vm1246, %v1724, 0
          %v1770 = vsel %vm1246, %v1726, 0
          %v1773 = vsel %vm1246, %v1728, 0
          %v1776 = vsel %vm1246, %v1730, 0
          %v1779 = vsel %vm1246, %v1732, 0
          %1781 = vmatprep.subr.bf16.mxu0 0
          %1782 = vmatpush1.bf16.xpose.msra.mxu0 %v1758
          %1783 = vmatprep.subr.bf16.mxu0 0
          %1784 = vmatpush1.bf16.xpose.msra.mxu0 %v1761
          %1785 = vmatprep.subr.bf16.mxu0 0
          %1786 = vmatpush1.bf16.xpose.msra.mxu0 %v1764
          %1787 = vmatprep.subr.bf16.mxu0 0
          %1788 = vmatpush1.bf16.xpose.msra.mxu0 %v1767
          %1789 = vmatprep.subr.bf16.mxu0 0
          %1790 = vmatpush1.bf16.xpose.msra.mxu0 %v1770
          %1791 = vmatprep.subr.bf16.mxu0 0
          %1792 = vmatpush1.bf16.xpose.msra.mxu0 %v1773
          %1793 = vmatprep.subr.bf16.mxu0 0
          %1794 = vmatpush1.bf16.xpose.msra.mxu0 %v1776
          %1795 = vmatprep.subr.bf16.mxu0 0
          %1796 = vmatpush1.bf16.xpose.msra.mxu0 %v1779
          %1797 = vmatprep.subr.bf16.mxu0 0
          %1798 = vmatpush1.bf16.xpose.msra.mxu0 0
          %1799 = vmatprep.subr.bf16.mxu0 0
          %1800 = vmatpush1.bf16.xpose.msra.mxu0 0
          %1801 = vmatprep.subr.bf16.mxu0 0
          %1802 = vmatpush1.bf16.xpose.msra.mxu0 0
          %1803 = vmatprep.subr.bf16.mxu0 0
          %1804 = vmatpush1.bf16.xpose.msra.mxu0 0
          %1805 = vmatprep.subr.bf16.mxu0 0
          %1806 = vmatpush1.bf16.xpose.msra.mxu0 0
          %1807 = vmatprep.subr.bf16.mxu0 0
          %1808 = vmatpush1.bf16.xpose.msra.mxu0 0
          %1809 = vmatprep.subr.bf16.mxu0 0
          %1810 = vmatpush1.bf16.xpose.msra.mxu0 0
          %1811 = vmatprep.subr.bf16.mxu0 0
          %1812 = vmatpush1.bf16.xpose.msra.mxu0 0
          %1813 = vmatprep.mubr.bf16.mxu0 0
          %1814 = vmatmul.mubr.bf16.gmra.mrb[0].mxu0 %v1734
          %v1815 = vpop.f32.mrb[0].mxu0
          %v1816 = vadd.f32 0.0, %v1815
          %v1817 = vpop.f32.mrb[0].mxu0
          %v1818 = vpop.f32.mrb[0].mxu0
          %v1819 = vadd.f32 0.0, %v1818
          %v1820 = vpop.f32.mrb[0].mxu0
          %1821 = vmatprep.mubr.bf16.mxu0 0
          %1822 = vmatmul.mubr.bf16.gmra.mrb[0].mxu0 %v1737
          %v1823 = vpop.f32.mrb[0].mxu0
          %v1824 = vadd.f32 0.0, %v1823
          %v1825 = vpop.f32.mrb[0].mxu0
          %v1826 = vpop.f32.mrb[0].mxu0
          %v1827 = vadd.f32 0.0, %v1826
          %v1828 = vpop.f32.mrb[0].mxu0
          %1829 = vmatprep.mubr.bf16.mxu0 0
          %1830 = vmatmul.mubr.bf16.gmra.mrb[0].mxu0 %v1740
          %v1831 = vpop.f32.mrb[0].mxu0
          %v1832 = vadd.f32 0.0, %v1831
          %v1833 = vpop.f32.mrb[0].mxu0
          %v1834 = vpop.f32.mrb[0].mxu0
          %v1835 = vadd.f32 0.0, %v1834
          %v1836 = vpop.f32.mrb[0].mxu0
          %1837 = vmatprep.mubr.bf16.mxu0 0
          %1838 = vmatmul.mubr.bf16.gmra.mrb[0].mxu0 %v1743
          %v1839 = vpop.f32.mrb[0].mxu0
          %v1840 = vadd.f32 0.0, %v1839
          %v1841 = vpop.f32.mrb[0].mxu0
          %v1842 = vpop.f32.mrb[0].mxu0
          %v1843 = vadd.f32 0.0, %v1842
          %v1844 = vpop.f32.mrb[0].mxu0
          %1845 = vmatprep.mubr.bf16.mxu0 0
          %1846 = vmatmul.mubr.bf16.gmra.mrb[0].mxu0 %v1746
          %v1847 = vpop.f32.mrb[0].mxu0
          %v1848 = vadd.f32 0.0, %v1847
          %v1849 = vpop.f32.mrb[0].mxu0
          %v1850 = vpop.f32.mrb[0].mxu0
          %v1851 = vadd.f32 0.0, %v1850
          %v1852 = vpop.f32.mrb[0].mxu0
          %1853 = vmatprep.mubr.bf16.mxu0 0
          %1854 = vmatmul.mubr.bf16.gmra.mrb[0].mxu0 %v1749
          %v1855 = vpop.f32.mrb[0].mxu0
          %v1856 = vadd.f32 0.0, %v1855
          %v1857 = vpop.f32.mrb[0].mxu0
          %v1858 = vpop.f32.mrb[0].mxu0
          %v1859 = vadd.f32 0.0, %v1858
          %v1860 = vpop.f32.mrb[0].mxu0
          %1861 = vmatprep.mubr.bf16.mxu0 0
          %1862 = vmatmul.mubr.bf16.gmra.mrb[0].mxu0 %v1752
          %v1863 = vpop.f32.mrb[0].mxu0
          %v1864 = vadd.f32 0.0, %v1863
          %v1865 = vpop.f32.mrb[0].mxu0
          %v1866 = vpop.f32.mrb[0].mxu0
          %v1867 = vadd.f32 0.0, %v1866
          %v1868 = vpop.f32.mrb[0].mxu0
          %1869 = vmatprep.mubr.bf16.mxu0 0
          %1870 = vmatmul.mubr.bf16.gmra.mrb[0].mxu0 %v1755
          %v1871 = vpop.f32.mrb[0].mxu0
          %v1872 = vadd.f32 0.0, %v1871
          %v1873 = vpop.f32.mrb[0].mxu0
          %v1874 = vpop.f32.mrb[0].mxu0
          %v1875 = vadd.f32 0.0, %v1874
          %v1876 = vpop.f32.mrb[0].mxu0
          %1877 = vdwg.mxu0
          %v1878 = vmul.f32 %v1816, 0.17677669
          %v1879 = vmul.f32 %v1819, 0.17677669
          %v1880 = vmul.f32 %v1824, 0.17677669
          %v1881 = vmul.f32 %v1827, 0.17677669
          %v1882 = vmul.f32 %v1832, 0.17677669
          %v1883 = vmul.f32 %v1835, 0.17677669
          %v1884 = vmul.f32 %v1840, 0.17677669
          %v1885 = vmul.f32 %v1843, 0.17677669
          %v1886 = vmul.f32 %v1848, 0.17677669
          %v1887 = vmul.f32 %v1851, 0.17677669
          %v1888 = vmul.f32 %v1856, 0.17677669
          %v1889 = vmul.f32 %v1859, 0.17677669
          %v1890 = vmul.f32 %v1864, 0.17677669
          %v1891 = vmul.f32 %v1867, 0.17677669
          %v1892 = vmul.f32 %v1872, 0.17677669
          %v1893 = vmul.f32 %v1875, 0.17677669
          %v1894 = vadd.f32 %v1878, %v689
          %v1895 = vadd.f32 %v1879, %v689
          %v1896 = vadd.f32 %v1880, %v689
          %v1897 = vadd.f32 %v1881, %v689
          %v1898 = vadd.f32 %v1882, %v689
          %v1899 = vadd.f32 %v1883, %v689
          %v1900 = vadd.f32 %v1884, %v689
          %v1901 = vadd.f32 %v1885, %v689
          %v1902 = vadd.f32 %v1886, %v689
          %v1903 = vadd.f32 %v1887, %v689
          %v1904 = vadd.f32 %v1888, %v689
          %v1905 = vadd.f32 %v1889, %v689
          %v1906 = vadd.f32 %v1890, %v689
          %v1907 = vadd.f32 %v1891, %v689
          %v1908 = vadd.f32 %v1892, %v689
          %v1909 = vadd.f32 %v1893, %v689
          %1910 = vmax.xlane.f32.xlu0 %v1894
          %v1911 = vpop.xlane.xlu0 %1910
          %1912 = vmax.xlane.f32.xlu0 %v1895
          %v1913 = vpop.xlane.xlu0 %1912
          %1914 = vmax.xlane.f32.xlu0 %v1896
          %v1915 = vpop.xlane.xlu0 %1914
          %1916 = vmax.xlane.f32.xlu0 %v1897
          %v1917 = vpop.xlane.xlu0 %1916
          %1918 = vmax.xlane.f32.xlu0 %v1898
          %v1919 = vpop.xlane.xlu0 %1918
          %1920 = vmax.xlane.f32.xlu0 %v1899
          %v1921 = vpop.xlane.xlu0 %1920
          %1922 = vmax.xlane.f32.xlu0 %v1900
          %v1923 = vpop.xlane.xlu0 %1922
          %1924 = vmax.xlane.f32.xlu0 %v1901
          %v1925 = vpop.xlane.xlu0 %1924
          %1926 = vmax.xlane.f32.xlu0 %v1902
          %v1927 = vpop.xlane.xlu0 %1926
          %1928 = vmax.xlane.f32.xlu0 %v1903
          %v1929 = vpop.xlane.xlu0 %1928
          %1930 = vmax.xlane.f32.xlu0 %v1904
          %v1931 = vpop.xlane.xlu0 %1930
          %1932 = vmax.xlane.f32.xlu0 %v1905
          %v1933 = vpop.xlane.xlu0 %1932
          %1934 = vmax.xlane.f32.xlu0 %v1906
          %v1935 = vpop.xlane.xlu0 %1934
          %1936 = vmax.xlane.f32.xlu0 %v1907
          %v1937 = vpop.xlane.xlu0 %1936
          %1938 = vmax.xlane.f32.xlu0 %v1908
          %v1939 = vpop.xlane.xlu0 %1938
          %1940 = vmax.xlane.f32.xlu0 %v1909
          %v1941 = vpop.xlane.xlu0 %1940
          %v1942 = vsub.f32 %v1894, %v1911
          %v1943 = vsub.f32 %v1895, %v1913
          %v1944 = vsub.f32 %v1896, %v1915
          %v1945 = vsub.f32 %v1897, %v1917
          %v1946 = vsub.f32 %v1898, %v1919
          %v1947 = vsub.f32 %v1899, %v1921
          %v1948 = vsub.f32 %v1900, %v1923
          %v1949 = vsub.f32 %v1901, %v1925
          %v1950 = vsub.f32 %v1902, %v1927
          %v1951 = vsub.f32 %v1903, %v1929
          %v1952 = vsub.f32 %v1904, %v1931
          %v1953 = vsub.f32 %v1905, %v1933
          %v1954 = vsub.f32 %v1906, %v1935
          %v1955 = vsub.f32 %v1907, %v1937
          %v1956 = vsub.f32 %v1908, %v1939
          %v1957 = vsub.f32 %v1909, %v1941
          %v1958 = vmul.f32 %v1942, 1.442695
          %v1959 = vpow.pop %v1958
          %v1960 = vmul.f32 %v1943, 1.442695
          %v1961 = vpow.pop %v1960
          %v1962 = vmul.f32 %v1944, 1.442695
          %v1963 = vpow.pop %v1962
          %v1964 = vmul.f32 %v1945, 1.442695
          %v1965 = vpow.pop %v1964
          %v1966 = vmul.f32 %v1946, 1.442695
          %v1967 = vpow.pop %v1966
          %v1968 = vmul.f32 %v1947, 1.442695
          %v1969 = vpow.pop %v1968
          %v1970 = vmul.f32 %v1948, 1.442695
          %v1971 = vpow.pop %v1970
          %v1972 = vmul.f32 %v1949, 1.442695
          %v1973 = vpow.pop %v1972
          %v1974 = vmul.f32 %v1950, 1.442695
          %v1975 = vpow.pop %v1974
          %v1976 = vmul.f32 %v1951, 1.442695
          %v1977 = vpow.pop %v1976
          %v1978 = vmul.f32 %v1952, 1.442695
          %v1979 = vpow.pop %v1978
          %v1980 = vmul.f32 %v1953, 1.442695
          %v1981 = vpow.pop %v1980
          %v1982 = vmul.f32 %v1954, 1.442695
          %v1983 = vpow.pop %v1982
          %v1984 = vmul.f32 %v1955, 1.442695
          %v1985 = vpow.pop %v1984
          %v1986 = vmul.f32 %v1956, 1.442695
          %v1987 = vpow.pop %v1986
          %v1988 = vmul.f32 %v1957, 1.442695
          %v1989 = vpow.pop %v1988
          %1990 = vadd.xlane.f32.xlu0 %v1959
          %v1991 = vpop.xlane.xlu0 %1990
          %1992 = vadd.xlane.f32.xlu0 %v1961
          %v1993 = vpop.xlane.xlu0 %1992
          %1994 = vadd.xlane.f32.xlu0 %v1963
          %v1995 = vpop.xlane.xlu0 %1994
          %1996 = vadd.xlane.f32.xlu0 %v1965
          %v1997 = vpop.xlane.xlu0 %1996
          %1998 = vadd.xlane.f32.xlu0 %v1967
          %v1999 = vpop.xlane.xlu0 %1998
          %2000 = vadd.xlane.f32.xlu0 %v1969
          %v2001 = vpop.xlane.xlu0 %2000
          %2002 = vadd.xlane.f32.xlu0 %v1971
          %v2003 = vpop.xlane.xlu0 %2002
          %2004 = vadd.xlane.f32.xlu0 %v1973
          %v2005 = vpop.xlane.xlu0 %2004
          %2006 = vadd.xlane.f32.xlu0 %v1975
          %v2007 = vpop.xlane.xlu0 %2006
          %2008 = vadd.xlane.f32.xlu0 %v1977
          %v2009 = vpop.xlane.xlu0 %2008
          %2010 = vadd.xlane.f32.xlu0 %v1979
          %v2011 = vpop.xlane.xlu0 %2010
          %2012 = vadd.xlane.f32.xlu0 %v1981
          %v2013 = vpop.xlane.xlu0 %2012
          %2014 = vadd.xlane.f32.xlu0 %v1983
          %v2015 = vpop.xlane.xlu0 %2014
          %2016 = vadd.xlane.f32.xlu0 %v1985
          %v2017 = vpop.xlane.xlu0 %2016
          %2018 = vadd.xlane.f32.xlu0 %v1987
          %v2019 = vpop.xlane.xlu0 %2018
          %2020 = vadd.xlane.f32.xlu0 %v1989
          %v2021 = vpop.xlane.xlu0 %2020
          %v2022 = vrcp.pop %v1991
          %v2023 = vrcp.pop %v1993
          %v2024 = vrcp.pop %v1995
          %v2025 = vrcp.pop %v1997
          %v2026 = vrcp.pop %v1999
          %v2027 = vrcp.pop %v2001
          %v2028 = vrcp.pop %v2003
          %v2029 = vrcp.pop %v2005
          %v2030 = vrcp.pop %v2007
          %v2031 = vrcp.pop %v2009
          %v2032 = vrcp.pop %v2011
          %v2033 = vrcp.pop %v2013
          %v2034 = vrcp.pop %v2015
          %v2035 = vrcp.pop %v2017
          %v2036 = vrcp.pop %v2019
          %v2037 = vrcp.pop %v2021
          %v2038 = vmul.f32 %v1959, %v2022
          %v2039 = vmul.f32 %v1961, %v2023
          %v2040 = vmul.f32 %v1963, %v2024
          %v2041 = vmul.f32 %v1965, %v2025
          %v2042 = vmul.f32 %v1967, %v2026
          %v2043 = vmul.f32 %v1969, %v2027
          %v2044 = vmul.f32 %v1971, %v2028
          %v2045 = vmul.f32 %v1973, %v2029
          %v2046 = vmul.f32 %v1975, %v2030
          %v2047 = vmul.f32 %v1977, %v2031
          %v2048 = vmul.f32 %v1979, %v2032
          %v2049 = vmul.f32 %v1981, %v2033
          %v2050 = vmul.f32 %v1983, %v2034
          %v2051 = vmul.f32 %v1985, %v2035
          %v2052 = vmul.f32 %v1987, %v2036
          %v2053 = vmul.f32 %v1989, %v2037
          %v2054 = vpack.c.bf16 %v2039, %v2038
          %v2055 = vpack.c.bf16 %v2041, %v2040
          %v2056 = vpack.c.bf16 %v2043, %v2042
          %v2057 = vpack.c.bf16 %v2045, %v2044
          %v2058 = vpack.c.bf16 %v2047, %v2046
          %v2059 = vpack.c.bf16 %v2049, %v2048
          %v2060 = vpack.c.bf16 %v2051, %v2050
          %v2061 = vpack.c.bf16 %v2053, %v2052
          %2070 = vrot.lane.b32.xlu0 %v1238, 96
          %v2071 = vpop.permute.xlu0 %2070
          %2072 = vrot.lane.b32.xlu0 %v1239, 96
          %v2073 = vpop.permute.xlu0 %2072
          %2074 = vrot.lane.b32.xlu0 %v1240, 96
          %v2075 = vpop.permute.xlu0 %2074
          %2076 = vrot.lane.b32.xlu0 %v1241, 96
          %v2077 = vpop.permute.xlu0 %2076
          %2078 = vrot.lane.b32.xlu0 %v1242, 96
          %v2079 = vpop.permute.xlu0 %2078
          %2080 = vrot.lane.b32.xlu0 %v1243, 96
          %v2081 = vpop.permute.xlu0 %2080
          %2082 = vrot.lane.b32.xlu0 %v1244, 96
          %v2083 = vpop.permute.xlu0 %2082
          %2084 = vrot.lane.b32.xlu0 %v1245, 96
          %v2085 = vpop.permute.xlu0 %2084
          %2094 = vmatprep.subr.bf16.mxu0 0
          %2095 = vmatpush1.bf16.msra.mxu0 %v2071
          %2096 = vmatprep.subr.bf16.mxu0 0
          %2097 = vmatpush1.bf16.msra.mxu0 %v2073
          %2098 = vmatprep.subr.bf16.mxu0 0
          %2099 = vmatpush1.bf16.msra.mxu0 %v2075
          %2100 = vmatprep.subr.bf16.mxu0 0
          %2101 = vmatpush1.bf16.msra.mxu0 %v2077
          %2102 = vmatprep.subr.bf16.mxu0 0
          %2103 = vmatpush1.bf16.msra.mxu0 %v2079
          %2104 = vmatprep.subr.bf16.mxu0 0
          %2105 = vmatpush1.bf16.msra.mxu0 %v2081
          %2106 = vmatprep.subr.bf16.mxu0 0
          %2107 = vmatpush1.bf16.msra.mxu0 %v2083
          %2108 = vmatprep.subr.bf16.mxu0 0
          %2109 = vmatpush1.bf16.msra.mxu0 %v2085
          %2110 = vmatprep.subr.bf16.mxu0 0
          %2111 = vmatpush1.bf16.msra.mxu0 0
          %2112 = vmatprep.subr.bf16.mxu0 0
          %2113 = vmatpush1.bf16.msra.mxu0 0
          %2114 = vmatprep.subr.bf16.mxu0 0
          %2115 = vmatpush1.bf16.msra.mxu0 0
          %2116 = vmatprep.subr.bf16.mxu0 0
          %2117 = vmatpush1.bf16.msra.mxu0 0
          %2118 = vmatprep.subr.bf16.mxu0 0
          %2119 = vmatpush1.bf16.msra.mxu0 0
          %2120 = vmatprep.subr.bf16.mxu0 0
          %2121 = vmatpush1.bf16.msra.mxu0 0
          %2122 = vmatprep.subr.bf16.mxu0 0
          %2123 = vmatpush1.bf16.msra.mxu0 0
          %2124 = vmatprep.subr.bf16.mxu0 0
          %2125 = vmatpush1.bf16.msra.mxu0 0
          %2126 = vmatprep.mubr.bf16.mxu0 0
          %2127 = vmatmul.mubr.bf16.gmra.mrb[0].mxu0 %v2054
          %v2128 = vpop.f32.mrb[0].mxu0
          %v2129 = vadd.f32 0.0, %v2128
          %v2130 = vpop.f32.mrb[0].mxu0
          %v2131 = vpop.f32.mrb[0].mxu0
          %v2132 = vadd.f32 0.0, %v2131
          %v2133 = vpop.f32.mrb[0].mxu0
          %2134 = vmatprep.mubr.bf16.mxu0 0
          %2135 = vmatmul.mubr.bf16.gmra.mrb[0].mxu0 %v2055
          %v2136 = vpop.f32.mrb[0].mxu0
          %v2137 = vadd.f32 0.0, %v2136
          %v2138 = vpop.f32.mrb[0].mxu0
          %v2139 = vpop.f32.mrb[0].mxu0
          %v2140 = vadd.f32 0.0, %v2139
          %v2141 = vpop.f32.mrb[0].mxu0
          %2142 = vmatprep.mubr.bf16.mxu0 0
          %2143 = vmatmul.mubr.bf16.gmra.mrb[0].mxu0 %v2056
          %v2144 = vpop.f32.mrb[0].mxu0
          %v2145 = vadd.f32 0.0, %v2144
          %v2146 = vpop.f32.mrb[0].mxu0
          %v2147 = vpop.f32.mrb[0].mxu0
          %v2148 = vadd.f32 0.0, %v2147
          %v2149 = vpop.f32.mrb[0].mxu0
          %2150 = vmatprep.mubr.bf16.mxu0 0
          %2151 = vmatmul.mubr.bf16.gmra.mrb[0].mxu0 %v2057
          %v2152 = vpop.f32.mrb[0].mxu0
          %v2153 = vadd.f32 0.0, %v2152
          %v2154 = vpop.f32.mrb[0].mxu0
          %v2155 = vpop.f32.mrb[0].mxu0
          %v2156 = vadd.f32 0.0, %v2155
          %v2157 = vpop.f32.mrb[0].mxu0
          %2158 = vmatprep.mubr.bf16.mxu0 0
          %2159 = vmatmul.mubr.bf16.gmra.mrb[0].mxu0 %v2058
          %v2160 = vpop.f32.mrb[0].mxu0
          %v2161 = vadd.f32 0.0, %v2160
          %v2162 = vpop.f32.mrb[0].mxu0
          %v2163 = vpop.f32.mrb[0].mxu0
          %v2164 = vadd.f32 0.0, %v2163
          %v2165 = vpop.f32.mrb[0].mxu0
          %2166 = vmatprep.mubr.bf16.mxu0 0
          %2167 = vmatmul.mubr.bf16.gmra.mrb[0].mxu0 %v2059
          %v2168 = vpop.f32.mrb[0].mxu0
          %v2169 = vadd.f32 0.0, %v2168
          %v2170 = vpop.f32.mrb[0].mxu0
          %v2171 = vpop.f32.mrb[0].mxu0
          %v2172 = vadd.f32 0.0, %v2171
          %v2173 = vpop.f32.mrb[0].mxu0
          %2174 = vmatprep.mubr.bf16.mxu0 0
          %2175 = vmatmul.mubr.bf16.gmra.mrb[0].mxu0 %v2060
          %v2176 = vpop.f32.mrb[0].mxu0
          %v2177 = vadd.f32 0.0, %v2176
          %v2178 = vpop.f32.mrb[0].mxu0
          %v2179 = vpop.f32.mrb[0].mxu0
          %v2180 = vadd.f32 0.0, %v2179
          %v2181 = vpop.f32.mrb[0].mxu0
          %2182 = vmatprep.mubr.bf16.mxu0 0
          %2183 = vmatmul.mubr.bf16.gmra.mrb[0].mxu0 %v2061
          %v2184 = vpop.f32.mrb[0].mxu0
          %v2185 = vadd.f32 0.0, %v2184
          %v2186 = vpop.f32.mrb[0].mxu0
          %v2187 = vpop.f32.mrb[0].mxu0
          %v2188 = vadd.f32 0.0, %v2187
          %v2189 = vpop.f32.mrb[0].mxu0
          %2190 = vdwg.mxu0
          %v2191 = vld [vmem:[#allocation12 + $0x10] sm:$0xf]
          %v2192 = vld [vmem:[#allocation12 + $0x14] sm:$0xf]
          %v2193 = vld [vmem:[#allocation12 + $0x18] sm:$0xf]
          %v2194 = vld [vmem:[#allocation12 + $0x1c] sm:$0xf]
          %v2195 = vpack.c.bf16 %v2132, %v2129
          %v2196 = vpack.c.bf16 %v2140, %v2137
          %v2197 = vpack.c.bf16 %v2148, %v2145
          %v2198 = vpack.c.bf16 %v2156, %v2153
          %v2199 = vpack.c.bf16 %v2164, %v2161
          %v2200 = vpack.c.bf16 %v2172, %v2169
          %v2201 = vpack.c.bf16 %v2180, %v2177
          %v2202 = vpack.c.bf16 %v2188, %v2185
          %v2207 = vunpack.c.l.b16 %v2191
          %v2208 = vunpack.c.l.b16 %v2192
          %v2209 = vunpack.c.l.b16 %v2193
          %v2210 = vunpack.c.l.b16 %v2194
          %v2211 = vpack.c.b16 %v2208, %v2207
          %v2212 = vpack.c.b16 %v2210, %v2209
          %v2216 = vsel %vm1246, %v2195, 0
          %v2219 = vsel %vm1246, %v2196, 0
          %v2222 = vsel %vm1246, %v2197, 0
          %v2225 = vsel %vm1246, %v2198, 0
          %v2228 = vsel %vm1246, %v2199, 0
          %v2231 = vsel %vm1246, %v2200, 0
          %v2234 = vsel %vm1246, %v2201, 0
          %v2237 = vsel %vm1246, %v2202, 0
          %2239 = vmatprep.subr.bf16.mxu0 0
          %2240 = vmatpush1.bf16.msra.mxu0 %v2211
          %2241 = vmatprep.subr.bf16.mxu0 0
          %2242 = vmatpush1.bf16.msra.mxu0 %v2212
          %2243 = vmatprep.subr.bf16.mxu0 0
          %2244 = vmatpush1.bf16.msra.mxu0 0
          %2245 = vmatprep.subr.bf16.mxu0 0
          %2246 = vmatpush1.bf16.msra.mxu0 0
          %2247 = vmatprep.subr.bf16.mxu0 0
          %2248 = vmatpush1.bf16.msra.mxu0 0
          %2249 = vmatprep.subr.bf16.mxu0 0
          %2250 = vmatpush1.bf16.msra.mxu0 0
          %2251 = vmatprep.subr.bf16.mxu0 0
          %2252 = vmatpush1.bf16.msra.mxu0 0
          %2253 = vmatprep.subr.bf16.mxu0 0
          %2254 = vmatpush1.bf16.msra.mxu0 0
          %2255 = vmatprep.subr.bf16.mxu0 0
          %2256 = vmatpush1.bf16.msra.mxu0 0
          %2257 = vmatprep.subr.bf16.mxu0 0
          %2258 = vmatpush1.bf16.msra.mxu0 0
          %2259 = vmatprep.subr.bf16.mxu0 0
          %2260 = vmatpush1.bf16.msra.mxu0 0
          %2261 = vmatprep.subr.bf16.mxu0 0
          %2262 = vmatpush1.bf16.msra.mxu0 0
          %2263 = vmatprep.subr.bf16.mxu0 0
          %2264 = vmatpush1.bf16.msra.mxu0 0
          %2265 = vmatprep.subr.bf16.mxu0 0
          %2266 = vmatpush1.bf16.msra.mxu0 0
          %2267 = vmatprep.subr.bf16.mxu0 0
          %2268 = vmatpush1.bf16.msra.mxu0 0
          %2269 = vmatprep.subr.bf16.mxu0 0
          %2270 = vmatpush1.bf16.msra.mxu0 0
          %2271 = vmatprep.mubr.bf16.mxu0 0
          %2272 = vmatmul.mubr.bf16.gmra.mrb[0].mxu0 %v2216
          %v2273 = vpop.f32.mrb[0].mxu0
          %v2274 = vadd.f32 0.0, %v2273
          %v2275 = vpop.f32.mrb[0].mxu0
          %v2276 = vpop.f32.mrb[0].mxu0
          %v2277 = vadd.f32 0.0, %v2276
          %v2278 = vpop.f32.mrb[0].mxu0
          %2279 = vmatprep.mubr.bf16.mxu0 0
          %2280 = vmatmul.mubr.bf16.gmra.mrb[0].mxu0 %v2219
          %v2281 = vpop.f32.mrb[0].mxu0
          %v2282 = vadd.f32 0.0, %v2281
          %v2283 = vpop.f32.mrb[0].mxu0
          %v2284 = vpop.f32.mrb[0].mxu0
          %v2285 = vadd.f32 0.0, %v2284
          %v2286 = vpop.f32.mrb[0].mxu0
          %2287 = vmatprep.mubr.bf16.mxu0 0
          %2288 = vmatmul.mubr.bf16.gmra.mrb[0].mxu0 %v2222
          %v2289 = vpop.f32.mrb[0].mxu0
          %v2290 = vadd.f32 0.0, %v2289
          %v2291 = vpop.f32.mrb[0].mxu0
          %v2292 = vpop.f32.mrb[0].mxu0
          %v2293 = vadd.f32 0.0, %v2292
          %v2294 = vpop.f32.mrb[0].mxu0
          %2295 = vmatprep.mubr.bf16.mxu0 0
          %2296 = vmatmul.mubr.bf16.gmra.mrb[0].mxu0 %v2225
          %v2297 = vpop.f32.mrb[0].mxu0
          %v2298 = vadd.f32 0.0, %v2297
          %v2299 = vpop.f32.mrb[0].mxu0
          %v2300 = vpop.f32.mrb[0].mxu0
          %v2301 = vadd.f32 0.0, %v2300
          %v2302 = vpop.f32.mrb[0].mxu0
          %2303 = vmatprep.mubr.bf16.mxu0 0
          %2304 = vmatmul.mubr.bf16.gmra.mrb[0].mxu0 %v2228
          %v2305 = vpop.f32.mrb[0].mxu0
          %v2306 = vadd.f32 0.0, %v2305
          %v2307 = vpop.f32.mrb[0].mxu0
          %v2308 = vpop.f32.mrb[0].mxu0
          %v2309 = vadd.f32 0.0, %v2308
          %v2310 = vpop.f32.mrb[0].mxu0
          %2311 = vmatprep.mubr.bf16.mxu0 0
          %2312 = vmatmul.mubr.bf16.gmra.mrb[0].mxu0 %v2231
          %v2313 = vpop.f32.mrb[0].mxu0
          %v2314 = vadd.f32 0.0, %v2313
          %v2315 = vpop.f32.mrb[0].mxu0
          %v2316 = vpop.f32.mrb[0].mxu0
          %v2317 = vadd.f32 0.0, %v2316
          %v2318 = vpop.f32.mrb[0].mxu0
          %2319 = vmatprep.mubr.bf16.mxu0 0
          %2320 = vmatmul.mubr.bf16.gmra.mrb[0].mxu0 %v2234
          %v2321 = vpop.f32.mrb[0].mxu0
          %v2322 = vadd.f32 0.0, %v2321
          %v2323 = vpop.f32.mrb[0].mxu0
          %v2324 = vpop.f32.mrb[0].mxu0
          %v2325 = vadd.f32 0.0, %v2324
          %v2326 = vpop.f32.mrb[0].mxu0
          %2327 = vmatprep.mubr.bf16.mxu0 0
          %2328 = vmatmul.mubr.bf16.gmra.mrb[0].mxu0 %v2237
          %v2329 = vpop.f32.mrb[0].mxu0
          %v2330 = vadd.f32 0.0, %v2329
          %v2331 = vpop.f32.mrb[0].mxu0
          %v2332 = vpop.f32.mrb[0].mxu0
          %v2333 = vadd.f32 0.0, %v2332
          %v2334 = vpop.f32.mrb[0].mxu0
          %2335 = vdwg.mxu0
          %v2340 = vunpack.c.l.b16 %v1673
          %v2341 = vunpack.c.l.b16 %v1674
          %v2342 = vunpack.c.l.b16 %v1675
          %v2343 = vunpack.c.l.b16 %v1676
          %v2344 = vpack.c.b16 %v2341, %v2340
          %v2345 = vpack.c.b16 %v2343, %v2342
          %v2349 = vsel %vm1246, %v1677, 0
          %v2352 = vsel %vm1246, %v1678, 0
          %v2355 = vsel %vm1246, %v1679, 0
          %v2358 = vsel %vm1246, %v1680, 0
          %v2361 = vsel %vm1246, %v1681, 0
          %v2364 = vsel %vm1246, %v1682, 0
          %v2367 = vsel %vm1246, %v1683, 0
          %v2370 = vsel %vm1246, %v1684, 0
          %2372 = vmatprep.subr.bf16.mxu0 0
          %2373 = vmatpush1.bf16.msra.mxu0 %v2344
          %2374 = vmatprep.subr.bf16.mxu0 0
          %2375 = vmatpush1.bf16.msra.mxu0 %v2345
          %2376 = vmatprep.subr.bf16.mxu0 0
          %2377 = vmatpush1.bf16.msra.mxu0 0
          %2378 = vmatprep.subr.bf16.mxu0 0
          %2379 = vmatpush1.bf16.msra.mxu0 0
          %2380 = vmatprep.subr.bf16.mxu0 0
          %2381 = vmatpush1.bf16.msra.mxu0 0
          %2382 = vmatprep.subr.bf16.mxu0 0
          %2383 = vmatpush1.bf16.msra.mxu0 0
          %2384 = vmatprep.subr.bf16.mxu0 0
          %2385 = vmatpush1.bf16.msra.mxu0 0
          %2386 = vmatprep.subr.bf16.mxu0 0
          %2387 = vmatpush1.bf16.msra.mxu0 0
          %2388 = vmatprep.subr.bf16.mxu0 0
          %2389 = vmatpush1.bf16.msra.mxu0 0
          %2390 = vmatprep.subr.bf16.mxu0 0
          %2391 = vmatpush1.bf16.msra.mxu0 0
          %2392 = vmatprep.subr.bf16.mxu0 0
          %2393 = vmatpush1.bf16.msra.mxu0 0
          %2394 = vmatprep.subr.bf16.mxu0 0
          %2395 = vmatpush1.bf16.msra.mxu0 0
          %2396 = vmatprep.subr.bf16.mxu0 0
          %2397 = vmatpush1.bf16.msra.mxu0 0
          %2398 = vmatprep.subr.bf16.mxu0 0
          %2399 = vmatpush1.bf16.msra.mxu0 0
          %2400 = vmatprep.subr.bf16.mxu0 0
          %2401 = vmatpush1.bf16.msra.mxu0 0
          %2402 = vmatprep.subr.bf16.mxu0 0
          %2403 = vmatpush1.bf16.msra.mxu0 0
          %2404 = vmatprep.mubr.bf16.mxu0 0
          %2405 = vmatmul.mubr.bf16.gmra.mrb[0].mxu0 %v2349
          %v2406 = vpop.f32.mrb[0].mxu0
          %v2407 = vadd.f32 %v2274, %v2406
          %v2408 = vpop.f32.mrb[0].mxu0
          %v2409 = vpop.f32.mrb[0].mxu0
          %v2410 = vadd.f32 %v2277, %v2409
          %v2411 = vpop.f32.mrb[0].mxu0
          %2412 = vmatprep.mubr.bf16.mxu0 0
          %2413 = vmatmul.mubr.bf16.gmra.mrb[0].mxu0 %v2352
          %v2414 = vpop.f32.mrb[0].mxu0
          %v2415 = vadd.f32 %v2282, %v2414
          %v2416 = vpop.f32.mrb[0].mxu0
          %v2417 = vpop.f32.mrb[0].mxu0
          %v2418 = vadd.f32 %v2285, %v2417
          %v2419 = vpop.f32.mrb[0].mxu0
          %2420 = vmatprep.mubr.bf16.mxu0 0
          %2421 = vmatmul.mubr.bf16.gmra.mrb[0].mxu0 %v2355
          %v2422 = vpop.f32.mrb[0].mxu0
          %v2423 = vadd.f32 %v2290, %v2422
          %v2424 = vpop.f32.mrb[0].mxu0
          %v2425 = vpop.f32.mrb[0].mxu0
          %v2426 = vadd.f32 %v2293, %v2425
          %v2427 = vpop.f32.mrb[0].mxu0
          %2428 = vmatprep.mubr.bf16.mxu0 0
          %2429 = vmatmul.mubr.bf16.gmra.mrb[0].mxu0 %v2358
          %v2430 = vpop.f32.mrb[0].mxu0
          %v2431 = vadd.f32 %v2298, %v2430
          %v2432 = vpop.f32.mrb[0].mxu0
          %v2433 = vpop.f32.mrb[0].mxu0
          %v2434 = vadd.f32 %v2301, %v2433
          %v2435 = vpop.f32.mrb[0].mxu0
          %2436 = vmatprep.mubr.bf16.mxu0 0
          %2437 = vmatmul.mubr.bf16.gmra.mrb[0].mxu0 %v2361
          %v2438 = vpop.f32.mrb[0].mxu0
          %v2439 = vadd.f32 %v2306, %v2438
          %v2440 = vpop.f32.mrb[0].mxu0
          %v2441 = vpop.f32.mrb[0].mxu0
          %v2442 = vadd.f32 %v2309, %v2441
          %v2443 = vpop.f32.mrb[0].mxu0
          %2444 = vmatprep.mubr.bf16.mxu0 0
          %2445 = vmatmul.mubr.bf16.gmra.mrb[0].mxu0 %v2364
          %v2446 = vpop.f32.mrb[0].mxu0
          %v2447 = vadd.f32 %v2314, %v2446
          %v2448 = vpop.f32.mrb[0].mxu0
          %v2449 = vpop.f32.mrb[0].mxu0
          %v2450 = vadd.f32 %v2317, %v2449
          %v2451 = vpop.f32.mrb[0].mxu0
          %2452 = vmatprep.mubr.bf16.mxu0 0
          %2453 = vmatmul.mubr.bf16.gmra.mrb[0].mxu0 %v2367
          %v2454 = vpop.f32.mrb[0].mxu0
          %v2455 = vadd.f32 %v2322, %v2454
          %v2456 = vpop.f32.mrb[0].mxu0
          %v2457 = vpop.f32.mrb[0].mxu0
          %v2458 = vadd.f32 %v2325, %v2457
          %v2459 = vpop.f32.mrb[0].mxu0
          %2460 = vmatprep.mubr.bf16.mxu0 0
          %2461 = vmatmul.mubr.bf16.gmra.mrb[0].mxu0 %v2370
          %v2462 = vpop.f32.mrb[0].mxu0
          %v2463 = vadd.f32 %v2330, %v2462
          %v2464 = vpop.f32.mrb[0].mxu0
          %v2465 = vpop.f32.mrb[0].mxu0
          %v2466 = vadd.f32 %v2333, %v2465
          %v2467 = vpop.f32.mrb[0].mxu0
          %2468 = vdwg.mxu0
          %2469 = vrot.lane.b32.xlu0 %v900, 64
          %v2470 = vpop.permute.xlu0 %2469
          %2471 = vrot.lane.b32.xlu0 %v901, 64
          %v2472 = vpop.permute.xlu0 %2471
          %2473 = vrot.lane.b32.xlu0 %v902, 64
          %v2474 = vpop.permute.xlu0 %2473
          %2475 = vrot.lane.b32.xlu0 %v903, 64
          %v2476 = vpop.permute.xlu0 %2475
          %2477 = vrot.lane.b32.xlu0 %v904, 64
          %v2478 = vpop.permute.xlu0 %2477
          %2479 = vrot.lane.b32.xlu0 %v905, 64
          %v2480 = vpop.permute.xlu0 %2479
          %2481 = vrot.lane.b32.xlu0 %v906, 64
          %v2482 = vpop.permute.xlu0 %2481
          %2483 = vrot.lane.b32.xlu0 %v907, 64
          %v2484 = vpop.permute.xlu0 %2483
          %2485 = vrot.lane.b32.xlu0 %v1069, 64
          %v2486 = vpop.permute.xlu0 %2485
          %2487 = vrot.lane.b32.xlu0 %v1070, 64
          %v2488 = vpop.permute.xlu0 %2487
          %2489 = vrot.lane.b32.xlu0 %v1071, 64
          %v2490 = vpop.permute.xlu0 %2489
          %2491 = vrot.lane.b32.xlu0 %v1072, 64
          %v2492 = vpop.permute.xlu0 %2491
          %2493 = vrot.lane.b32.xlu0 %v1073, 64
          %v2494 = vpop.permute.xlu0 %2493
          %2495 = vrot.lane.b32.xlu0 %v1074, 64
          %v2496 = vpop.permute.xlu0 %2495
          %2497 = vrot.lane.b32.xlu0 %v1075, 64
          %v2498 = vpop.permute.xlu0 %2497
          %2499 = vrot.lane.b32.xlu0 %v1076, 64
          %v2500 = vpop.permute.xlu0 %2499
          %v2502 = vsel %vm1246, %v2470, 0
          %v2505 = vsel %vm1246, %v2472, 0
          %v2508 = vsel %vm1246, %v2474, 0
          %v2511 = vsel %vm1246, %v2476, 0
          %v2514 = vsel %vm1246, %v2478, 0
          %v2517 = vsel %vm1246, %v2480, 0
          %v2520 = vsel %vm1246, %v2482, 0
          %v2523 = vsel %vm1246, %v2484, 0
          %v2526 = vsel %vm1246, %v2486, 0
          %v2529 = vsel %vm1246, %v2488, 0
          %v2532 = vsel %vm1246, %v2490, 0
          %v2535 = vsel %vm1246, %v2492, 0
          %v2538 = vsel %vm1246, %v2494, 0
          %v2541 = vsel %vm1246, %v2496, 0
          %v2544 = vsel %vm1246, %v2498, 0
          %v2547 = vsel %vm1246, %v2500, 0
          %2549 = vmatprep.subr.bf16.mxu0 0
          %2550 = vmatpush1.bf16.xpose.msra.mxu0 %v2526
          %2551 = vmatprep.subr.bf16.mxu0 0
          %2552 = vmatpush1.bf16.xpose.msra.mxu0 %v2529
          %2553 = vmatprep.subr.bf16.mxu0 0
          %2554 = vmatpush1.bf16.xpose.msra.mxu0 %v2532
          %2555 = vmatprep.subr.bf16.mxu0 0
          %2556 = vmatpush1.bf16.xpose.msra.mxu0 %v2535
          %2557 = vmatprep.subr.bf16.mxu0 0
          %2558 = vmatpush1.bf16.xpose.msra.mxu0 %v2538
          %2559 = vmatprep.subr.bf16.mxu0 0
          %2560 = vmatpush1.bf16.xpose.msra.mxu0 %v2541
          %2561 = vmatprep.subr.bf16.mxu0 0
          %2562 = vmatpush1.bf16.xpose.msra.mxu0 %v2544
          %2563 = vmatprep.subr.bf16.mxu0 0
          %2564 = vmatpush1.bf16.xpose.msra.mxu0 %v2547
          %2565 = vmatprep.subr.bf16.mxu0 0
          %2566 = vmatpush1.bf16.xpose.msra.mxu0 0
          %2567 = vmatprep.subr.bf16.mxu0 0
          %2568 = vmatpush1.bf16.xpose.msra.mxu0 0
          %2569 = vmatprep.subr.bf16.mxu0 0
          %2570 = vmatpush1.bf16.xpose.msra.mxu0 0
          %2571 = vmatprep.subr.bf16.mxu0 0
          %2572 = vmatpush1.bf16.xpose.msra.mxu0 0
          %2573 = vmatprep.subr.bf16.mxu0 0
          %2574 = vmatpush1.bf16.xpose.msra.mxu0 0
          %2575 = vmatprep.subr.bf16.mxu0 0
          %2576 = vmatpush1.bf16.xpose.msra.mxu0 0
          %2577 = vmatprep.subr.bf16.mxu0 0
          %2578 = vmatpush1.bf16.xpose.msra.mxu0 0
          %2579 = vmatprep.subr.bf16.mxu0 0
          %2580 = vmatpush1.bf16.xpose.msra.mxu0 0
          %2581 = vmatprep.mubr.bf16.mxu0 0
          %2582 = vmatmul.mubr.bf16.gmra.mrb[0].mxu0 %v2502
          %v2583 = vpop.f32.mrb[0].mxu0
          %v2584 = vadd.f32 0.0, %v2583
          %v2585 = vpop.f32.mrb[0].mxu0
          %v2586 = vpop.f32.mrb[0].mxu0
          %v2587 = vadd.f32 0.0, %v2586
          %v2588 = vpop.f32.mrb[0].mxu0
          %2589 = vmatprep.mubr.bf16.mxu0 0
          %2590 = vmatmul.mubr.bf16.gmra.mrb[0].mxu0 %v2505
          %v2591 = vpop.f32.mrb[0].mxu0
          %v2592 = vadd.f32 0.0, %v2591
          %v2593 = vpop.f32.mrb[0].mxu0
          %v2594 = vpop.f32.mrb[0].mxu0
          %v2595 = vadd.f32 0.0, %v2594
          %v2596 = vpop.f32.mrb[0].mxu0
          %2597 = vmatprep.mubr.bf16.mxu0 0
          %2598 = vmatmul.mubr.bf16.gmra.mrb[0].mxu0 %v2508
          %v2599 = vpop.f32.mrb[0].mxu0
          %v2600 = vadd.f32 0.0, %v2599
          %v2601 = vpop.f32.mrb[0].mxu0
          %v2602 = vpop.f32.mrb[0].mxu0
          %v2603 = vadd.f32 0.0, %v2602
          %v2604 = vpop.f32.mrb[0].mxu0
          %2605 = vmatprep.mubr.bf16.mxu0 0
          %2606 = vmatmul.mubr.bf16.gmra.mrb[0].mxu0 %v2511
          %v2607 = vpop.f32.mrb[0].mxu0
          %v2608 = vadd.f32 0.0, %v2607
          %v2609 = vpop.f32.mrb[0].mxu0
          %v2610 = vpop.f32.mrb[0].mxu0
          %v2611 = vadd.f32 0.0, %v2610
          %v2612 = vpop.f32.mrb[0].mxu0
          %2613 = vmatprep.mubr.bf16.mxu0 0
          %2614 = vmatmul.mubr.bf16.gmra.mrb[0].mxu0 %v2514
          %v2615 = vpop.f32.mrb[0].mxu0
          %v2616 = vadd.f32 0.0, %v2615
          %v2617 = vpop.f32.mrb[0].mxu0
          %v2618 = vpop.f32.mrb[0].mxu0
          %v2619 = vadd.f32 0.0, %v2618
          %v2620 = vpop.f32.mrb[0].mxu0
          %2621 = vmatprep.mubr.bf16.mxu0 0
          %2622 = vmatmul.mubr.bf16.gmra.mrb[0].mxu0 %v2517
          %v2623 = vpop.f32.mrb[0].mxu0
          %v2624 = vadd.f32 0.0, %v2623
          %v2625 = vpop.f32.mrb[0].mxu0
          %v2626 = vpop.f32.mrb[0].mxu0
          %v2627 = vadd.f32 0.0, %v2626
          %v2628 = vpop.f32.mrb[0].mxu0
          %2629 = vmatprep.mubr.bf16.mxu0 0
          %2630 = vmatmul.mubr.bf16.gmra.mrb[0].mxu0 %v2520
          %v2631 = vpop.f32.mrb[0].mxu0
          %v2632 = vadd.f32 0.0, %v2631
          %v2633 = vpop.f32.mrb[0].mxu0
          %v2634 = vpop.f32.mrb[0].mxu0
          %v2635 = vadd.f32 0.0, %v2634
          %v2636 = vpop.f32.mrb[0].mxu0
          %2637 = vmatprep.mubr.bf16.mxu0 0
          %2638 = vmatmul.mubr.bf16.gmra.mrb[0].mxu0 %v2523
          %v2639 = vpop.f32.mrb[0].mxu0
          %v2640 = vadd.f32 0.0, %v2639
          %v2641 = vpop.f32.mrb[0].mxu0
          %v2642 = vpop.f32.mrb[0].mxu0
          %v2643 = vadd.f32 0.0, %v2642
          %v2644 = vpop.f32.mrb[0].mxu0
          %2645 = vdwg.mxu0
          %v2646 = vmul.f32 %v2584, 0.17677669
          %v2647 = vmul.f32 %v2587, 0.17677669
          %v2648 = vmul.f32 %v2592, 0.17677669
          %v2649 = vmul.f32 %v2595, 0.17677669
          %v2650 = vmul.f32 %v2600, 0.17677669
          %v2651 = vmul.f32 %v2603, 0.17677669
          %v2652 = vmul.f32 %v2608, 0.17677669
          %v2653 = vmul.f32 %v2611, 0.17677669
          %v2654 = vmul.f32 %v2616, 0.17677669
          %v2655 = vmul.f32 %v2619, 0.17677669
          %v2656 = vmul.f32 %v2624, 0.17677669
          %v2657 = vmul.f32 %v2627, 0.17677669
          %v2658 = vmul.f32 %v2632, 0.17677669
          %v2659 = vmul.f32 %v2635, 0.17677669
          %v2660 = vmul.f32 %v2640, 0.17677669
          %v2661 = vmul.f32 %v2643, 0.17677669
          %v2662 = vadd.f32 %v2646, %v689
          %v2663 = vadd.f32 %v2647, %v689
          %v2664 = vadd.f32 %v2648, %v689
          %v2665 = vadd.f32 %v2649, %v689
          %v2666 = vadd.f32 %v2650, %v689
          %v2667 = vadd.f32 %v2651, %v689
          %v2668 = vadd.f32 %v2652, %v689
          %v2669 = vadd.f32 %v2653, %v689
          %v2670 = vadd.f32 %v2654, %v689
          %v2671 = vadd.f32 %v2655, %v689
          %v2672 = vadd.f32 %v2656, %v689
          %v2673 = vadd.f32 %v2657, %v689
          %v2674 = vadd.f32 %v2658, %v689
          %v2675 = vadd.f32 %v2659, %v689
          %v2676 = vadd.f32 %v2660, %v689
          %v2677 = vadd.f32 %v2661, %v689
          %2678 = vmax.xlane.f32.xlu0 %v2662
          %v2679 = vpop.xlane.xlu0 %2678
          %2680 = vmax.xlane.f32.xlu0 %v2663
          %v2681 = vpop.xlane.xlu0 %2680
          %2682 = vmax.xlane.f32.xlu0 %v2664
          %v2683 = vpop.xlane.xlu0 %2682
          %2684 = vmax.xlane.f32.xlu0 %v2665
          %v2685 = vpop.xlane.xlu0 %2684
          %2686 = vmax.xlane.f32.xlu0 %v2666
          %v2687 = vpop.xlane.xlu0 %2686
          %2688 = vmax.xlane.f32.xlu0 %v2667
          %v2689 = vpop.xlane.xlu0 %2688
          %2690 = vmax.xlane.f32.xlu0 %v2668
          %v2691 = vpop.xlane.xlu0 %2690
          %2692 = vmax.xlane.f32.xlu0 %v2669
          %v2693 = vpop.xlane.xlu0 %2692
          %2694 = vmax.xlane.f32.xlu0 %v2670
          %v2695 = vpop.xlane.xlu0 %2694
          %2696 = vmax.xlane.f32.xlu0 %v2671
          %v2697 = vpop.xlane.xlu0 %2696
          %2698 = vmax.xlane.f32.xlu0 %v2672
          %v2699 = vpop.xlane.xlu0 %2698
          %2700 = vmax.xlane.f32.xlu0 %v2673
          %v2701 = vpop.xlane.xlu0 %2700
          %2702 = vmax.xlane.f32.xlu0 %v2674
          %v2703 = vpop.xlane.xlu0 %2702
          %2704 = vmax.xlane.f32.xlu0 %v2675
          %v2705 = vpop.xlane.xlu0 %2704
          %2706 = vmax.xlane.f32.xlu0 %v2676
          %v2707 = vpop.xlane.xlu0 %2706
          %2708 = vmax.xlane.f32.xlu0 %v2677
          %v2709 = vpop.xlane.xlu0 %2708
          %v2710 = vsub.f32 %v2662, %v2679
          %v2711 = vsub.f32 %v2663, %v2681
          %v2712 = vsub.f32 %v2664, %v2683
          %v2713 = vsub.f32 %v2665, %v2685
          %v2714 = vsub.f32 %v2666, %v2687
          %v2715 = vsub.f32 %v2667, %v2689
          %v2716 = vsub.f32 %v2668, %v2691
          %v2717 = vsub.f32 %v2669, %v2693
          %v2718 = vsub.f32 %v2670, %v2695
          %v2719 = vsub.f32 %v2671, %v2697
          %v2720 = vsub.f32 %v2672, %v2699
          %v2721 = vsub.f32 %v2673, %v2701
          %v2722 = vsub.f32 %v2674, %v2703
          %v2723 = vsub.f32 %v2675, %v2705
          %v2724 = vsub.f32 %v2676, %v2707
          %v2725 = vsub.f32 %v2677, %v2709
          %v2726 = vmul.f32 %v2710, 1.442695
          %v2727 = vpow.pop %v2726
          %v2728 = vmul.f32 %v2711, 1.442695
          %v2729 = vpow.pop %v2728
          %v2730 = vmul.f32 %v2712, 1.442695
          %v2731 = vpow.pop %v2730
          %v2732 = vmul.f32 %v2713, 1.442695
          %v2733 = vpow.pop %v2732
          %v2734 = vmul.f32 %v2714, 1.442695
          %v2735 = vpow.pop %v2734
          %v2736 = vmul.f32 %v2715, 1.442695
          %v2737 = vpow.pop %v2736
          %v2738 = vmul.f32 %v2716, 1.442695
          %v2739 = vpow.pop %v2738
          %v2740 = vmul.f32 %v2717, 1.442695
          %v2741 = vpow.pop %v2740
          %v2742 = vmul.f32 %v2718, 1.442695
          %v2743 = vpow.pop %v2742
          %v2744 = vmul.f32 %v2719, 1.442695
          %v2745 = vpow.pop %v2744
          %v2746 = vmul.f32 %v2720, 1.442695
          %v2747 = vpow.pop %v2746
          %v2748 = vmul.f32 %v2721, 1.442695
          %v2749 = vpow.pop %v2748
          %v2750 = vmul.f32 %v2722, 1.442695
          %v2751 = vpow.pop %v2750
          %v2752 = vmul.f32 %v2723, 1.442695
          %v2753 = vpow.pop %v2752
          %v2754 = vmul.f32 %v2724, 1.442695
          %v2755 = vpow.pop %v2754
          %v2756 = vmul.f32 %v2725, 1.442695
          %v2757 = vpow.pop %v2756
          %2758 = vadd.xlane.f32.xlu0 %v2727
          %v2759 = vpop.xlane.xlu0 %2758
          %2760 = vadd.xlane.f32.xlu0 %v2729
          %v2761 = vpop.xlane.xlu0 %2760
          %2762 = vadd.xlane.f32.xlu0 %v2731
          %v2763 = vpop.xlane.xlu0 %2762
          %2764 = vadd.xlane.f32.xlu0 %v2733
          %v2765 = vpop.xlane.xlu0 %2764
          %2766 = vadd.xlane.f32.xlu0 %v2735
          %v2767 = vpop.xlane.xlu0 %2766
          %2768 = vadd.xlane.f32.xlu0 %v2737
          %v2769 = vpop.xlane.xlu0 %2768
          %2770 = vadd.xlane.f32.xlu0 %v2739
          %v2771 = vpop.xlane.xlu0 %2770
          %2772 = vadd.xlane.f32.xlu0 %v2741
          %v2773 = vpop.xlane.xlu0 %2772
          %2774 = vadd.xlane.f32.xlu0 %v2743
          %v2775 = vpop.xlane.xlu0 %2774
          %2776 = vadd.xlane.f32.xlu0 %v2745
          %v2777 = vpop.xlane.xlu0 %2776
          %2778 = vadd.xlane.f32.xlu0 %v2747
          %v2779 = vpop.xlane.xlu0 %2778
          %2780 = vadd.xlane.f32.xlu0 %v2749
          %v2781 = vpop.xlane.xlu0 %2780
          %2782 = vadd.xlane.f32.xlu0 %v2751
          %v2783 = vpop.xlane.xlu0 %2782
          %2784 = vadd.xlane.f32.xlu0 %v2753
          %v2785 = vpop.xlane.xlu0 %2784
          %2786 = vadd.xlane.f32.xlu0 %v2755
          %v2787 = vpop.xlane.xlu0 %2786
          %2788 = vadd.xlane.f32.xlu0 %v2757
          %v2789 = vpop.xlane.xlu0 %2788
          %v2790 = vrcp.pop %v2759
          %v2791 = vrcp.pop %v2761
          %v2792 = vrcp.pop %v2763
          %v2793 = vrcp.pop %v2765
          %v2794 = vrcp.pop %v2767
          %v2795 = vrcp.pop %v2769
          %v2796 = vrcp.pop %v2771
          %v2797 = vrcp.pop %v2773
          %v2798 = vrcp.pop %v2775
          %v2799 = vrcp.pop %v2777
          %v2800 = vrcp.pop %v2779
          %v2801 = vrcp.pop %v2781
          %v2802 = vrcp.pop %v2783
          %v2803 = vrcp.pop %v2785
          %v2804 = vrcp.pop %v2787
          %v2805 = vrcp.pop %v2789
          %v2806 = vmul.f32 %v2727, %v2790
          %v2807 = vmul.f32 %v2729, %v2791
          %v2808 = vmul.f32 %v2731, %v2792
          %v2809 = vmul.f32 %v2733, %v2793
          %v2810 = vmul.f32 %v2735, %v2794
          %v2811 = vmul.f32 %v2737, %v2795
          %v2812 = vmul.f32 %v2739, %v2796
          %v2813 = vmul.f32 %v2741, %v2797
          %v2814 = vmul.f32 %v2743, %v2798
          %v2815 = vmul.f32 %v2745, %v2799
          %v2816 = vmul.f32 %v2747, %v2800
          %v2817 = vmul.f32 %v2749, %v2801
          %v2818 = vmul.f32 %v2751, %v2802
          %v2819 = vmul.f32 %v2753, %v2803
          %v2820 = vmul.f32 %v2755, %v2804
          %v2821 = vmul.f32 %v2757, %v2805
          %v2822 = vpack.c.bf16 %v2807, %v2806
          %v2823 = vpack.c.bf16 %v2809, %v2808
          %v2824 = vpack.c.bf16 %v2811, %v2810
          %v2825 = vpack.c.bf16 %v2813, %v2812
          %v2826 = vpack.c.bf16 %v2815, %v2814
          %v2827 = vpack.c.bf16 %v2817, %v2816
          %v2828 = vpack.c.bf16 %v2819, %v2818
          %v2829 = vpack.c.bf16 %v2821, %v2820
          %2830 = vrot.lane.b32.xlu0 %v1238, 64
          %v2831 = vpop.permute.xlu0 %2830
          %2832 = vrot.lane.b32.xlu0 %v1239, 64
          %v2833 = vpop.permute.xlu0 %2832
          %2834 = vrot.lane.b32.xlu0 %v1240, 64
          %v2835 = vpop.permute.xlu0 %2834
          %2836 = vrot.lane.b32.xlu0 %v1241, 64
          %v2837 = vpop.permute.xlu0 %2836
          %2838 = vrot.lane.b32.xlu0 %v1242, 64
          %v2839 = vpop.permute.xlu0 %2838
          %2840 = vrot.lane.b32.xlu0 %v1243, 64
          %v2841 = vpop.permute.xlu0 %2840
          %2842 = vrot.lane.b32.xlu0 %v1244, 64
          %v2843 = vpop.permute.xlu0 %2842
          %2844 = vrot.lane.b32.xlu0 %v1245, 64
          %v2845 = vpop.permute.xlu0 %2844
          %2854 = vmatprep.subr.bf16.mxu0 0
          %2855 = vmatpush1.bf16.msra.mxu0 %v2831
          %2856 = vmatprep.subr.bf16.mxu0 0
          %2857 = vmatpush1.bf16.msra.mxu0 %v2833
          %2858 = vmatprep.subr.bf16.mxu0 0
          %2859 = vmatpush1.bf16.msra.mxu0 %v2835
          %2860 = vmatprep.subr.bf16.mxu0 0
          %2861 = vmatpush1.bf16.msra.mxu0 %v2837
          %2862 = vmatprep.subr.bf16.mxu0 0
          %2863 = vmatpush1.bf16.msra.mxu0 %v2839
          %2864 = vmatprep.subr.bf16.mxu0 0
          %2865 = vmatpush1.bf16.msra.mxu0 %v2841
          %2866 = vmatprep.subr.bf16.mxu0 0
          %2867 = vmatpush1.bf16.msra.mxu0 %v2843
          %2868 = vmatprep.subr.bf16.mxu0 0
          %2869 = vmatpush1.bf16.msra.mxu0 %v2845
          %2870 = vmatprep.subr.bf16.mxu0 0
          %2871 = vmatpush1.bf16.msra.mxu0 0
          %2872 = vmatprep.subr.bf16.mxu0 0
          %2873 = vmatpush1.bf16.msra.mxu0 0
          %2874 = vmatprep.subr.bf16.mxu0 0
          %2875 = vmatpush1.bf16.msra.mxu0 0
          %2876 = vmatprep.subr.bf16.mxu0 0
          %2877 = vmatpush1.bf16.msra.mxu0 0
          %2878 = vmatprep.subr.bf16.mxu0 0
          %2879 = vmatpush1.bf16.msra.mxu0 0
          %2880 = vmatprep.subr.bf16.mxu0 0
          %2881 = vmatpush1.bf16.msra.mxu0 0
          %2882 = vmatprep.subr.bf16.mxu0 0
          %2883 = vmatpush1.bf16.msra.mxu0 0
          %2884 = vmatprep.subr.bf16.mxu0 0
          %2885 = vmatpush1.bf16.msra.mxu0 0
          %2886 = vmatprep.mubr.bf16.mxu0 0
          %2887 = vmatmul.mubr.bf16.gmra.mrb[0].mxu0 %v2822
          %v2888 = vpop.f32.mrb[0].mxu0
          %v2889 = vadd.f32 0.0, %v2888
          %v2890 = vpop.f32.mrb[0].mxu0
          %v2891 = vpop.f32.mrb[0].mxu0
          %v2892 = vadd.f32 0.0, %v2891
          %v2893 = vpop.f32.mrb[0].mxu0
          %2894 = vmatprep.mubr.bf16.mxu0 0
          %2895 = vmatmul.mubr.bf16.gmra.mrb[0].mxu0 %v2823
          %v2896 = vpop.f32.mrb[0].mxu0
          %v2897 = vadd.f32 0.0, %v2896
          %v2898 = vpop.f32.mrb[0].mxu0
          %v2899 = vpop.f32.mrb[0].mxu0
          %v2900 = vadd.f32 0.0, %v2899
          %v2901 = vpop.f32.mrb[0].mxu0
          %2902 = vmatprep.mubr.bf16.mxu0 0
          %2903 = vmatmul.mubr.bf16.gmra.mrb[0].mxu0 %v2824
          %v2904 = vpop.f32.mrb[0].mxu0
          %v2905 = vadd.f32 0.0, %v2904
          %v2906 = vpop.f32.mrb[0].mxu0
          %v2907 = vpop.f32.mrb[0].mxu0
          %v2908 = vadd.f32 0.0, %v2907
          %v2909 = vpop.f32.mrb[0].mxu0
          %2910 = vmatprep.mubr.bf16.mxu0 0
          %2911 = vmatmul.mubr.bf16.gmra.mrb[0].mxu0 %v2825
          %v2912 = vpop.f32.mrb[0].mxu0
          %v2913 = vadd.f32 0.0, %v2912
          %v2914 = vpop.f32.mrb[0].mxu0
          %v2915 = vpop.f32.mrb[0].mxu0
          %v2916 = vadd.f32 0.0, %v2915
          %v2917 = vpop.f32.mrb[0].mxu0
          %2918 = vmatprep.mubr.bf16.mxu0 0
          %2919 = vmatmul.mubr.bf16.gmra.mrb[0].mxu0 %v2826
          %v2920 = vpop.f32.mrb[0].mxu0
          %v2921 = vadd.f32 0.0, %v2920
          %v2922 = vpop.f32.mrb[0].mxu0
          %v2923 = vpop.f32.mrb[0].mxu0
          %v2924 = vadd.f32 0.0, %v2923
          %v2925 = vpop.f32.mrb[0].mxu0
          %2926 = vmatprep.mubr.bf16.mxu0 0
          %2927 = vmatmul.mubr.bf16.gmra.mrb[0].mxu0 %v2827
          %v2928 = vpop.f32.mrb[0].mxu0
          %v2929 = vadd.f32 0.0, %v2928
          %v2930 = vpop.f32.mrb[0].mxu0
          %v2931 = vpop.f32.mrb[0].mxu0
          %v2932 = vadd.f32 0.0, %v2931
          %v2933 = vpop.f32.mrb[0].mxu0
          %2934 = vmatprep.mubr.bf16.mxu0 0
          %2935 = vmatmul.mubr.bf16.gmra.mrb[0].mxu0 %v2828
          %v2936 = vpop.f32.mrb[0].mxu0
          %v2937 = vadd.f32 0.0, %v2936
          %v2938 = vpop.f32.mrb[0].mxu0
          %v2939 = vpop.f32.mrb[0].mxu0
          %v2940 = vadd.f32 0.0, %v2939
          %v2941 = vpop.f32.mrb[0].mxu0
          %2942 = vmatprep.mubr.bf16.mxu0 0
          %2943 = vmatmul.mubr.bf16.gmra.mrb[0].mxu0 %v2829
          %v2944 = vpop.f32.mrb[0].mxu0
          %v2945 = vadd.f32 0.0, %v2944
          %v2946 = vpop.f32.mrb[0].mxu0
          %v2947 = vpop.f32.mrb[0].mxu0
          %v2948 = vadd.f32 0.0, %v2947
          %v2949 = vpop.f32.mrb[0].mxu0
          %2950 = vdwg.mxu0
          %v2951 = vld [vmem:[#allocation12 + $0x20] sm:$0xf]
          %v2952 = vld [vmem:[#allocation12 + $0x24] sm:$0xf]
          %v2953 = vld [vmem:[#allocation12 + $0x28] sm:$0xf]
          %v2954 = vld [vmem:[#allocation12 + $0x2c] sm:$0xf]
          %v2955 = vpack.c.bf16 %v2892, %v2889
          %v2956 = vpack.c.bf16 %v2900, %v2897
          %v2957 = vpack.c.bf16 %v2908, %v2905
          %v2958 = vpack.c.bf16 %v2916, %v2913
          %v2959 = vpack.c.bf16 %v2924, %v2921
          %v2960 = vpack.c.bf16 %v2932, %v2929
          %v2961 = vpack.c.bf16 %v2940, %v2937
          %v2962 = vpack.c.bf16 %v2948, %v2945
          %v2967 = vunpack.c.l.b16 %v2951
          %v2968 = vunpack.c.l.b16 %v2952
          %v2969 = vunpack.c.l.b16 %v2953
          %v2970 = vunpack.c.l.b16 %v2954
          %v2971 = vpack.c.b16 %v2968, %v2967
          %v2972 = vpack.c.b16 %v2970, %v2969
          %v2976 = vsel %vm1246, %v2955, 0
          %v2979 = vsel %vm1246, %v2956, 0
          %v2982 = vsel %vm1246, %v2957, 0
          %v2985 = vsel %vm1246, %v2958, 0
          %v2988 = vsel %vm1246, %v2959, 0
          %v2991 = vsel %vm1246, %v2960, 0
          %v2994 = vsel %vm1246, %v2961, 0
          %v2997 = vsel %vm1246, %v2962, 0
          %2999 = vmatprep.subr.bf16.mxu0 0
          %3000 = vmatpush1.bf16.msra.mxu0 %v2971
          %3001 = vmatprep.subr.bf16.mxu0 0
          %3002 = vmatpush1.bf16.msra.mxu0 %v2972
          %3003 = vmatprep.subr.bf16.mxu0 0
          %3004 = vmatpush1.bf16.msra.mxu0 0
          %3005 = vmatprep.subr.bf16.mxu0 0
          %3006 = vmatpush1.bf16.msra.mxu0 0
          %3007 = vmatprep.subr.bf16.mxu0 0
          %3008 = vmatpush1.bf16.msra.mxu0 0
          %3009 = vmatprep.subr.bf16.mxu0 0
          %3010 = vmatpush1.bf16.msra.mxu0 0
          %3011 = vmatprep.subr.bf16.mxu0 0
          %3012 = vmatpush1.bf16.msra.mxu0 0
          %3013 = vmatprep.subr.bf16.mxu0 0
          %3014 = vmatpush1.bf16.msra.mxu0 0
          %3015 = vmatprep.subr.bf16.mxu0 0
          %3016 = vmatpush1.bf16.msra.mxu0 0
          %3017 = vmatprep.subr.bf16.mxu0 0
          %3018 = vmatpush1.bf16.msra.mxu0 0
          %3019 = vmatprep.subr.bf16.mxu0 0
          %3020 = vmatpush1.bf16.msra.mxu0 0
          %3021 = vmatprep.subr.bf16.mxu0 0
          %3022 = vmatpush1.bf16.msra.mxu0 0
          %3023 = vmatprep.subr.bf16.mxu0 0
          %3024 = vmatpush1.bf16.msra.mxu0 0
          %3025 = vmatprep.subr.bf16.mxu0 0
          %3026 = vmatpush1.bf16.msra.mxu0 0
          %3027 = vmatprep.subr.bf16.mxu0 0
          %3028 = vmatpush1.bf16.msra.mxu0 0
          %3029 = vmatprep.subr.bf16.mxu0 0
          %3030 = vmatpush1.bf16.msra.mxu0 0
          %3031 = vmatprep.mubr.bf16.mxu0 0
          %3032 = vmatmul.mubr.bf16.gmra.mrb[0].mxu0 %v2976
          %v3033 = vpop.f32.mrb[0].mxu0
          %v3034 = vadd.f32 0.0, %v3033
          %v3035 = vpop.f32.mrb[0].mxu0
          %v3036 = vpop.f32.mrb[0].mxu0
          %v3037 = vadd.f32 0.0, %v3036
          %v3038 = vpop.f32.mrb[0].mxu0
          %3039 = vmatprep.mubr.bf16.mxu0 0
          %3040 = vmatmul.mubr.bf16.gmra.mrb[0].mxu0 %v2979
          %v3041 = vpop.f32.mrb[0].mxu0
          %v3042 = vadd.f32 0.0, %v3041
          %v3043 = vpop.f32.mrb[0].mxu0
          %v3044 = vpop.f32.mrb[0].mxu0
          %v3045 = vadd.f32 0.0, %v3044
          %v3046 = vpop.f32.mrb[0].mxu0
          %3047 = vmatprep.mubr.bf16.mxu0 0
          %3048 = vmatmul.mubr.bf16.gmra.mrb[0].mxu0 %v2982
          %v3049 = vpop.f32.mrb[0].mxu0
          %v3050 = vadd.f32 0.0, %v3049
          %v3051 = vpop.f32.mrb[0].mxu0
          %v3052 = vpop.f32.mrb[0].mxu0
          %v3053 = vadd.f32 0.0, %v3052
          %v3054 = vpop.f32.mrb[0].mxu0
          %3055 = vmatprep.mubr.bf16.mxu0 0
          %3056 = vmatmul.mubr.bf16.gmra.mrb[0].mxu0 %v2985
          %v3057 = vpop.f32.mrb[0].mxu0
          %v3058 = vadd.f32 0.0, %v3057
          %v3059 = vpop.f32.mrb[0].mxu0
          %v3060 = vpop.f32.mrb[0].mxu0
          %v3061 = vadd.f32 0.0, %v3060
          %v3062 = vpop.f32.mrb[0].mxu0
          %3063 = vmatprep.mubr.bf16.mxu0 0
          %3064 = vmatmul.mubr.bf16.gmra.mrb[0].mxu0 %v2988
          %v3065 = vpop.f32.mrb[0].mxu0
          %v3066 = vadd.f32 0.0, %v3065
          %v3067 = vpop.f32.mrb[0].mxu0
          %v3068 = vpop.f32.mrb[0].mxu0
          %v3069 = vadd.f32 0.0, %v3068
          %v3070 = vpop.f32.mrb[0].mxu0
          %3071 = vmatprep.mubr.bf16.mxu0 0
          %3072 = vmatmul.mubr.bf16.gmra.mrb[0].mxu0 %v2991
          %v3073 = vpop.f32.mrb[0].mxu0
          %v3074 = vadd.f32 0.0, %v3073
          %v3075 = vpop.f32.mrb[0].mxu0
          %v3076 = vpop.f32.mrb[0].mxu0
          %v3077 = vadd.f32 0.0, %v3076
          %v3078 = vpop.f32.mrb[0].mxu0
          %3079 = vmatprep.mubr.bf16.mxu0 0
          %3080 = vmatmul.mubr.bf16.gmra.mrb[0].mxu0 %v2994
          %v3081 = vpop.f32.mrb[0].mxu0
          %v3082 = vadd.f32 0.0, %v3081
          %v3083 = vpop.f32.mrb[0].mxu0
          %v3084 = vpop.f32.mrb[0].mxu0
          %v3085 = vadd.f32 0.0, %v3084
          %v3086 = vpop.f32.mrb[0].mxu0
          %3087 = vmatprep.mubr.bf16.mxu0 0
          %3088 = vmatmul.mubr.bf16.gmra.mrb[0].mxu0 %v2997
          %v3089 = vpop.f32.mrb[0].mxu0
          %v3090 = vadd.f32 0.0, %v3089
          %v3091 = vpop.f32.mrb[0].mxu0
          %v3092 = vpop.f32.mrb[0].mxu0
          %v3093 = vadd.f32 0.0, %v3092
          %v3094 = vpop.f32.mrb[0].mxu0
          %3095 = vdwg.mxu0
          %v3096 = vadd.f32 %v2407, %v3034
          %v3097 = vadd.f32 %v2410, %v3037
          %v3098 = vadd.f32 %v2415, %v3042
          %v3099 = vadd.f32 %v2418, %v3045
          %v3100 = vadd.f32 %v2423, %v3050
          %v3101 = vadd.f32 %v2426, %v3053
          %v3102 = vadd.f32 %v2431, %v3058
          %v3103 = vadd.f32 %v2434, %v3061
          %v3104 = vadd.f32 %v2439, %v3066
          %v3105 = vadd.f32 %v2442, %v3069
          %v3106 = vadd.f32 %v2447, %v3074
          %v3107 = vadd.f32 %v2450, %v3077
          %v3108 = vadd.f32 %v2455, %v3082
          %v3109 = vadd.f32 %v2458, %v3085
          %v3110 = vadd.f32 %v2463, %v3090
          %v3111 = vadd.f32 %v2466, %v3093
          %3112 = vrot.lane.b32.xlu0 %v900, 32
          %v3113 = vpop.permute.xlu0 %3112
          %3114 = vrot.lane.b32.xlu0 %v901, 32
          %v3115 = vpop.permute.xlu0 %3114
          %3116 = vrot.lane.b32.xlu0 %v902, 32
          %v3117 = vpop.permute.xlu0 %3116
          %3118 = vrot.lane.b32.xlu0 %v903, 32
          %v3119 = vpop.permute.xlu0 %3118
          %3120 = vrot.lane.b32.xlu0 %v904, 32
          %v3121 = vpop.permute.xlu0 %3120
          %3122 = vrot.lane.b32.xlu0 %v905, 32
          %v3123 = vpop.permute.xlu0 %3122
          %3124 = vrot.lane.b32.xlu0 %v906, 32
          %v3125 = vpop.permute.xlu0 %3124
          %3126 = vrot.lane.b32.xlu0 %v907, 32
          %v3127 = vpop.permute.xlu0 %3126
          %3128 = vrot.lane.b32.xlu0 %v1069, 32
          %v3129 = vpop.permute.xlu0 %3128
          %3130 = vrot.lane.b32.xlu0 %v1070, 32
          %v3131 = vpop.permute.xlu0 %3130
          %3132 = vrot.lane.b32.xlu0 %v1071, 32
          %v3133 = vpop.permute.xlu0 %3132
          %3134 = vrot.lane.b32.xlu0 %v1072, 32
          %v3135 = vpop.permute.xlu0 %3134
          %3136 = vrot.lane.b32.xlu0 %v1073, 32
          %v3137 = vpop.permute.xlu0 %3136
          %3138 = vrot.lane.b32.xlu0 %v1074, 32
          %v3139 = vpop.permute.xlu0 %3138
          %3140 = vrot.lane.b32.xlu0 %v1075, 32
          %v3141 = vpop.permute.xlu0 %3140
          %3142 = vrot.lane.b32.xlu0 %v1076, 32
          %v3143 = vpop.permute.xlu0 %3142
          %v3145 = vsel %vm1246, %v3113, 0
          %v3148 = vsel %vm1246, %v3115, 0
          %v3151 = vsel %vm1246, %v3117, 0
          %v3154 = vsel %vm1246, %v3119, 0
          %v3157 = vsel %vm1246, %v3121, 0
          %v3160 = vsel %vm1246, %v3123, 0
          %v3163 = vsel %vm1246, %v3125, 0
          %v3166 = vsel %vm1246, %v3127, 0
          %v3169 = vsel %vm1246, %v3129, 0
          %v3172 = vsel %vm1246, %v3131, 0
          %v3175 = vsel %vm1246, %v3133, 0
          %v3178 = vsel %vm1246, %v3135, 0
          %v3181 = vsel %vm1246, %v3137, 0
          %v3184 = vsel %vm1246, %v3139, 0
          %v3187 = vsel %vm1246, %v3141, 0
          %v3190 = vsel %vm1246, %v3143, 0
          %3192 = vmatprep.subr.bf16.mxu0 0
          %3193 = vmatpush1.bf16.xpose.msra.mxu0 %v3169
          %3194 = vmatprep.subr.bf16.mxu0 0
          %3195 = vmatpush1.bf16.xpose.msra.mxu0 %v3172
          %3196 = vmatprep.subr.bf16.mxu0 0
          %3197 = vmatpush1.bf16.xpose.msra.mxu0 %v3175
          %3198 = vmatprep.subr.bf16.mxu0 0
          %3199 = vmatpush1.bf16.xpose.msra.mxu0 %v3178
          %3200 = vmatprep.subr.bf16.mxu0 0
          %3201 = vmatpush1.bf16.xpose.msra.mxu0 %v3181
          %3202 = vmatprep.subr.bf16.mxu0 0
          %3203 = vmatpush1.bf16.xpose.msra.mxu0 %v3184
          %3204 = vmatprep.subr.bf16.mxu0 0
          %3205 = vmatpush1.bf16.xpose.msra.mxu0 %v3187
          %3206 = vmatprep.subr.bf16.mxu0 0
          %3207 = vmatpush1.bf16.xpose.msra.mxu0 %v3190
          %3208 = vmatprep.subr.bf16.mxu0 0
          %3209 = vmatpush1.bf16.xpose.msra.mxu0 0
          %3210 = vmatprep.subr.bf16.mxu0 0
          %3211 = vmatpush1.bf16.xpose.msra.mxu0 0
          %3212 = vmatprep.subr.bf16.mxu0 0
          %3213 = vmatpush1.bf16.xpose.msra.mxu0 0
          %3214 = vmatprep.subr.bf16.mxu0 0
          %3215 = vmatpush1.bf16.xpose.msra.mxu0 0
          %3216 = vmatprep.subr.bf16.mxu0 0
          %3217 = vmatpush1.bf16.xpose.msra.mxu0 0
          %3218 = vmatprep.subr.bf16.mxu0 0
          %3219 = vmatpush1.bf16.xpose.msra.mxu0 0
          %3220 = vmatprep.subr.bf16.mxu0 0
          %3221 = vmatpush1.bf16.xpose.msra.mxu0 0
          %3222 = vmatprep.subr.bf16.mxu0 0
          %3223 = vmatpush1.bf16.xpose.msra.mxu0 0
          %3224 = vmatprep.mubr.bf16.mxu0 0
          %3225 = vmatmul.mubr.bf16.gmra.mrb[0].mxu0 %v3145
          %v3226 = vpop.f32.mrb[0].mxu0
          %v3227 = vadd.f32 0.0, %v3226
          %v3228 = vpop.f32.mrb[0].mxu0
          %v3229 = vpop.f32.mrb[0].mxu0
          %v3230 = vadd.f32 0.0, %v3229
          %v3231 = vpop.f32.mrb[0].mxu0
          %3232 = vmatprep.mubr.bf16.mxu0 0
          %3233 = vmatmul.mubr.bf16.gmra.mrb[0].mxu0 %v3148
          %v3234 = vpop.f32.mrb[0].mxu0
          %v3235 = vadd.f32 0.0, %v3234
          %v3236 = vpop.f32.mrb[0].mxu0
          %v3237 = vpop.f32.mrb[0].mxu0
          %v3238 = vadd.f32 0.0, %v3237
          %v3239 = vpop.f32.mrb[0].mxu0
          %3240 = vmatprep.mubr.bf16.mxu0 0
          %3241 = vmatmul.mubr.bf16.gmra.mrb[0].mxu0 %v3151
          %v3242 = vpop.f32.mrb[0].mxu0
          %v3243 = vadd.f32 0.0, %v3242
          %v3244 = vpop.f32.mrb[0].mxu0
          %v3245 = vpop.f32.mrb[0].mxu0
          %v3246 = vadd.f32 0.0, %v3245
          %v3247 = vpop.f32.mrb[0].mxu0
          %3248 = vmatprep.mubr.bf16.mxu0 0
          %3249 = vmatmul.mubr.bf16.gmra.mrb[0].mxu0 %v3154
          %v3250 = vpop.f32.mrb[0].mxu0
          %v3251 = vadd.f32 0.0, %v3250
          %v3252 = vpop.f32.mrb[0].mxu0
          %v3253 = vpop.f32.mrb[0].mxu0
          %v3254 = vadd.f32 0.0, %v3253
          %v3255 = vpop.f32.mrb[0].mxu0
          %3256 = vmatprep.mubr.bf16.mxu0 0
          %3257 = vmatmul.mubr.bf16.gmra.mrb[0].mxu0 %v3157
          %v3258 = vpop.f32.mrb[0].mxu0
          %v3259 = vadd.f32 0.0, %v3258
          %v3260 = vpop.f32.mrb[0].mxu0
          %v3261 = vpop.f32.mrb[0].mxu0
          %v3262 = vadd.f32 0.0, %v3261
          %v3263 = vpop.f32.mrb[0].mxu0
          %3264 = vmatprep.mubr.bf16.mxu0 0
          %3265 = vmatmul.mubr.bf16.gmra.mrb[0].mxu0 %v3160
          %v3266 = vpop.f32.mrb[0].mxu0
          %v3267 = vadd.f32 0.0, %v3266
          %v3268 = vpop.f32.mrb[0].mxu0
          %v3269 = vpop.f32.mrb[0].mxu0
          %v3270 = vadd.f32 0.0, %v3269
          %v3271 = vpop.f32.mrb[0].mxu0
          %3272 = vmatprep.mubr.bf16.mxu0 0
          %3273 = vmatmul.mubr.bf16.gmra.mrb[0].mxu0 %v3163
          %v3274 = vpop.f32.mrb[0].mxu0
          %v3275 = vadd.f32 0.0, %v3274
          %v3276 = vpop.f32.mrb[0].mxu0
          %v3277 = vpop.f32.mrb[0].mxu0
          %v3278 = vadd.f32 0.0, %v3277
          %v3279 = vpop.f32.mrb[0].mxu0
          %3280 = vmatprep.mubr.bf16.mxu0 0
          %3281 = vmatmul.mubr.bf16.gmra.mrb[0].mxu0 %v3166
          %v3282 = vpop.f32.mrb[0].mxu0
          %v3283 = vadd.f32 0.0, %v3282
          %v3284 = vpop.f32.mrb[0].mxu0
          %v3285 = vpop.f32.mrb[0].mxu0
          %v3286 = vadd.f32 0.0, %v3285
          %v3287 = vpop.f32.mrb[0].mxu0
          %3288 = vdwg.mxu0
          %v3289 = vmul.f32 %v3227, 0.17677669
          %v3290 = vmul.f32 %v3230, 0.17677669
          %v3291 = vmul.f32 %v3235, 0.17677669
          %v3292 = vmul.f32 %v3238, 0.17677669
          %v3293 = vmul.f32 %v3243, 0.17677669
          %v3294 = vmul.f32 %v3246, 0.17677669
          %v3295 = vmul.f32 %v3251, 0.17677669
          %v3296 = vmul.f32 %v3254, 0.17677669
          %v3297 = vmul.f32 %v3259, 0.17677669
          %v3298 = vmul.f32 %v3262, 0.17677669
          %v3299 = vmul.f32 %v3267, 0.17677669
          %v3300 = vmul.f32 %v3270, 0.17677669
          %v3301 = vmul.f32 %v3275, 0.17677669
          %v3302 = vmul.f32 %v3278, 0.17677669
          %v3303 = vmul.f32 %v3283, 0.17677669
          %v3304 = vmul.f32 %v3286, 0.17677669
          %v3305 = vadd.f32 %v3289, %v689
          %v3306 = vadd.f32 %v3290, %v689
          %v3307 = vadd.f32 %v3291, %v689
          %v3308 = vadd.f32 %v3292, %v689
          %v3309 = vadd.f32 %v3293, %v689
          %v3310 = vadd.f32 %v3294, %v689
          %v3311 = vadd.f32 %v3295, %v689
          %v3312 = vadd.f32 %v3296, %v689
          %v3313 = vadd.f32 %v3297, %v689
          %v3314 = vadd.f32 %v3298, %v689
          %v3315 = vadd.f32 %v3299, %v689
          %v3316 = vadd.f32 %v3300, %v689
          %v3317 = vadd.f32 %v3301, %v689
          %v3318 = vadd.f32 %v3302, %v689
          %v3319 = vadd.f32 %v3303, %v689
          %v3320 = vadd.f32 %v3304, %v689
          %3321 = vmax.xlane.f32.xlu0 %v3305
          %v3322 = vpop.xlane.xlu0 %3321
          %3323 = vmax.xlane.f32.xlu0 %v3306
          %v3324 = vpop.xlane.xlu0 %3323
          %3325 = vmax.xlane.f32.xlu0 %v3307
          %v3326 = vpop.xlane.xlu0 %3325
          %3327 = vmax.xlane.f32.xlu0 %v3308
          %v3328 = vpop.xlane.xlu0 %3327
          %3329 = vmax.xlane.f32.xlu0 %v3309
          %v3330 = vpop.xlane.xlu0 %3329
          %3331 = vmax.xlane.f32.xlu0 %v3310
          %v3332 = vpop.xlane.xlu0 %3331
          %3333 = vmax.xlane.f32.xlu0 %v3311
          %v3334 = vpop.xlane.xlu0 %3333
          %3335 = vmax.xlane.f32.xlu0 %v3312
          %v3336 = vpop.xlane.xlu0 %3335
          %3337 = vmax.xlane.f32.xlu0 %v3313
          %v3338 = vpop.xlane.xlu0 %3337
          %3339 = vmax.xlane.f32.xlu0 %v3314
          %v3340 = vpop.xlane.xlu0 %3339
          %3341 = vmax.xlane.f32.xlu0 %v3315
          %v3342 = vpop.xlane.xlu0 %3341
          %3343 = vmax.xlane.f32.xlu0 %v3316
          %v3344 = vpop.xlane.xlu0 %3343
          %3345 = vmax.xlane.f32.xlu0 %v3317
          %v3346 = vpop.xlane.xlu0 %3345
          %3347 = vmax.xlane.f32.xlu0 %v3318
          %v3348 = vpop.xlane.xlu0 %3347
          %3349 = vmax.xlane.f32.xlu0 %v3319
          %v3350 = vpop.xlane.xlu0 %3349
          %3351 = vmax.xlane.f32.xlu0 %v3320
          %v3352 = vpop.xlane.xlu0 %3351
          %v3353 = vsub.f32 %v3305, %v3322
          %v3354 = vsub.f32 %v3306, %v3324
          %v3355 = vsub.f32 %v3307, %v3326
          %v3356 = vsub.f32 %v3308, %v3328
          %v3357 = vsub.f32 %v3309, %v3330
          %v3358 = vsub.f32 %v3310, %v3332
          %v3359 = vsub.f32 %v3311, %v3334
          %v3360 = vsub.f32 %v3312, %v3336
          %v3361 = vsub.f32 %v3313, %v3338
          %v3362 = vsub.f32 %v3314, %v3340
          %v3363 = vsub.f32 %v3315, %v3342
          %v3364 = vsub.f32 %v3316, %v3344
          %v3365 = vsub.f32 %v3317, %v3346
          %v3366 = vsub.f32 %v3318, %v3348
          %v3367 = vsub.f32 %v3319, %v3350
          %v3368 = vsub.f32 %v3320, %v3352
          %v3369 = vmul.f32 %v3353, 1.442695
          %v3370 = vpow.pop %v3369
          %v3371 = vmul.f32 %v3354, 1.442695
          %v3372 = vpow.pop %v3371
          %v3373 = vmul.f32 %v3355, 1.442695
          %v3374 = vpow.pop %v3373
          %v3375 = vmul.f32 %v3356, 1.442695
          %v3376 = vpow.pop %v3375
          %v3377 = vmul.f32 %v3357, 1.442695
          %v3378 = vpow.pop %v3377
          %v3379 = vmul.f32 %v3358, 1.442695
          %v3380 = vpow.pop %v3379
          %v3381 = vmul.f32 %v3359, 1.442695
          %v3382 = vpow.pop %v3381
          %v3383 = vmul.f32 %v3360, 1.442695
          %v3384 = vpow.pop %v3383
          %v3385 = vmul.f32 %v3361, 1.442695
          %v3386 = vpow.pop %v3385
          %v3387 = vmul.f32 %v3362, 1.442695
          %v3388 = vpow.pop %v3387
          %v3389 = vmul.f32 %v3363, 1.442695
          %v3390 = vpow.pop %v3389
          %v3391 = vmul.f32 %v3364, 1.442695
          %v3392 = vpow.pop %v3391
          %v3393 = vmul.f32 %v3365, 1.442695
          %v3394 = vpow.pop %v3393
          %v3395 = vmul.f32 %v3366, 1.442695
          %v3396 = vpow.pop %v3395
          %v3397 = vmul.f32 %v3367, 1.442695
          %v3398 = vpow.pop %v3397
          %v3399 = vmul.f32 %v3368, 1.442695
          %v3400 = vpow.pop %v3399
          %3401 = vadd.xlane.f32.xlu0 %v3370
          %v3402 = vpop.xlane.xlu0 %3401
          %3403 = vadd.xlane.f32.xlu0 %v3372
          %v3404 = vpop.xlane.xlu0 %3403
          %3405 = vadd.xlane.f32.xlu0 %v3374
          %v3406 = vpop.xlane.xlu0 %3405
          %3407 = vadd.xlane.f32.xlu0 %v3376
          %v3408 = vpop.xlane.xlu0 %3407
          %3409 = vadd.xlane.f32.xlu0 %v3378
          %v3410 = vpop.xlane.xlu0 %3409
          %3411 = vadd.xlane.f32.xlu0 %v3380
          %v3412 = vpop.xlane.xlu0 %3411
          %3413 = vadd.xlane.f32.xlu0 %v3382
          %v3414 = vpop.xlane.xlu0 %3413
          %3415 = vadd.xlane.f32.xlu0 %v3384
          %v3416 = vpop.xlane.xlu0 %3415
          %3417 = vadd.xlane.f32.xlu0 %v3386
          %v3418 = vpop.xlane.xlu0 %3417
          %3419 = vadd.xlane.f32.xlu0 %v3388
          %v3420 = vpop.xlane.xlu0 %3419
          %3421 = vadd.xlane.f32.xlu0 %v3390
          %v3422 = vpop.xlane.xlu0 %3421
          %3423 = vadd.xlane.f32.xlu0 %v3392
          %v3424 = vpop.xlane.xlu0 %3423
          %3425 = vadd.xlane.f32.xlu0 %v3394
          %v3426 = vpop.xlane.xlu0 %3425
          %3427 = vadd.xlane.f32.xlu0 %v3396
          %v3428 = vpop.xlane.xlu0 %3427
          %3429 = vadd.xlane.f32.xlu0 %v3398
          %v3430 = vpop.xlane.xlu0 %3429
          %3431 = vadd.xlane.f32.xlu0 %v3400
          %v3432 = vpop.xlane.xlu0 %3431
          %v3433 = vrcp.pop %v3402
          %v3434 = vrcp.pop %v3404
          %v3435 = vrcp.pop %v3406
          %v3436 = vrcp.pop %v3408
          %v3437 = vrcp.pop %v3410
          %v3438 = vrcp.pop %v3412
          %v3439 = vrcp.pop %v3414
          %v3440 = vrcp.pop %v3416
          %v3441 = vrcp.pop %v3418
          %v3442 = vrcp.pop %v3420
          %v3443 = vrcp.pop %v3422
          %v3444 = vrcp.pop %v3424
          %v3445 = vrcp.pop %v3426
          %v3446 = vrcp.pop %v3428
          %v3447 = vrcp.pop %v3430
          %v3448 = vrcp.pop %v3432
          %v3449 = vmul.f32 %v3370, %v3433
          %v3450 = vmul.f32 %v3372, %v3434
          %v3451 = vmul.f32 %v3374, %v3435
          %v3452 = vmul.f32 %v3376, %v3436
          %v3453 = vmul.f32 %v3378, %v3437
          %v3454 = vmul.f32 %v3380, %v3438
          %v3455 = vmul.f32 %v3382, %v3439
          %v3456 = vmul.f32 %v3384, %v3440
          %v3457 = vmul.f32 %v3386, %v3441
          %v3458 = vmul.f32 %v3388, %v3442
          %v3459 = vmul.f32 %v3390, %v3443
          %v3460 = vmul.f32 %v3392, %v3444
          %v3461 = vmul.f32 %v3394, %v3445
          %v3462 = vmul.f32 %v3396, %v3446
          %v3463 = vmul.f32 %v3398, %v3447
          %v3464 = vmul.f32 %v3400, %v3448
          %v3465 = vpack.c.bf16 %v3450, %v3449
          %v3466 = vpack.c.bf16 %v3452, %v3451
          %v3467 = vpack.c.bf16 %v3454, %v3453
          %v3468 = vpack.c.bf16 %v3456, %v3455
          %v3469 = vpack.c.bf16 %v3458, %v3457
          %v3470 = vpack.c.bf16 %v3460, %v3459
          %v3471 = vpack.c.bf16 %v3462, %v3461
          %v3472 = vpack.c.bf16 %v3464, %v3463
          %3473 = vrot.lane.b32.xlu0 %v1238, 32
          %v3474 = vpop.permute.xlu0 %3473
          %3475 = vrot.lane.b32.xlu0 %v1239, 32
          %v3476 = vpop.permute.xlu0 %3475
          %3477 = vrot.lane.b32.xlu0 %v1240, 32
          %v3478 = vpop.permute.xlu0 %3477
          %3479 = vrot.lane.b32.xlu0 %v1241, 32
          %v3480 = vpop.permute.xlu0 %3479
          %3481 = vrot.lane.b32.xlu0 %v1242, 32
          %v3482 = vpop.permute.xlu0 %3481
          %3483 = vrot.lane.b32.xlu0 %v1243, 32
          %v3484 = vpop.permute.xlu0 %3483
          %3485 = vrot.lane.b32.xlu0 %v1244, 32
          %v3486 = vpop.permute.xlu0 %3485
          %3487 = vrot.lane.b32.xlu0 %v1245, 32
          %v3488 = vpop.permute.xlu0 %3487
          %3497 = vmatprep.subr.bf16.mxu0 0
          %3498 = vmatpush1.bf16.msra.mxu0 %v3474
          %3499 = vmatprep.subr.bf16.mxu0 0
          %3500 = vmatpush1.bf16.msra.mxu0 %v3476
          %3501 = vmatprep.subr.bf16.mxu0 0
          %3502 = vmatpush1.bf16.msra.mxu0 %v3478
          %3503 = vmatprep.subr.bf16.mxu0 0
          %3504 = vmatpush1.bf16.msra.mxu0 %v3480
          %3505 = vmatprep.subr.bf16.mxu0 0
          %3506 = vmatpush1.bf16.msra.mxu0 %v3482
          %3507 = vmatprep.subr.bf16.mxu0 0
          %3508 = vmatpush1.bf16.msra.mxu0 %v3484
          %3509 = vmatprep.subr.bf16.mxu0 0
          %3510 = vmatpush1.bf16.msra.mxu0 %v3486
          %3511 = vmatprep.subr.bf16.mxu0 0
          %3512 = vmatpush1.bf16.msra.mxu0 %v3488
          %3513 = vmatprep.subr.bf16.mxu0 0
          %3514 = vmatpush1.bf16.msra.mxu0 0
          %3515 = vmatprep.subr.bf16.mxu0 0
          %3516 = vmatpush1.bf16.msra.mxu0 0
          %3517 = vmatprep.subr.bf16.mxu0 0
          %3518 = vmatpush1.bf16.msra.mxu0 0
          %3519 = vmatprep.subr.bf16.mxu0 0
          %3520 = vmatpush1.bf16.msra.mxu0 0
          %3521 = vmatprep.subr.bf16.mxu0 0
          %3522 = vmatpush1.bf16.msra.mxu0 0
          %3523 = vmatprep.subr.bf16.mxu0 0
          %3524 = vmatpush1.bf16.msra.mxu0 0
          %3525 = vmatprep.subr.bf16.mxu0 0
          %3526 = vmatpush1.bf16.msra.mxu0 0
          %3527 = vmatprep.subr.bf16.mxu0 0
          %3528 = vmatpush1.bf16.msra.mxu0 0
          %3529 = vmatprep.mubr.bf16.mxu0 0
          %3530 = vmatmul.mubr.bf16.gmra.mrb[0].mxu0 %v3465
          %v3531 = vpop.f32.mrb[0].mxu0
          %v3532 = vadd.f32 0.0, %v3531
          %v3533 = vpop.f32.mrb[0].mxu0
          %v3534 = vpop.f32.mrb[0].mxu0
          %v3535 = vadd.f32 0.0, %v3534
          %v3536 = vpop.f32.mrb[0].mxu0
          %3537 = vmatprep.mubr.bf16.mxu0 0
          %3538 = vmatmul.mubr.bf16.gmra.mrb[0].mxu0 %v3466
          %v3539 = vpop.f32.mrb[0].mxu0
          %v3540 = vadd.f32 0.0, %v3539
          %v3541 = vpop.f32.mrb[0].mxu0
          %v3542 = vpop.f32.mrb[0].mxu0
          %v3543 = vadd.f32 0.0, %v3542
          %v3544 = vpop.f32.mrb[0].mxu0
          %3545 = vmatprep.mubr.bf16.mxu0 0
          %3546 = vmatmul.mubr.bf16.gmra.mrb[0].mxu0 %v3467
          %v3547 = vpop.f32.mrb[0].mxu0
          %v3548 = vadd.f32 0.0, %v3547
          %v3549 = vpop.f32.mrb[0].mxu0
          %v3550 = vpop.f32.mrb[0].mxu0
          %v3551 = vadd.f32 0.0, %v3550
          %v3552 = vpop.f32.mrb[0].mxu0
          %3553 = vmatprep.mubr.bf16.mxu0 0
          %3554 = vmatmul.mubr.bf16.gmra.mrb[0].mxu0 %v3468
          %v3555 = vpop.f32.mrb[0].mxu0
          %v3556 = vadd.f32 0.0, %v3555
          %v3557 = vpop.f32.mrb[0].mxu0
          %v3558 = vpop.f32.mrb[0].mxu0
          %v3559 = vadd.f32 0.0, %v3558
          %v3560 = vpop.f32.mrb[0].mxu0
          %3561 = vmatprep.mubr.bf16.mxu0 0
          %3562 = vmatmul.mubr.bf16.gmra.mrb[0].mxu0 %v3469
          %v3563 = vpop.f32.mrb[0].mxu0
          %v3564 = vadd.f32 0.0, %v3563
          %v3565 = vpop.f32.mrb[0].mxu0
          %v3566 = vpop.f32.mrb[0].mxu0
          %v3567 = vadd.f32 0.0, %v3566
          %v3568 = vpop.f32.mrb[0].mxu0
          %3569 = vmatprep.mubr.bf16.mxu0 0
          %3570 = vmatmul.mubr.bf16.gmra.mrb[0].mxu0 %v3470
          %v3571 = vpop.f32.mrb[0].mxu0
          %v3572 = vadd.f32 0.0, %v3571
          %v3573 = vpop.f32.mrb[0].mxu0
          %v3574 = vpop.f32.mrb[0].mxu0
          %v3575 = vadd.f32 0.0, %v3574
          %v3576 = vpop.f32.mrb[0].mxu0
          %3577 = vmatprep.mubr.bf16.mxu0 0
          %3578 = vmatmul.mubr.bf16.gmra.mrb[0].mxu0 %v3471
          %v3579 = vpop.f32.mrb[0].mxu0
          %v3580 = vadd.f32 0.0, %v3579
          %v3581 = vpop.f32.mrb[0].mxu0
          %v3582 = vpop.f32.mrb[0].mxu0
          %v3583 = vadd.f32 0.0, %v3582
          %v3584 = vpop.f32.mrb[0].mxu0
          %3585 = vmatprep.mubr.bf16.mxu0 0
          %3586 = vmatmul.mubr.bf16.gmra.mrb[0].mxu0 %v3472
          %v3587 = vpop.f32.mrb[0].mxu0
          %v3588 = vadd.f32 0.0, %v3587
          %v3589 = vpop.f32.mrb[0].mxu0
          %v3590 = vpop.f32.mrb[0].mxu0
          %v3591 = vadd.f32 0.0, %v3590
          %v3592 = vpop.f32.mrb[0].mxu0
          %3593 = vdwg.mxu0
          %v3594 = vld [vmem:[#allocation12 + $0x30] sm:$0xf]
          %v3595 = vld [vmem:[#allocation12 + $0x34] sm:$0xf]
          %v3596 = vld [vmem:[#allocation12 + $0x38] sm:$0xf]
          %v3597 = vld [vmem:[#allocation12 + $0x3c] sm:$0xf]
          %v3598 = vpack.c.bf16 %v3535, %v3532
          %v3599 = vpack.c.bf16 %v3543, %v3540
          %v3600 = vpack.c.bf16 %v3551, %v3548
          %v3601 = vpack.c.bf16 %v3559, %v3556
          %v3602 = vpack.c.bf16 %v3567, %v3564
          %v3603 = vpack.c.bf16 %v3575, %v3572
          %v3604 = vpack.c.bf16 %v3583, %v3580
          %v3605 = vpack.c.bf16 %v3591, %v3588
          %v3610 = vunpack.c.l.b16 %v3594
          %v3611 = vunpack.c.l.b16 %v3595
          %v3612 = vunpack.c.l.b16 %v3596
          %v3613 = vunpack.c.l.b16 %v3597
          %v3614 = vpack.c.b16 %v3611, %v3610
          %v3615 = vpack.c.b16 %v3613, %v3612
          %v3619 = vsel %vm1246, %v3598, 0
          %v3622 = vsel %vm1246, %v3599, 0
          %v3625 = vsel %vm1246, %v3600, 0
          %v3628 = vsel %vm1246, %v3601, 0
          %v3631 = vsel %vm1246, %v3602, 0
          %v3634 = vsel %vm1246, %v3603, 0
          %v3637 = vsel %vm1246, %v3604, 0
          %v3640 = vsel %vm1246, %v3605, 0
          %3642 = vmatprep.subr.bf16.mxu0 0
          %3643 = vmatpush1.bf16.msra.mxu0 %v3614
          %3644 = vmatprep.subr.bf16.mxu0 0
          %3645 = vmatpush1.bf16.msra.mxu0 %v3615
          %3646 = vmatprep.subr.bf16.mxu0 0
          %3647 = vmatpush1.bf16.msra.mxu0 0
          %3648 = vmatprep.subr.bf16.mxu0 0
          %3649 = vmatpush1.bf16.msra.mxu0 0
          %3650 = vmatprep.subr.bf16.mxu0 0
          %3651 = vmatpush1.bf16.msra.mxu0 0
          %3652 = vmatprep.subr.bf16.mxu0 0
          %3653 = vmatpush1.bf16.msra.mxu0 0
          %3654 = vmatprep.subr.bf16.mxu0 0
          %3655 = vmatpush1.bf16.msra.mxu0 0
          %3656 = vmatprep.subr.bf16.mxu0 0
          %3657 = vmatpush1.bf16.msra.mxu0 0
          %3658 = vmatprep.subr.bf16.mxu0 0
          %3659 = vmatpush1.bf16.msra.mxu0 0
          %3660 = vmatprep.subr.bf16.mxu0 0
          %3661 = vmatpush1.bf16.msra.mxu0 0
          %3662 = vmatprep.subr.bf16.mxu0 0
          %3663 = vmatpush1.bf16.msra.mxu0 0
          %3664 = vmatprep.subr.bf16.mxu0 0
          %3665 = vmatpush1.bf16.msra.mxu0 0
          %3666 = vmatprep.subr.bf16.mxu0 0
          %3667 = vmatpush1.bf16.msra.mxu0 0
          %3668 = vmatprep.subr.bf16.mxu0 0
          %3669 = vmatpush1.bf16.msra.mxu0 0
          %3670 = vmatprep.subr.bf16.mxu0 0
          %3671 = vmatpush1.bf16.msra.mxu0 0
          %3672 = vmatprep.subr.bf16.mxu0 0
          %3673 = vmatpush1.bf16.msra.mxu0 0
          %3674 = vmatprep.mubr.bf16.mxu0 0
          %3675 = vmatmul.mubr.bf16.gmra.mrb[0].mxu0 %v3619
          %v3676 = vpop.f32.mrb[0].mxu0
          %v3677 = vadd.f32 0.0, %v3676
          %v3678 = vpop.f32.mrb[0].mxu0
          %v3679 = vpop.f32.mrb[0].mxu0
          %v3680 = vadd.f32 0.0, %v3679
          %v3681 = vpop.f32.mrb[0].mxu0
          %3682 = vmatprep.mubr.bf16.mxu0 0
          %3683 = vmatmul.mubr.bf16.gmra.mrb[0].mxu0 %v3622
          %v3684 = vpop.f32.mrb[0].mxu0
          %v3685 = vadd.f32 0.0, %v3684
          %v3686 = vpop.f32.mrb[0].mxu0
          %v3687 = vpop.f32.mrb[0].mxu0
          %v3688 = vadd.f32 0.0, %v3687
          %v3689 = vpop.f32.mrb[0].mxu0
          %3690 = vmatprep.mubr.bf16.mxu0 0
          %3691 = vmatmul.mubr.bf16.gmra.mrb[0].mxu0 %v3625
          %v3692 = vpop.f32.mrb[0].mxu0
          %v3693 = vadd.f32 0.0, %v3692
          %v3694 = vpop.f32.mrb[0].mxu0
          %v3695 = vpop.f32.mrb[0].mxu0
          %v3696 = vadd.f32 0.0, %v3695
          %v3697 = vpop.f32.mrb[0].mxu0
          %3698 = vmatprep.mubr.bf16.mxu0 0
          %3699 = vmatmul.mubr.bf16.gmra.mrb[0].mxu0 %v3628
          %v3700 = vpop.f32.mrb[0].mxu0
          %v3701 = vadd.f32 0.0, %v3700
          %v3702 = vpop.f32.mrb[0].mxu0
          %v3703 = vpop.f32.mrb[0].mxu0
          %v3704 = vadd.f32 0.0, %v3703
          %v3705 = vpop.f32.mrb[0].mxu0
          %3706 = vmatprep.mubr.bf16.mxu0 0
          %3707 = vmatmul.mubr.bf16.gmra.mrb[0].mxu0 %v3631
          %v3708 = vpop.f32.mrb[0].mxu0
          %v3709 = vadd.f32 0.0, %v3708
          %v3710 = vpop.f32.mrb[0].mxu0
          %v3711 = vpop.f32.mrb[0].mxu0
          %v3712 = vadd.f32 0.0, %v3711
          %v3713 = vpop.f32.mrb[0].mxu0
          %3714 = vmatprep.mubr.bf16.mxu0 0
          %3715 = vmatmul.mubr.bf16.gmra.mrb[0].mxu0 %v3634
          %v3716 = vpop.f32.mrb[0].mxu0
          %v3717 = vadd.f32 0.0, %v3716
          %v3718 = vpop.f32.mrb[0].mxu0
          %v3719 = vpop.f32.mrb[0].mxu0
          %v3720 = vadd.f32 0.0, %v3719
          %v3721 = vpop.f32.mrb[0].mxu0
          %3722 = vmatprep.mubr.bf16.mxu0 0
          %3723 = vmatmul.mubr.bf16.gmra.mrb[0].mxu0 %v3637
          %v3724 = vpop.f32.mrb[0].mxu0
          %v3725 = vadd.f32 0.0, %v3724
          %v3726 = vpop.f32.mrb[0].mxu0
          %v3727 = vpop.f32.mrb[0].mxu0
          %v3728 = vadd.f32 0.0, %v3727
          %v3729 = vpop.f32.mrb[0].mxu0
          %3730 = vmatprep.mubr.bf16.mxu0 0
          %3731 = vmatmul.mubr.bf16.gmra.mrb[0].mxu0 %v3640
          %v3732 = vpop.f32.mrb[0].mxu0
          %v3733 = vadd.f32 0.0, %v3732
          %v3734 = vpop.f32.mrb[0].mxu0
          %v3735 = vpop.f32.mrb[0].mxu0
          %v3736 = vadd.f32 0.0, %v3735
          %v3737 = vpop.f32.mrb[0].mxu0
          %3738 = vdwg.mxu0
          %v3739 = vadd.f32 %v3096, %v3677
          %v3740 = vadd.f32 %v3097, %v3680
          %v3741 = vadd.f32 %v3098, %v3685
          %v3742 = vadd.f32 %v3099, %v3688
          %v3743 = vadd.f32 %v3100, %v3693
          %v3744 = vadd.f32 %v3101, %v3696
          %v3745 = vadd.f32 %v3102, %v3701
          %v3746 = vadd.f32 %v3103, %v3704
          %v3747 = vadd.f32 %v3104, %v3709
          %v3748 = vadd.f32 %v3105, %v3712
          %v3749 = vadd.f32 %v3106, %v3717
          %v3750 = vadd.f32 %v3107, %v3720
          %v3751 = vadd.f32 %v3108, %v3725
          %v3752 = vadd.f32 %v3109, %v3728
          %v3753 = vadd.f32 %v3110, %v3733
          %v3754 = vadd.f32 %v3111, %v3736
          %v3755 = vunpack.c.l.bf16 %v666
          %v3756 = vunpack.c.l.bf16 %v667
          %v3757 = vunpack.c.l.bf16 %v668
          %v3758 = vunpack.c.l.bf16 %v669
          %v3759 = vunpack.c.l.bf16 %v670
          %v3760 = vunpack.c.l.bf16 %v671
          %v3761 = vunpack.c.l.bf16 %v672
          %v3762 = vunpack.c.l.bf16 %v673
          %v3763 = vunpack.c.l.bf16 %v674
          %v3764 = vunpack.c.l.bf16 %v675
          %v3765 = vunpack.c.l.bf16 %v676
          %v3766 = vunpack.c.l.bf16 %v677
          %v3767 = vunpack.c.l.bf16 %v678
          %v3768 = vunpack.c.l.bf16 %v679
          %v3769 = vunpack.c.l.bf16 %v680
          %v3770 = vunpack.c.l.bf16 %v681
          %v3771 = vadd.f32 %v3755, %v3739
          %v3772 = vadd.f32 %v3756, %v3740
          %v3773 = vadd.f32 %v3757, %v3741
          %v3774 = vadd.f32 %v3758, %v3742
          %v3775 = vadd.f32 %v3759, %v3743
          %v3776 = vadd.f32 %v3760, %v3744
          %v3777 = vadd.f32 %v3761, %v3745
          %v3778 = vadd.f32 %v3762, %v3746
          %v3779 = vadd.f32 %v3763, %v3747
          %v3780 = vadd.f32 %v3764, %v3748
          %v3781 = vadd.f32 %v3765, %v3749
          %v3782 = vadd.f32 %v3766, %v3750
          %v3783 = vadd.f32 %v3767, %v3751
          %v3784 = vadd.f32 %v3768, %v3752
          %v3785 = vadd.f32 %v3769, %v3753
          %v3786 = vadd.f32 %v3770, %v3754
          %v3787 = vld [vmem:[%s10] sm:$0x1]
          %v3788 = vld [vmem:[%s11] sm:$0x1]
          %3789 = vadd.xlane.f32.xlu0 %v3771
          %v3790 = vpop.xlane.xlu0 %3789
          %3791 = vadd.xlane.f32.xlu0 %v3772
          %v3792 = vpop.xlane.xlu0 %3791
          %3793 = vadd.xlane.f32.xlu0 %v3773
          %v3794 = vpop.xlane.xlu0 %3793
          %3795 = vadd.xlane.f32.xlu0 %v3774
          %v3796 = vpop.xlane.xlu0 %3795
          %3797 = vadd.xlane.f32.xlu0 %v3775
          %v3798 = vpop.xlane.xlu0 %3797
          %3799 = vadd.xlane.f32.xlu0 %v3776
          %v3800 = vpop.xlane.xlu0 %3799
          %3801 = vadd.xlane.f32.xlu0 %v3777
          %v3802 = vpop.xlane.xlu0 %3801
          %3803 = vadd.xlane.f32.xlu0 %v3778
          %v3804 = vpop.xlane.xlu0 %3803
          %3805 = vadd.xlane.f32.xlu0 %v3779
          %v3806 = vpop.xlane.xlu0 %3805
          %3807 = vadd.xlane.f32.xlu0 %v3780
          %v3808 = vpop.xlane.xlu0 %3807
          %3809 = vadd.xlane.f32.xlu0 %v3781
          %v3810 = vpop.xlane.xlu0 %3809
          %3811 = vadd.xlane.f32.xlu0 %v3782
          %v3812 = vpop.xlane.xlu0 %3811
          %3813 = vadd.xlane.f32.xlu0 %v3783
          %v3814 = vpop.xlane.xlu0 %3813
          %3815 = vadd.xlane.f32.xlu0 %v3784
          %v3816 = vpop.xlane.xlu0 %3815
          %3817 = vadd.xlane.f32.xlu0 %v3785
          %v3818 = vpop.xlane.xlu0 %3817
          %3819 = vadd.xlane.f32.xlu0 %v3786
          %v3820 = vpop.xlane.xlu0 %3819
          %v3821 = vrcp.pop 128.0
          %v3822 = vmul.f32 %v3790, %v3821
          %v3823 = vmul.f32 %v3792, %v3821
          %v3824 = vmul.f32 %v3794, %v3821
          %v3825 = vmul.f32 %v3796, %v3821
          %v3826 = vmul.f32 %v3798, %v3821
          %v3827 = vmul.f32 %v3800, %v3821
          %v3828 = vmul.f32 %v3802, %v3821
          %v3829 = vmul.f32 %v3804, %v3821
          %v3830 = vmul.f32 %v3806, %v3821
          %v3831 = vmul.f32 %v3808, %v3821
          %v3832 = vmul.f32 %v3810, %v3821
          %v3833 = vmul.f32 %v3812, %v3821
          %v3834 = vmul.f32 %v3814, %v3821
          %v3835 = vmul.f32 %v3816, %v3821
          %v3836 = vmul.f32 %v3818, %v3821
          %v3837 = vmul.f32 %v3820, %v3821
          %v3838 = vsub.f32 %v3771, %v3822
          %v3839 = vsub.f32 %v3772, %v3823
          %v3840 = vsub.f32 %v3773, %v3824
          %v3841 = vsub.f32 %v3774, %v3825
          %v3842 = vsub.f32 %v3775, %v3826
          %v3843 = vsub.f32 %v3776, %v3827
          %v3844 = vsub.f32 %v3777, %v3828
          %v3845 = vsub.f32 %v3778, %v3829
          %v3846 = vsub.f32 %v3779, %v3830
          %v3847 = vsub.f32 %v3780, %v3831
          %v3848 = vsub.f32 %v3781, %v3832
          %v3849 = vsub.f32 %v3782, %v3833
          %v3850 = vsub.f32 %v3783, %v3834
          %v3851 = vsub.f32 %v3784, %v3835
          %v3852 = vsub.f32 %v3785, %v3836
          %v3853 = vsub.f32 %v3786, %v3837
          %v3854 = vmul.f32 %v3838, %v3838
          %v3855 = vmul.f32 %v3839, %v3839
          %v3856 = vmul.f32 %v3840, %v3840
          %v3857 = vmul.f32 %v3841, %v3841
          %v3858 = vmul.f32 %v3842, %v3842
          %v3859 = vmul.f32 %v3843, %v3843
          %v3860 = vmul.f32 %v3844, %v3844
          %v3861 = vmul.f32 %v3845, %v3845
          %v3862 = vmul.f32 %v3846, %v3846
          %v3863 = vmul.f32 %v3847, %v3847
          %v3864 = vmul.f32 %v3848, %v3848
          %v3865 = vmul.f32 %v3849, %v3849
          %v3866 = vmul.f32 %v3850, %v3850
          %v3867 = vmul.f32 %v3851, %v3851
          %v3868 = vmul.f32 %v3852, %v3852
          %v3869 = vmul.f32 %v3853, %v3853
          %3870 = vadd.xlane.f32.xlu0 %v3854
          %v3871 = vpop.xlane.xlu0 %3870
          %3872 = vadd.xlane.f32.xlu0 %v3855
          %v3873 = vpop.xlane.xlu0 %3872
          %3874 = vadd.xlane.f32.xlu0 %v3856
          %v3875 = vpop.xlane.xlu0 %3874
          %3876 = vadd.xlane.f32.xlu0 %v3857
          %v3877 = vpop.xlane.xlu0 %3876
          %3878 = vadd.xlane.f32.xlu0 %v3858
          %v3879 = vpop.xlane.xlu0 %3878
          %3880 = vadd.xlane.f32.xlu0 %v3859
          %v3881 = vpop.xlane.xlu0 %3880
          %3882 = vadd.xlane.f32.xlu0 %v3860
          %v3883 = vpop.xlane.xlu0 %3882
          %3884 = vadd.xlane.f32.xlu0 %v3861
          %v3885 = vpop.xlane.xlu0 %3884
          %3886 = vadd.xlane.f32.xlu0 %v3862
          %v3887 = vpop.xlane.xlu0 %3886
          %3888 = vadd.xlane.f32.xlu0 %v3863
          %v3889 = vpop.xlane.xlu0 %3888
          %3890 = vadd.xlane.f32.xlu0 %v3864
          %v3891 = vpop.xlane.xlu0 %3890
          %3892 = vadd.xlane.f32.xlu0 %v3865
          %v3893 = vpop.xlane.xlu0 %3892
          %3894 = vadd.xlane.f32.xlu0 %v3866
          %v3895 = vpop.xlane.xlu0 %3894
          %3896 = vadd.xlane.f32.xlu0 %v3867
          %v3897 = vpop.xlane.xlu0 %3896
          %3898 = vadd.xlane.f32.xlu0 %v3868
          %v3899 = vpop.xlane.xlu0 %3898
          %3900 = vadd.xlane.f32.xlu0 %v3869
          %v3901 = vpop.xlane.xlu0 %3900
          %v3902 = vmul.f32 %v3871, %v3821
          %v3903 = vmul.f32 %v3873, %v3821
          %v3904 = vmul.f32 %v3875, %v3821
          %v3905 = vmul.f32 %v3877, %v3821
          %v3906 = vmul.f32 %v3879, %v3821
          %v3907 = vmul.f32 %v3881, %v3821
          %v3908 = vmul.f32 %v3883, %v3821
          %v3909 = vmul.f32 %v3885, %v3821
          %v3910 = vmul.f32 %v3887, %v3821
          %v3911 = vmul.f32 %v3889, %v3821
          %v3912 = vmul.f32 %v3891, %v3821
          %v3913 = vmul.f32 %v3893, %v3821
          %v3914 = vmul.f32 %v3895, %v3821
          %v3915 = vmul.f32 %v3897, %v3821
          %v3916 = vmul.f32 %v3899, %v3821
          %v3917 = vmul.f32 %v3901, %v3821
          %v3918 = vadd.f32 %v3902, 1e-05
          %v3919 = vadd.f32 %v3903, 1e-05
          %v3920 = vadd.f32 %v3904, 1e-05
          %v3921 = vadd.f32 %v3905, 1e-05
          %v3922 = vadd.f32 %v3906, 1e-05
          %v3923 = vadd.f32 %v3907, 1e-05
          %v3924 = vadd.f32 %v3908, 1e-05
          %v3925 = vadd.f32 %v3909, 1e-05
          %v3926 = vadd.f32 %v3910, 1e-05
          %v3927 = vadd.f32 %v3911, 1e-05
          %v3928 = vadd.f32 %v3912, 1e-05
          %v3929 = vadd.f32 %v3913, 1e-05
          %v3930 = vadd.f32 %v3914, 1e-05
          %v3931 = vadd.f32 %v3915, 1e-05
          %v3932 = vadd.f32 %v3916, 1e-05
          %v3933 = vadd.f32 %v3917, 1e-05
          %v3934 = vrsqrt.pop %v3918
          %v3935 = vmul.f32 %v3918, %v3934
          %vm3936 = vcmp.eq.f32.partialorder %v3918, inf
          %v3937 = vsel %vm3936, %v3918, %v3935
          %vm3938 = vcmp.eq.f32.partialorder %v3918, 0.0
          %v3939 = vand.u32 %v3918, 2147483648
          %v3940 = vsel %vm3938, %v3939, %v3937
          %v3941 = vrsqrt.pop %v3919
          %v3942 = vmul.f32 %v3919, %v3941
          %vm3943 = vcmp.eq.f32.partialorder %v3919, inf
          %v3944 = vsel %vm3943, %v3919, %v3942
          %vm3945 = vcmp.eq.f32.partialorder %v3919, 0.0
          %v3946 = vand.u32 %v3919, 2147483648
          %v3947 = vsel %vm3945, %v3946, %v3944
          %v3948 = vrsqrt.pop %v3920
          %v3949 = vmul.f32 %v3920, %v3948
          %vm3950 = vcmp.eq.f32.partialorder %v3920, inf
          %v3951 = vsel %vm3950, %v3920, %v3949
          %vm3952 = vcmp.eq.f32.partialorder %v3920, 0.0
          %v3953 = vand.u32 %v3920, 2147483648
          %v3954 = vsel %vm3952, %v3953, %v3951
          %v3955 = vrsqrt.pop %v3921
          %v3956 = vmul.f32 %v3921, %v3955
          %vm3957 = vcmp.eq.f32.partialorder %v3921, inf
          %v3958 = vsel %vm3957, %v3921, %v3956
          %vm3959 = vcmp.eq.f32.partialorder %v3921, 0.0
          %v3960 = vand.u32 %v3921, 2147483648
          %v3961 = vsel %vm3959, %v3960, %v3958
          %v3962 = vrsqrt.pop %v3922
          %v3963 = vmul.f32 %v3922, %v3962
          %vm3964 = vcmp.eq.f32.partialorder %v3922, inf
          %v3965 = vsel %vm3964, %v3922, %v3963
          %vm3966 = vcmp.eq.f32.partialorder %v3922, 0.0
          %v3967 = vand.u32 %v3922, 2147483648
          %v3968 = vsel %vm3966, %v3967, %v3965
          %v3969 = vrsqrt.pop %v3923
          %v3970 = vmul.f32 %v3923, %v3969
          %vm3971 = vcmp.eq.f32.partialorder %v3923, inf
          %v3972 = vsel %vm3971, %v3923, %v3970
          %vm3973 = vcmp.eq.f32.partialorder %v3923, 0.0
          %v3974 = vand.u32 %v3923, 2147483648
          %v3975 = vsel %vm3973, %v3974, %v3972
          %v3976 = vrsqrt.pop %v3924
          %v3977 = vmul.f32 %v3924, %v3976
          %vm3978 = vcmp.eq.f32.partialorder %v3924, inf
          %v3979 = vsel %vm3978, %v3924, %v3977
          %vm3980 = vcmp.eq.f32.partialorder %v3924, 0.0
          %v3981 = vand.u32 %v3924, 2147483648
          %v3982 = vsel %vm3980, %v3981, %v3979
          %v3983 = vrsqrt.pop %v3925
          %v3984 = vmul.f32 %v3925, %v3983
          %vm3985 = vcmp.eq.f32.partialorder %v3925, inf
          %v3986 = vsel %vm3985, %v3925, %v3984
          %vm3987 = vcmp.eq.f32.partialorder %v3925, 0.0
          %v3988 = vand.u32 %v3925, 2147483648
          %v3989 = vsel %vm3987, %v3988, %v3986
          %v3990 = vrsqrt.pop %v3926
          %v3991 = vmul.f32 %v3926, %v3990
          %vm3992 = vcmp.eq.f32.partialorder %v3926, inf
          %v3993 = vsel %vm3992, %v3926, %v3991
          %vm3994 = vcmp.eq.f32.partialorder %v3926, 0.0
          %v3995 = vand.u32 %v3926, 2147483648
          %v3996 = vsel %vm3994, %v3995, %v3993
          %v3997 = vrsqrt.pop %v3927
          %v3998 = vmul.f32 %v3927, %v3997
          %vm3999 = vcmp.eq.f32.partialorder %v3927, inf
          %v4000 = vsel %vm3999, %v3927, %v3998
          %vm4001 = vcmp.eq.f32.partialorder %v3927, 0.0
          %v4002 = vand.u32 %v3927, 2147483648
          %v4003 = vsel %vm4001, %v4002, %v4000
          %v4004 = vrsqrt.pop %v3928
          %v4005 = vmul.f32 %v3928, %v4004
          %vm4006 = vcmp.eq.f32.partialorder %v3928, inf
          %v4007 = vsel %vm4006, %v3928, %v4005
          %vm4008 = vcmp.eq.f32.partialorder %v3928, 0.0
          %v4009 = vand.u32 %v3928, 2147483648
          %v4010 = vsel %vm4008, %v4009, %v4007
          %v4011 = vrsqrt.pop %v3929
          %v4012 = vmul.f32 %v3929, %v4011
          %vm4013 = vcmp.eq.f32.partialorder %v3929, inf
          %v4014 = vsel %vm4013, %v3929, %v4012
          %vm4015 = vcmp.eq.f32.partialorder %v3929, 0.0
          %v4016 = vand.u32 %v3929, 2147483648
          %v4017 = vsel %vm4015, %v4016, %v4014
          %v4018 = vrsqrt.pop %v3930
          %v4019 = vmul.f32 %v3930, %v4018
          %vm4020 = vcmp.eq.f32.partialorder %v3930, inf
          %v4021 = vsel %vm4020, %v3930, %v4019
          %vm4022 = vcmp.eq.f32.partialorder %v3930, 0.0
          %v4023 = vand.u32 %v3930, 2147483648
          %v4024 = vsel %vm4022, %v4023, %v4021
          %v4025 = vrsqrt.pop %v3931
          %v4026 = vmul.f32 %v3931, %v4025
          %vm4027 = vcmp.eq.f32.partialorder %v3931, inf
          %v4028 = vsel %vm4027, %v3931, %v4026
          %vm4029 = vcmp.eq.f32.partialorder %v3931, 0.0
          %v4030 = vand.u32 %v3931, 2147483648
          %v4031 = vsel %vm4029, %v4030, %v4028
          %v4032 = vrsqrt.pop %v3932
          %v4033 = vmul.f32 %v3932, %v4032
          %vm4034 = vcmp.eq.f32.partialorder %v3932, inf
          %v4035 = vsel %vm4034, %v3932, %v4033
          %vm4036 = vcmp.eq.f32.partialorder %v3932, 0.0
          %v4037 = vand.u32 %v3932, 2147483648
          %v4038 = vsel %vm4036, %v4037, %v4035
          %v4039 = vrsqrt.pop %v3933
          %v4040 = vmul.f32 %v3933, %v4039
          %vm4041 = vcmp.eq.f32.partialorder %v3933, inf
          %v4042 = vsel %vm4041, %v3933, %v4040
          %vm4043 = vcmp.eq.f32.partialorder %v3933, 0.0
          %v4044 = vand.u32 %v3933, 2147483648
          %v4045 = vsel %vm4043, %v4044, %v4042
          %v4046 = vrcp.pop %v3940
          %v4047 = vmul.f32 %v3838, %v4046
          %v4048 = vrcp.pop %v3947
          %v4049 = vmul.f32 %v3839, %v4048
          %v4050 = vrcp.pop %v3954
          %v4051 = vmul.f32 %v3840, %v4050
          %v4052 = vrcp.pop %v3961
          %v4053 = vmul.f32 %v3841, %v4052
          %v4054 = vrcp.pop %v3968
          %v4055 = vmul.f32 %v3842, %v4054
          %v4056 = vrcp.pop %v3975
          %v4057 = vmul.f32 %v3843, %v4056
          %v4058 = vrcp.pop %v3982
          %v4059 = vmul.f32 %v3844, %v4058
          %v4060 = vrcp.pop %v3989
          %v4061 = vmul.f32 %v3845, %v4060
          %v4062 = vrcp.pop %v3996
          %v4063 = vmul.f32 %v3846, %v4062
          %v4064 = vrcp.pop %v4003
          %v4065 = vmul.f32 %v3847, %v4064
          %v4066 = vrcp.pop %v4010
          %v4067 = vmul.f32 %v3848, %v4066
          %v4068 = vrcp.pop %v4017
          %v4069 = vmul.f32 %v3849, %v4068
          %v4070 = vrcp.pop %v4024
          %v4071 = vmul.f32 %v3850, %v4070
          %v4072 = vrcp.pop %v4031
          %v4073 = vmul.f32 %v3851, %v4072
          %v4074 = vrcp.pop %v4038
          %v4075 = vmul.f32 %v3852, %v4074
          %v4076 = vrcp.pop %v4045
          %v4077 = vmul.f32 %v3853, %v4076
          %v4079 = vlaneseq
          %v4080 = vshrl.u32 %v4079, 7
          %v4081 = vsub.s32 0, %v4080
          %v4082 = vrot.slane %v3787, %v4081
          %v4084 = vmul.f32 %v4047, %v4082
          %v4085 = vmul.f32 %v4049, %v4082
          %v4086 = vmul.f32 %v4051, %v4082
          %v4087 = vmul.f32 %v4053, %v4082
          %v4088 = vmul.f32 %v4055, %v4082
          %v4089 = vmul.f32 %v4057, %v4082
          %v4090 = vmul.f32 %v4059, %v4082
          %v4091 = vmul.f32 %v4061, %v4082
          %v4092 = vmul.f32 %v4063, %v4082
          %v4093 = vmul.f32 %v4065, %v4082
          %v4094 = vmul.f32 %v4067, %v4082
          %v4095 = vmul.f32 %v4069, %v4082
          %v4096 = vmul.f32 %v4071, %v4082
          %v4097 = vmul.f32 %v4073, %v4082
          %v4098 = vmul.f32 %v4075, %v4082
          %v4099 = vmul.f32 %v4077, %v4082
          %v4101 = vlaneseq
          %v4102 = vshrl.u32 %v4101, 7
          %v4103 = vsub.s32 0, %v4102
          %v4104 = vrot.slane %v3788, %v4103
          %v4106 = vadd.f32 %v4084, %v4104
          %v4107 = vadd.f32 %v4085, %v4104
          %v4108 = vadd.f32 %v4086, %v4104
          %v4109 = vadd.f32 %v4087, %v4104
          %v4110 = vadd.f32 %v4088, %v4104
          %v4111 = vadd.f32 %v4089, %v4104
          %v4112 = vadd.f32 %v4090, %v4104
          %v4113 = vadd.f32 %v4091, %v4104
          %v4114 = vadd.f32 %v4092, %v4104
          %v4115 = vadd.f32 %v4093, %v4104
          %v4116 = vadd.f32 %v4094, %v4104
          %v4117 = vadd.f32 %v4095, %v4104
          %v4118 = vadd.f32 %v4096, %v4104
          %v4119 = vadd.f32 %v4097, %v4104
          %v4120 = vadd.f32 %v4098, %v4104
          %v4121 = vadd.f32 %v4099, %v4104
          %v4122 = vpack.c.bf16 %v4107, %v4106
          %v4123 = vpack.c.bf16 %v4109, %v4108
          %v4124 = vpack.c.bf16 %v4111, %v4110
          %v4125 = vpack.c.bf16 %v4113, %v4112
          %v4126 = vpack.c.bf16 %v4115, %v4114
          %v4127 = vpack.c.bf16 %v4117, %v4116
          %v4128 = vpack.c.bf16 %v4119, %v4118
          %v4129 = vpack.c.bf16 %v4121, %v4120
          %4130 = vst [vmem:[#allocation2] sm:$0xff] %v4122
          %4131 = vst [vmem:[#allocation2 + $0x8] sm:$0xff] %v4123
          %4132 = vst [vmem:[#allocation2 + $0x10] sm:$0xff] %v4124
          %4133 = vst [vmem:[#allocation2 + $0x18] sm:$0xff] %v4125
          %4134 = vst [vmem:[#allocation2 + $0x20] sm:$0xff] %v4126
          %4135 = vst [vmem:[#allocation2 + $0x28] sm:$0xff] %v4127
          %4136 = vst [vmem:[#allocation2 + $0x30] sm:$0xff] %v4128
          %4137 = vst [vmem:[#allocation2 + $0x38] sm:$0xff] %v4129
          %4138 = vst [vmem:[#allocation3] sm:$0xff] 0.0
          %4139 = vst [vmem:[#allocation3 + $0x8] sm:$0xff] 0.0
          %4140 = vst [vmem:[#allocation3 + $0x10] sm:$0xff] 0.0
          %4141 = vst [vmem:[#allocation3 + $0x18] sm:$0xff] 0.0
          %4142 = vst [vmem:[#allocation3 + $0x20] sm:$0xff] 0.0
          %4143 = vst [vmem:[#allocation3 + $0x28] sm:$0xff] 0.0
          %4144 = vst [vmem:[#allocation3 + $0x30] sm:$0xff] 0.0
          %4145 = vst [vmem:[#allocation3 + $0x38] sm:$0xff] 0.0
          %4146 = vst [vmem:[#allocation3 + $0x40] sm:$0xff] 0.0
          %4147 = vst [vmem:[#allocation3 + $0x48] sm:$0xff] 0.0
          %4148 = vst [vmem:[#allocation3 + $0x50] sm:$0xff] 0.0
          %4149 = vst [vmem:[#allocation3 + $0x58] sm:$0xff] 0.0
          %4150 = vst [vmem:[#allocation3 + $0x60] sm:$0xff] 0.0
          %4151 = vst [vmem:[#allocation3 + $0x68] sm:$0xff] 0.0
          %4152 = vst [vmem:[#allocation3 + $0x70] sm:$0xff] 0.0
          %4153 = vst [vmem:[#allocation3 + $0x78] sm:$0xff] 0.0
        $region108: #{tpu_custom_call.1} parent=75 // pred_fallthru
          _
        %v4154 = vld [vmem:[#allocation2] sm:$0xff]
        %v4155 = vld [vmem:[#allocation2 + $0x8] sm:$0xff]
        %v4156 = vld [vmem:[#allocation2 + $0x10] sm:$0xff]
        %v4157 = vld [vmem:[#allocation2 + $0x18] sm:$0xff]
        %v4158 = vld [vmem:[#allocation2 + $0x20] sm:$0xff]
        %v4159 = vld [vmem:[#allocation2 + $0x28] sm:$0xff]
        %v4160 = vld [vmem:[#allocation2 + $0x30] sm:$0xff]
        %v4161 = vld [vmem:[#allocation2 + $0x38] sm:$0xff]
        %v4162 = vld [vmem:[%s584] sm:$0xf]
        %v4163 = vld [vmem:[%s584 + $0x4] sm:$0xf]
        %v4164 = vld [vmem:[%s584 + $0x8] sm:$0xf]
        %v4165 = vld [vmem:[%s584 + $0xc] sm:$0xf]
        %v4166 = vld [vmem:[%s584 + $0x10] sm:$0xf]
        %v4167 = vld [vmem:[%s584 + $0x14] sm:$0xf]
        %v4168 = vld [vmem:[%s584 + $0x18] sm:$0xf]
        %v4169 = vld [vmem:[%s584 + $0x1c] sm:$0xf]
        %v4170 = vld [vmem:[%s584 + $0x20] sm:$0xf]
        %v4171 = vld [vmem:[%s584 + $0x24] sm:$0xf]
        %v4172 = vld [vmem:[%s584 + $0x28] sm:$0xf]
        %v4173 = vld [vmem:[%s584 + $0x2c] sm:$0xf]
        %v4174 = vld [vmem:[%s584 + $0x30] sm:$0xf]
        %v4175 = vld [vmem:[%s584 + $0x34] sm:$0xf]
        %v4176 = vld [vmem:[%s584 + $0x38] sm:$0xf]
        %v4177 = vld [vmem:[%s584 + $0x3c] sm:$0xf]
        %v4178 = vld [vmem:[%s659] sm:$0x1]
        %v4180 = vlaneseq
        %v4181 = vshrl.u32 %v4180, 7
        %v4182 = vsub.s32 0, %v4181
        %v4183 = vrot.slane %v4178, %v4182
        %v4201 = vunpack.c.l.b16 %v4162
        %v4202 = vunpack.c.l.b16 %v4163
        %v4203 = vunpack.c.l.b16 %v4164
        %v4204 = vunpack.c.l.b16 %v4165
        %v4205 = vunpack.c.l.b16 %v4166
        %v4206 = vunpack.c.l.b16 %v4167
        %v4207 = vunpack.c.l.b16 %v4168
        %v4208 = vunpack.c.l.b16 %v4169
        %v4209 = vunpack.c.l.b16 %v4170
        %v4210 = vunpack.c.l.b16 %v4171
        %v4211 = vunpack.c.l.b16 %v4172
        %v4212 = vunpack.c.l.b16 %v4173
        %v4213 = vunpack.c.l.b16 %v4174
        %v4214 = vunpack.c.l.b16 %v4175
        %v4215 = vunpack.c.l.b16 %v4176
        %v4216 = vunpack.c.l.b16 %v4177
        %v4217 = vpack.c.b16 %v4202, %v4201
        %v4218 = vpack.c.b16 %v4204, %v4203
        %v4219 = vpack.c.b16 %v4206, %v4205
        %v4220 = vpack.c.b16 %v4208, %v4207
        %v4221 = vpack.c.b16 %v4210, %v4209
        %v4222 = vpack.c.b16 %v4212, %v4211
        %v4223 = vpack.c.b16 %v4214, %v4213
        %v4224 = vpack.c.b16 %v4216, %v4215
        %4233 = vmatprep.subr.bf16.mxu0 0
        %4234 = vmatpush1.bf16.msra.mxu0 %v4217
        %4235 = vmatprep.subr.bf16.mxu0 0
        %4236 = vmatpush1.bf16.msra.mxu0 %v4218
        %4237 = vmatprep.subr.bf16.mxu0 0
        %4238 = vmatpush1.bf16.msra.mxu0 %v4219
        %4239 = vmatprep.subr.bf16.mxu0 0
        %4240 = vmatpush1.bf16.msra.mxu0 %v4220
        %4241 = vmatprep.subr.bf16.mxu0 0
        %4242 = vmatpush1.bf16.msra.mxu0 %v4221
        %4243 = vmatprep.subr.bf16.mxu0 0
        %4244 = vmatpush1.bf16.msra.mxu0 %v4222
        %4245 = vmatprep.subr.bf16.mxu0 0
        %4246 = vmatpush1.bf16.msra.mxu0 %v4223
        %4247 = vmatprep.subr.bf16.mxu0 0
        %4248 = vmatpush1.bf16.msra.mxu0 %v4224
        %4249 = vmatprep.subr.bf16.mxu0 0
        %4250 = vmatpush1.bf16.msra.mxu0 0
        %4251 = vmatprep.subr.bf16.mxu0 0
        %4252 = vmatpush1.bf16.msra.mxu0 0
        %4253 = vmatprep.subr.bf16.mxu0 0
        %4254 = vmatpush1.bf16.msra.mxu0 0
        %4255 = vmatprep.subr.bf16.mxu0 0
        %4256 = vmatpush1.bf16.msra.mxu0 0
        %4257 = vmatprep.subr.bf16.mxu0 0
        %4258 = vmatpush1.bf16.msra.mxu0 0
        %4259 = vmatprep.subr.bf16.mxu0 0
        %4260 = vmatpush1.bf16.msra.mxu0 0
        %4261 = vmatprep.subr.bf16.mxu0 0
        %4262 = vmatpush1.bf16.msra.mxu0 0
        %4263 = vmatprep.subr.bf16.mxu0 0
        %4264 = vmatpush1.bf16.msra.mxu0 0
        %4265 = vmatprep.mubr.bf16.mxu0 0
        %4266 = vmatmul.mubr.bf16.gmra.mrb[0].mxu0 %v4154
        %v4267 = vpop.f32.mrb[0].mxu0
        %v4268 = vadd.f32 %v4183, %v4267
        %v4269 = vpop.f32.mrb[0].mxu0
        %v4270 = vpop.f32.mrb[0].mxu0
        %v4271 = vadd.f32 %v4183, %v4270
        %v4272 = vpop.f32.mrb[0].mxu0
        %4273 = vmatprep.mubr.bf16.mxu0 0
        %4274 = vmatmul.mubr.bf16.gmra.mrb[0].mxu0 %v4155
        %v4275 = vpop.f32.mrb[0].mxu0
        %v4276 = vadd.f32 %v4183, %v4275
        %v4277 = vpop.f32.mrb[0].mxu0
        %v4278 = vpop.f32.mrb[0].mxu0
        %v4279 = vadd.f32 %v4183, %v4278
        %v4280 = vpop.f32.mrb[0].mxu0
        %4281 = vmatprep.mubr.bf16.mxu0 0
        %4282 = vmatmul.mubr.bf16.gmra.mrb[0].mxu0 %v4156
        %v4283 = vpop.f32.mrb[0].mxu0
        %v4284 = vadd.f32 %v4183, %v4283
        %v4285 = vpop.f32.mrb[0].mxu0
        %v4286 = vpop.f32.mrb[0].mxu0
        %v4287 = vadd.f32 %v4183, %v4286
        %v4288 = vpop.f32.mrb[0].mxu0
        %4289 = vmatprep.mubr.bf16.mxu0 0
        %4290 = vmatmul.mubr.bf16.gmra.mrb[0].mxu0 %v4157
        %v4291 = vpop.f32.mrb[0].mxu0
        %v4292 = vadd.f32 %v4183, %v4291
        %v4293 = vpop.f32.mrb[0].mxu0
        %v4294 = vpop.f32.mrb[0].mxu0
        %v4295 = vadd.f32 %v4183, %v4294
        %v4296 = vpop.f32.mrb[0].mxu0
        %4297 = vmatprep.mubr.bf16.mxu0 0
        %4298 = vmatmul.mubr.bf16.gmra.mrb[0].mxu0 %v4158
        %v4299 = vpop.f32.mrb[0].mxu0
        %v4300 = vadd.f32 %v4183, %v4299
        %v4301 = vpop.f32.mrb[0].mxu0
        %v4302 = vpop.f32.mrb[0].mxu0
        %v4303 = vadd.f32 %v4183, %v4302
        %v4304 = vpop.f32.mrb[0].mxu0
        %4305 = vmatprep.mubr.bf16.mxu0 0
        %4306 = vmatmul.mubr.bf16.gmra.mrb[0].mxu0 %v4159
        %v4307 = vpop.f32.mrb[0].mxu0
        %v4308 = vadd.f32 %v4183, %v4307
        %v4309 = vpop.f32.mrb[0].mxu0
        %v4310 = vpop.f32.mrb[0].mxu0
        %v4311 = vadd.f32 %v4183, %v4310
        %v4312 = vpop.f32.mrb[0].mxu0
        %4313 = vmatprep.mubr.bf16.mxu0 0
        %4314 = vmatmul.mubr.bf16.gmra.mrb[0].mxu0 %v4160
        %v4315 = vpop.f32.mrb[0].mxu0
        %v4316 = vadd.f32 %v4183, %v4315
        %v4317 = vpop.f32.mrb[0].mxu0
        %v4318 = vpop.f32.mrb[0].mxu0
        %v4319 = vadd.f32 %v4183, %v4318
        %v4320 = vpop.f32.mrb[0].mxu0
        %4321 = vmatprep.mubr.bf16.mxu0 0
        %4322 = vmatmul.mubr.bf16.gmra.mrb[0].mxu0 %v4161
        %v4323 = vpop.f32.mrb[0].mxu0
        %v4324 = vadd.f32 %v4183, %v4323
        %v4325 = vpop.f32.mrb[0].mxu0
        %v4326 = vpop.f32.mrb[0].mxu0
        %v4327 = vadd.f32 %v4183, %v4326
        %v4328 = vpop.f32.mrb[0].mxu0
        %4329 = vdwg.mxu0
        %v4330 = vmax.f32 %v4268, 0.0
        %v4331 = vmax.f32 %v4271, 0.0
        %v4332 = vmax.f32 %v4276, 0.0
        %v4333 = vmax.f32 %v4279, 0.0
        %v4334 = vmax.f32 %v4284, 0.0
        %v4335 = vmax.f32 %v4287, 0.0
        %v4336 = vmax.f32 %v4292, 0.0
        %v4337 = vmax.f32 %v4295, 0.0
        %v4338 = vmax.f32 %v4300, 0.0
        %v4339 = vmax.f32 %v4303, 0.0
        %v4340 = vmax.f32 %v4308, 0.0
        %v4341 = vmax.f32 %v4311, 0.0
        %v4342 = vmax.f32 %v4316, 0.0
        %v4343 = vmax.f32 %v4319, 0.0
        %v4344 = vmax.f32 %v4324, 0.0
        %v4345 = vmax.f32 %v4327, 0.0
        %v4346 = vld [vmem:[#allocation3] sm:$0xff]
        %v4347 = vld [vmem:[#allocation3 + $0x8] sm:$0xff]
        %v4348 = vld [vmem:[#allocation3 + $0x10] sm:$0xff]
        %v4349 = vld [vmem:[#allocation3 + $0x18] sm:$0xff]
        %v4350 = vld [vmem:[#allocation3 + $0x20] sm:$0xff]
        %v4351 = vld [vmem:[#allocation3 + $0x28] sm:$0xff]
        %v4352 = vld [vmem:[#allocation3 + $0x30] sm:$0xff]
        %v4353 = vld [vmem:[#allocation3 + $0x38] sm:$0xff]
        %v4354 = vld [vmem:[#allocation3 + $0x40] sm:$0xff]
        %v4355 = vld [vmem:[#allocation3 + $0x48] sm:$0xff]
        %v4356 = vld [vmem:[#allocation3 + $0x50] sm:$0xff]
        %v4357 = vld [vmem:[#allocation3 + $0x58] sm:$0xff]
        %v4358 = vld [vmem:[#allocation3 + $0x60] sm:$0xff]
        %v4359 = vld [vmem:[#allocation3 + $0x68] sm:$0xff]
        %v4360 = vld [vmem:[#allocation3 + $0x70] sm:$0xff]
        %v4361 = vld [vmem:[#allocation3 + $0x78] sm:$0xff]
        %v4362 = vpack.c.bf16 %v4331, %v4330
        %v4363 = vpack.c.bf16 %v4333, %v4332
        %v4364 = vpack.c.bf16 %v4335, %v4334
        %v4365 = vpack.c.bf16 %v4337, %v4336
        %v4366 = vpack.c.bf16 %v4339, %v4338
        %v4367 = vpack.c.bf16 %v4341, %v4340
        %v4368 = vpack.c.bf16 %v4343, %v4342
        %v4369 = vpack.c.bf16 %v4345, %v4344
        %v4370 = vld [vmem:[%s593] sm:$0xf]
        %v4371 = vld [vmem:[%s593 + $0x4] sm:$0xf]
        %v4372 = vld [vmem:[%s593 + $0x8] sm:$0xf]
        %v4373 = vld [vmem:[%s593 + $0xc] sm:$0xf]
        %v4374 = vld [vmem:[%s593 + $0x10] sm:$0xf]
        %v4375 = vld [vmem:[%s593 + $0x14] sm:$0xf]
        %v4376 = vld [vmem:[%s593 + $0x18] sm:$0xf]
        %v4377 = vld [vmem:[%s593 + $0x1c] sm:$0xf]
        %v4378 = vld [vmem:[%s593 + $0x20] sm:$0xf]
        %v4379 = vld [vmem:[%s593 + $0x24] sm:$0xf]
        %v4380 = vld [vmem:[%s593 + $0x28] sm:$0xf]
        %v4381 = vld [vmem:[%s593 + $0x2c] sm:$0xf]
        %v4382 = vld [vmem:[%s593 + $0x30] sm:$0xf]
        %v4383 = vld [vmem:[%s593 + $0x34] sm:$0xf]
        %v4384 = vld [vmem:[%s593 + $0x38] sm:$0xf]
        %v4385 = vld [vmem:[%s593 + $0x3c] sm:$0xf]
        %v4402 = vunpack.c.l.b16 %v4370
        %v4403 = vunpack.c.l.b16 %v4371
        %v4404 = vunpack.c.l.b16 %v4372
        %v4405 = vunpack.c.l.b16 %v4373
        %v4406 = vunpack.c.l.b16 %v4374
        %v4407 = vunpack.c.l.b16 %v4375
        %v4408 = vunpack.c.l.b16 %v4376
        %v4409 = vunpack.c.l.b16 %v4377
        %v4410 = vunpack.c.l.b16 %v4378
        %v4411 = vunpack.c.l.b16 %v4379
        %v4412 = vunpack.c.l.b16 %v4380
        %v4413 = vunpack.c.l.b16 %v4381
        %v4414 = vunpack.c.l.b16 %v4382
        %v4415 = vunpack.c.l.b16 %v4383
        %v4416 = vunpack.c.l.b16 %v4384
        %v4417 = vunpack.c.l.b16 %v4385
        %v4418 = vpack.c.b16 %v4403, %v4402
        %v4419 = vpack.c.b16 %v4405, %v4404
        %v4420 = vpack.c.b16 %v4407, %v4406
        %v4421 = vpack.c.b16 %v4409, %v4408
        %v4422 = vpack.c.b16 %v4411, %v4410
        %v4423 = vpack.c.b16 %v4413, %v4412
        %v4424 = vpack.c.b16 %v4415, %v4414
        %v4425 = vpack.c.b16 %v4417, %v4416
        %4434 = vmatprep.subr.bf16.mxu0 0
        %4435 = vmatpush1.bf16.msra.mxu0 %v4418
        %4436 = vmatprep.subr.bf16.mxu0 0
        %4437 = vmatpush1.bf16.msra.mxu0 %v4419
        %4438 = vmatprep.subr.bf16.mxu0 0
        %4439 = vmatpush1.bf16.msra.mxu0 %v4420
        %4440 = vmatprep.subr.bf16.mxu0 0
        %4441 = vmatpush1.bf16.msra.mxu0 %v4421
        %4442 = vmatprep.subr.bf16.mxu0 0
        %4443 = vmatpush1.bf16.msra.mxu0 %v4422
        %4444 = vmatprep.subr.bf16.mxu0 0
        %4445 = vmatpush1.bf16.msra.mxu0 %v4423
        %4446 = vmatprep.subr.bf16.mxu0 0
        %4447 = vmatpush1.bf16.msra.mxu0 %v4424
        %4448 = vmatprep.subr.bf16.mxu0 0
        %4449 = vmatpush1.bf16.msra.mxu0 %v4425
        %4450 = vmatprep.subr.bf16.mxu0 0
        %4451 = vmatpush1.bf16.msra.mxu0 0
        %4452 = vmatprep.subr.bf16.mxu0 0
        %4453 = vmatpush1.bf16.msra.mxu0 0
        %4454 = vmatprep.subr.bf16.mxu0 0
        %4455 = vmatpush1.bf16.msra.mxu0 0
        %4456 = vmatprep.subr.bf16.mxu0 0
        %4457 = vmatpush1.bf16.msra.mxu0 0
        %4458 = vmatprep.subr.bf16.mxu0 0
        %4459 = vmatpush1.bf16.msra.mxu0 0
        %4460 = vmatprep.subr.bf16.mxu0 0
        %4461 = vmatpush1.bf16.msra.mxu0 0
        %4462 = vmatprep.subr.bf16.mxu0 0
        %4463 = vmatpush1.bf16.msra.mxu0 0
        %4464 = vmatprep.subr.bf16.mxu0 0
        %4465 = vmatpush1.bf16.msra.mxu0 0
        %4466 = vmatprep.mubr.bf16.mxu0 0
        %4467 = vmatmul.mubr.bf16.gmra.mrb[0].mxu0 %v4362
        %v4468 = vpop.f32.mrb[0].mxu0
        %v4469 = vadd.f32 0.0, %v4468
        %v4470 = vpop.f32.mrb[0].mxu0
        %v4471 = vpop.f32.mrb[0].mxu0
        %v4472 = vadd.f32 0.0, %v4471
        %v4473 = vpop.f32.mrb[0].mxu0
        %4474 = vmatprep.mubr.bf16.mxu0 0
        %4475 = vmatmul.mubr.bf16.gmra.mrb[0].mxu0 %v4363
        %v4476 = vpop.f32.mrb[0].mxu0
        %v4477 = vadd.f32 0.0, %v4476
        %v4478 = vpop.f32.mrb[0].mxu0
        %v4479 = vpop.f32.mrb[0].mxu0
        %v4480 = vadd.f32 0.0, %v4479
        %v4481 = vpop.f32.mrb[0].mxu0
        %4482 = vmatprep.mubr.bf16.mxu0 0
        %4483 = vmatmul.mubr.bf16.gmra.mrb[0].mxu0 %v4364
        %v4484 = vpop.f32.mrb[0].mxu0
        %v4485 = vadd.f32 0.0, %v4484
        %v4486 = vpop.f32.mrb[0].mxu0
        %v4487 = vpop.f32.mrb[0].mxu0
        %v4488 = vadd.f32 0.0, %v4487
        %v4489 = vpop.f32.mrb[0].mxu0
        %4490 = vmatprep.mubr.bf16.mxu0 0
        %4491 = vmatmul.mubr.bf16.gmra.mrb[0].mxu0 %v4365
        %v4492 = vpop.f32.mrb[0].mxu0
        %v4493 = vadd.f32 0.0, %v4492
        %v4494 = vpop.f32.mrb[0].mxu0
        %v4495 = vpop.f32.mrb[0].mxu0
        %v4496 = vadd.f32 0.0, %v4495
        %v4497 = vpop.f32.mrb[0].mxu0
        %4498 = vmatprep.mubr.bf16.mxu0 0
        %4499 = vmatmul.mubr.bf16.gmra.mrb[0].mxu0 %v4366
        %v4500 = vpop.f32.mrb[0].mxu0
        %v4501 = vadd.f32 0.0, %v4500
        %v4502 = vpop.f32.mrb[0].mxu0
        %v4503 = vpop.f32.mrb[0].mxu0
        %v4504 = vadd.f32 0.0, %v4503
        %v4505 = vpop.f32.mrb[0].mxu0
        %4506 = vmatprep.mubr.bf16.mxu0 0
        %4507 = vmatmul.mubr.bf16.gmra.mrb[0].mxu0 %v4367
        %v4508 = vpop.f32.mrb[0].mxu0
        %v4509 = vadd.f32 0.0, %v4508
        %v4510 = vpop.f32.mrb[0].mxu0
        %v4511 = vpop.f32.mrb[0].mxu0
        %v4512 = vadd.f32 0.0, %v4511
        %v4513 = vpop.f32.mrb[0].mxu0
        %4514 = vmatprep.mubr.bf16.mxu0 0
        %4515 = vmatmul.mubr.bf16.gmra.mrb[0].mxu0 %v4368
        %v4516 = vpop.f32.mrb[0].mxu0
        %v4517 = vadd.f32 0.0, %v4516
        %v4518 = vpop.f32.mrb[0].mxu0
        %v4519 = vpop.f32.mrb[0].mxu0
        %v4520 = vadd.f32 0.0, %v4519
        %v4521 = vpop.f32.mrb[0].mxu0
        %4522 = vmatprep.mubr.bf16.mxu0 0
        %4523 = vmatmul.mubr.bf16.gmra.mrb[0].mxu0 %v4369
        %v4524 = vpop.f32.mrb[0].mxu0
        %v4525 = vadd.f32 0.0, %v4524
        %v4526 = vpop.f32.mrb[0].mxu0
        %v4527 = vpop.f32.mrb[0].mxu0
        %v4528 = vadd.f32 0.0, %v4527
        %v4529 = vpop.f32.mrb[0].mxu0
        %4530 = vdwg.mxu0
        %v4531 = vadd.f32 %v4346, %v4469
        %v4532 = vadd.f32 %v4347, %v4472
        %v4533 = vadd.f32 %v4348, %v4477
        %v4534 = vadd.f32 %v4349, %v4480
        %v4535 = vadd.f32 %v4350, %v4485
        %v4536 = vadd.f32 %v4351, %v4488
        %v4537 = vadd.f32 %v4352, %v4493
        %v4538 = vadd.f32 %v4353, %v4496
        %v4539 = vadd.f32 %v4354, %v4501
        %v4540 = vadd.f32 %v4355, %v4504
        %v4541 = vadd.f32 %v4356, %v4509
        %v4542 = vadd.f32 %v4357, %v4512
        %v4543 = vadd.f32 %v4358, %v4517
        %v4544 = vadd.f32 %v4359, %v4520
        %v4545 = vadd.f32 %v4360, %v4525
        %v4546 = vadd.f32 %v4361, %v4528
        %4547 = vst [vmem:[#allocation3] sm:$0xff] %v4531
        %4548 = vst [vmem:[#allocation3 + $0x8] sm:$0xff] %v4532
        %4549 = vst [vmem:[#allocation3 + $0x10] sm:$0xff] %v4533
        %4550 = vst [vmem:[#allocation3 + $0x18] sm:$0xff] %v4534
        %4551 = vst [vmem:[#allocation3 + $0x20] sm:$0xff] %v4535
        %4552 = vst [vmem:[#allocation3 + $0x28] sm:$0xff] %v4536
        %4553 = vst [vmem:[#allocation3 + $0x30] sm:$0xff] %v4537
        %4554 = vst [vmem:[#allocation3 + $0x38] sm:$0xff] %v4538
        %4555 = vst [vmem:[#allocation3 + $0x40] sm:$0xff] %v4539
        %4556 = vst [vmem:[#allocation3 + $0x48] sm:$0xff] %v4540
        %4557 = vst [vmem:[#allocation3 + $0x50] sm:$0xff] %v4541
        %4558 = vst [vmem:[#allocation3 + $0x58] sm:$0xff] %v4542
        %4559 = vst [vmem:[#allocation3 + $0x60] sm:$0xff] %v4543
        %4560 = vst [vmem:[#allocation3 + $0x68] sm:$0xff] %v4544
        %4561 = vst [vmem:[#allocation3 + $0x70] sm:$0xff] %v4545
        %4562 = vst [vmem:[#allocation3 + $0x78] sm:$0xff] %v4546
        %p4563 = scmp.eq.s32.totalorder %s41, 1
        // Predicated region
        $region109: #{tpu_custom_call.1} parent=75 // pred_check
          %p4564 = pneg %p4563
        $region110: #{tpu_custom_call.1} parent=75 // pred_check_branch
          %4566 = sbr.rel (%p4564) target = $region112
        $region111: #{tpu_custom_call.1} parent=75 // pred_region
          %v4567 = vld [vmem:[#allocation3] sm:$0xff]
          %v4568 = vld [vmem:[#allocation3 + $0x8] sm:$0xff]
          %v4569 = vld [vmem:[#allocation3 + $0x10] sm:$0xff]
          %v4570 = vld [vmem:[#allocation3 + $0x18] sm:$0xff]
          %v4571 = vld [vmem:[#allocation3 + $0x20] sm:$0xff]
          %v4572 = vld [vmem:[#allocation3 + $0x28] sm:$0xff]
          %v4573 = vld [vmem:[#allocation3 + $0x30] sm:$0xff]
          %v4574 = vld [vmem:[#allocation3 + $0x38] sm:$0xff]
          %v4575 = vld [vmem:[#allocation3 + $0x40] sm:$0xff]
          %v4576 = vld [vmem:[#allocation3 + $0x48] sm:$0xff]
          %v4577 = vld [vmem:[#allocation3 + $0x50] sm:$0xff]
          %v4578 = vld [vmem:[#allocation3 + $0x58] sm:$0xff]
          %v4579 = vld [vmem:[#allocation3 + $0x60] sm:$0xff]
          %v4580 = vld [vmem:[#allocation3 + $0x68] sm:$0xff]
          %v4581 = vld [vmem:[#allocation3 + $0x70] sm:$0xff]
          %v4582 = vld [vmem:[#allocation3 + $0x78] sm:$0xff]
          %v4583 = vld [vmem:[%s9] sm:$0x1]
          %v4585 = vlaneseq
          %v4586 = vshrl.u32 %v4585, 7
          %v4587 = vsub.s32 0, %v4586
          %v4588 = vrot.slane %v4583, %v4587
          %v4590 = vadd.f32 %v4567, %v4588
          %v4591 = vadd.f32 %v4568, %v4588
          %v4592 = vadd.f32 %v4569, %v4588
          %v4593 = vadd.f32 %v4570, %v4588
          %v4594 = vadd.f32 %v4571, %v4588
          %v4595 = vadd.f32 %v4572, %v4588
          %v4596 = vadd.f32 %v4573, %v4588
          %v4597 = vadd.f32 %v4574, %v4588
          %v4598 = vadd.f32 %v4575, %v4588
          %v4599 = vadd.f32 %v4576, %v4588
          %v4600 = vadd.f32 %v4577, %v4588
          %v4601 = vadd.f32 %v4578, %v4588
          %v4602 = vadd.f32 %v4579, %v4588
          %v4603 = vadd.f32 %v4580, %v4588
          %v4604 = vadd.f32 %v4581, %v4588
          %v4605 = vadd.f32 %v4582, %v4588
          %v4606 = vld [vmem:[#allocation2] sm:$0xff]
          %v4607 = vld [vmem:[#allocation2 + $0x8] sm:$0xff]
          %v4608 = vld [vmem:[#allocation2 + $0x10] sm:$0xff]
          %v4609 = vld [vmem:[#allocation2 + $0x18] sm:$0xff]
          %v4610 = vld [vmem:[#allocation2 + $0x20] sm:$0xff]
          %v4611 = vld [vmem:[#allocation2 + $0x28] sm:$0xff]
          %v4612 = vld [vmem:[#allocation2 + $0x30] sm:$0xff]
          %v4613 = vld [vmem:[#allocation2 + $0x38] sm:$0xff]
          %v4614 = vunpack.c.l.bf16 %v4606
          %v4615 = vunpack.c.h.bf16 %v4606
          %v4616 = vunpack.c.l.bf16 %v4607
          %v4617 = vunpack.c.h.bf16 %v4607
          %v4618 = vunpack.c.l.bf16 %v4608
          %v4619 = vunpack.c.h.bf16 %v4608
          %v4620 = vunpack.c.l.bf16 %v4609
          %v4621 = vunpack.c.h.bf16 %v4609
          %v4622 = vunpack.c.l.bf16 %v4610
          %v4623 = vunpack.c.h.bf16 %v4610
          %v4624 = vunpack.c.l.bf16 %v4611
          %v4625 = vunpack.c.h.bf16 %v4611
          %v4626 = vunpack.c.l.bf16 %v4612
          %v4627 = vunpack.c.h.bf16 %v4612
          %v4628 = vunpack.c.l.bf16 %v4613
          %v4629 = vunpack.c.h.bf16 %v4613
          %v4630 = vadd.f32 %v4614, %v4590
          %v4631 = vadd.f32 %v4615, %v4591
          %v4632 = vadd.f32 %v4616, %v4592
          %v4633 = vadd.f32 %v4617, %v4593
          %v4634 = vadd.f32 %v4618, %v4594
          %v4635 = vadd.f32 %v4619, %v4595
          %v4636 = vadd.f32 %v4620, %v4596
          %v4637 = vadd.f32 %v4621, %v4597
          %v4638 = vadd.f32 %v4622, %v4598
          %v4639 = vadd.f32 %v4623, %v4599
          %v4640 = vadd.f32 %v4624, %v4600
          %v4641 = vadd.f32 %v4625, %v4601
          %v4642 = vadd.f32 %v4626, %v4602
          %v4643 = vadd.f32 %v4627, %v4603
          %v4644 = vadd.f32 %v4628, %v4604
          %v4645 = vadd.f32 %v4629, %v4605
          %v4646 = vld [vmem:[%s12] sm:$0x1]
          %v4647 = vld [vmem:[%s13] sm:$0x1]
          %4648 = vadd.xlane.f32.xlu0 %v4630
          %v4649 = vpop.xlane.xlu0 %4648
          %4650 = vadd.xlane.f32.xlu0 %v4631
          %v4651 = vpop.xlane.xlu0 %4650
          %4652 = vadd.xlane.f32.xlu0 %v4632
          %v4653 = vpop.xlane.xlu0 %4652
          %4654 = vadd.xlane.f32.xlu0 %v4633
          %v4655 = vpop.xlane.xlu0 %4654
          %4656 = vadd.xlane.f32.xlu0 %v4634
          %v4657 = vpop.xlane.xlu0 %4656
          %4658 = vadd.xlane.f32.xlu0 %v4635
          %v4659 = vpop.xlane.xlu0 %4658
          %4660 = vadd.xlane.f32.xlu0 %v4636
          %v4661 = vpop.xlane.xlu0 %4660
          %4662 = vadd.xlane.f32.xlu0 %v4637
          %v4663 = vpop.xlane.xlu0 %4662
          %4664 = vadd.xlane.f32.xlu0 %v4638
          %v4665 = vpop.xlane.xlu0 %4664
          %4666 = vadd.xlane.f32.xlu0 %v4639
          %v4667 = vpop.xlane.xlu0 %4666
          %4668 = vadd.xlane.f32.xlu0 %v4640
          %v4669 = vpop.xlane.xlu0 %4668
          %4670 = vadd.xlane.f32.xlu0 %v4641
          %v4671 = vpop.xlane.xlu0 %4670
          %4672 = vadd.xlane.f32.xlu0 %v4642
          %v4673 = vpop.xlane.xlu0 %4672
          %4674 = vadd.xlane.f32.xlu0 %v4643
          %v4675 = vpop.xlane.xlu0 %4674
          %4676 = vadd.xlane.f32.xlu0 %v4644
          %v4677 = vpop.xlane.xlu0 %4676
          %4678 = vadd.xlane.f32.xlu0 %v4645
          %v4679 = vpop.xlane.xlu0 %4678
          %v4680 = vrcp.pop 128.0
          %v4681 = vmul.f32 %v4649, %v4680
          %v4682 = vmul.f32 %v4651, %v4680
          %v4683 = vmul.f32 %v4653, %v4680
          %v4684 = vmul.f32 %v4655, %v4680
          %v4685 = vmul.f32 %v4657, %v4680
          %v4686 = vmul.f32 %v4659, %v4680
          %v4687 = vmul.f32 %v4661, %v4680
          %v4688 = vmul.f32 %v4663, %v4680
          %v4689 = vmul.f32 %v4665, %v4680
          %v4690 = vmul.f32 %v4667, %v4680
          %v4691 = vmul.f32 %v4669, %v4680
          %v4692 = vmul.f32 %v4671, %v4680
          %v4693 = vmul.f32 %v4673, %v4680
          %v4694 = vmul.f32 %v4675, %v4680
          %v4695 = vmul.f32 %v4677, %v4680
          %v4696 = vmul.f32 %v4679, %v4680
          %v4697 = vsub.f32 %v4630, %v4681
          %v4698 = vsub.f32 %v4631, %v4682
          %v4699 = vsub.f32 %v4632, %v4683
          %v4700 = vsub.f32 %v4633, %v4684
          %v4701 = vsub.f32 %v4634, %v4685
          %v4702 = vsub.f32 %v4635, %v4686
          %v4703 = vsub.f32 %v4636, %v4687
          %v4704 = vsub.f32 %v4637, %v4688
          %v4705 = vsub.f32 %v4638, %v4689
          %v4706 = vsub.f32 %v4639, %v4690
          %v4707 = vsub.f32 %v4640, %v4691
          %v4708 = vsub.f32 %v4641, %v4692
          %v4709 = vsub.f32 %v4642, %v4693
          %v4710 = vsub.f32 %v4643, %v4694
          %v4711 = vsub.f32 %v4644, %v4695
          %v4712 = vsub.f32 %v4645, %v4696
          %v4713 = vmul.f32 %v4697, %v4697
          %v4714 = vmul.f32 %v4698, %v4698
          %v4715 = vmul.f32 %v4699, %v4699
          %v4716 = vmul.f32 %v4700, %v4700
          %v4717 = vmul.f32 %v4701, %v4701
          %v4718 = vmul.f32 %v4702, %v4702
          %v4719 = vmul.f32 %v4703, %v4703
          %v4720 = vmul.f32 %v4704, %v4704
          %v4721 = vmul.f32 %v4705, %v4705
          %v4722 = vmul.f32 %v4706, %v4706
          %v4723 = vmul.f32 %v4707, %v4707
          %v4724 = vmul.f32 %v4708, %v4708
          %v4725 = vmul.f32 %v4709, %v4709
          %v4726 = vmul.f32 %v4710, %v4710
          %v4727 = vmul.f32 %v4711, %v4711
          %v4728 = vmul.f32 %v4712, %v4712
          %4729 = vadd.xlane.f32.xlu0 %v4713
          %v4730 = vpop.xlane.xlu0 %4729
          %4731 = vadd.xlane.f32.xlu0 %v4714
          %v4732 = vpop.xlane.xlu0 %4731
          %4733 = vadd.xlane.f32.xlu0 %v4715
          %v4734 = vpop.xlane.xlu0 %4733
          %4735 = vadd.xlane.f32.xlu0 %v4716
          %v4736 = vpop.xlane.xlu0 %4735
          %4737 = vadd.xlane.f32.xlu0 %v4717
          %v4738 = vpop.xlane.xlu0 %4737
          %4739 = vadd.xlane.f32.xlu0 %v4718
          %v4740 = vpop.xlane.xlu0 %4739
          %4741 = vadd.xlane.f32.xlu0 %v4719
          %v4742 = vpop.xlane.xlu0 %4741
          %4743 = vadd.xlane.f32.xlu0 %v4720
          %v4744 = vpop.xlane.xlu0 %4743
          %4745 = vadd.xlane.f32.xlu0 %v4721
          %v4746 = vpop.xlane.xlu0 %4745
          %4747 = vadd.xlane.f32.xlu0 %v4722
          %v4748 = vpop.xlane.xlu0 %4747
          %4749 = vadd.xlane.f32.xlu0 %v4723
          %v4750 = vpop.xlane.xlu0 %4749
          %4751 = vadd.xlane.f32.xlu0 %v4724
          %v4752 = vpop.xlane.xlu0 %4751
          %4753 = vadd.xlane.f32.xlu0 %v4725
          %v4754 = vpop.xlane.xlu0 %4753
          %4755 = vadd.xlane.f32.xlu0 %v4726
          %v4756 = vpop.xlane.xlu0 %4755
          %4757 = vadd.xlane.f32.xlu0 %v4727
          %v4758 = vpop.xlane.xlu0 %4757
          %4759 = vadd.xlane.f32.xlu0 %v4728
          %v4760 = vpop.xlane.xlu0 %4759
          %v4761 = vmul.f32 %v4730, %v4680
          %v4762 = vmul.f32 %v4732, %v4680
          %v4763 = vmul.f32 %v4734, %v4680
          %v4764 = vmul.f32 %v4736, %v4680
          %v4765 = vmul.f32 %v4738, %v4680
          %v4766 = vmul.f32 %v4740, %v4680
          %v4767 = vmul.f32 %v4742, %v4680
          %v4768 = vmul.f32 %v4744, %v4680
          %v4769 = vmul.f32 %v4746, %v4680
          %v4770 = vmul.f32 %v4748, %v4680
          %v4771 = vmul.f32 %v4750, %v4680
          %v4772 = vmul.f32 %v4752, %v4680
          %v4773 = vmul.f32 %v4754, %v4680
          %v4774 = vmul.f32 %v4756, %v4680
          %v4775 = vmul.f32 %v4758, %v4680
          %v4776 = vmul.f32 %v4760, %v4680
          %v4777 = vadd.f32 %v4761, 1e-05
          %v4778 = vadd.f32 %v4762, 1e-05
          %v4779 = vadd.f32 %v4763, 1e-05
          %v4780 = vadd.f32 %v4764, 1e-05
          %v4781 = vadd.f32 %v4765, 1e-05
          %v4782 = vadd.f32 %v4766, 1e-05
          %v4783 = vadd.f32 %v4767, 1e-05
          %v4784 = vadd.f32 %v4768, 1e-05
          %v4785 = vadd.f32 %v4769, 1e-05
          %v4786 = vadd.f32 %v4770, 1e-05
          %v4787 = vadd.f32 %v4771, 1e-05
          %v4788 = vadd.f32 %v4772, 1e-05
          %v4789 = vadd.f32 %v4773, 1e-05
          %v4790 = vadd.f32 %v4774, 1e-05
          %v4791 = vadd.f32 %v4775, 1e-05
          %v4792 = vadd.f32 %v4776, 1e-05
          %v4793 = vrsqrt.pop %v4777
          %v4794 = vmul.f32 %v4777, %v4793
          %vm4795 = vcmp.eq.f32.partialorder %v4777, inf
          %v4796 = vsel %vm4795, %v4777, %v4794
          %vm4797 = vcmp.eq.f32.partialorder %v4777, 0.0
          %v4798 = vand.u32 %v4777, 2147483648
          %v4799 = vsel %vm4797, %v4798, %v4796
          %v4800 = vrsqrt.pop %v4778
          %v4801 = vmul.f32 %v4778, %v4800
          %vm4802 = vcmp.eq.f32.partialorder %v4778, inf
          %v4803 = vsel %vm4802, %v4778, %v4801
          %vm4804 = vcmp.eq.f32.partialorder %v4778, 0.0
          %v4805 = vand.u32 %v4778, 2147483648
          %v4806 = vsel %vm4804, %v4805, %v4803
          %v4807 = vrsqrt.pop %v4779
          %v4808 = vmul.f32 %v4779, %v4807
          %vm4809 = vcmp.eq.f32.partialorder %v4779, inf
          %v4810 = vsel %vm4809, %v4779, %v4808
          %vm4811 = vcmp.eq.f32.partialorder %v4779, 0.0
          %v4812 = vand.u32 %v4779, 2147483648
          %v4813 = vsel %vm4811, %v4812, %v4810
          %v4814 = vrsqrt.pop %v4780
          %v4815 = vmul.f32 %v4780, %v4814
          %vm4816 = vcmp.eq.f32.partialorder %v4780, inf
          %v4817 = vsel %vm4816, %v4780, %v4815
          %vm4818 = vcmp.eq.f32.partialorder %v4780, 0.0
          %v4819 = vand.u32 %v4780, 2147483648
          %v4820 = vsel %vm4818, %v4819, %v4817
          %v4821 = vrsqrt.pop %v4781
          %v4822 = vmul.f32 %v4781, %v4821
          %vm4823 = vcmp.eq.f32.partialorder %v4781, inf
          %v4824 = vsel %vm4823, %v4781, %v4822
          %vm4825 = vcmp.eq.f32.partialorder %v4781, 0.0
          %v4826 = vand.u32 %v4781, 2147483648
          %v4827 = vsel %vm4825, %v4826, %v4824
          %v4828 = vrsqrt.pop %v4782
          %v4829 = vmul.f32 %v4782, %v4828
          %vm4830 = vcmp.eq.f32.partialorder %v4782, inf
          %v4831 = vsel %vm4830, %v4782, %v4829
          %vm4832 = vcmp.eq.f32.partialorder %v4782, 0.0
          %v4833 = vand.u32 %v4782, 2147483648
          %v4834 = vsel %vm4832, %v4833, %v4831
          %v4835 = vrsqrt.pop %v4783
          %v4836 = vmul.f32 %v4783, %v4835
          %vm4837 = vcmp.eq.f32.partialorder %v4783, inf
          %v4838 = vsel %vm4837, %v4783, %v4836
          %vm4839 = vcmp.eq.f32.partialorder %v4783, 0.0
          %v4840 = vand.u32 %v4783, 2147483648
          %v4841 = vsel %vm4839, %v4840, %v4838
          %v4842 = vrsqrt.pop %v4784
          %v4843 = vmul.f32 %v4784, %v4842
          %vm4844 = vcmp.eq.f32.partialorder %v4784, inf
          %v4845 = vsel %vm4844, %v4784, %v4843
          %vm4846 = vcmp.eq.f32.partialorder %v4784, 0.0
          %v4847 = vand.u32 %v4784, 2147483648
          %v4848 = vsel %vm4846, %v4847, %v4845
          %v4849 = vrsqrt.pop %v4785
          %v4850 = vmul.f32 %v4785, %v4849
          %vm4851 = vcmp.eq.f32.partialorder %v4785, inf
          %v4852 = vsel %vm4851, %v4785, %v4850
          %vm4853 = vcmp.eq.f32.partialorder %v4785, 0.0
          %v4854 = vand.u32 %v4785, 2147483648
          %v4855 = vsel %vm4853, %v4854, %v4852
          %v4856 = vrsqrt.pop %v4786
          %v4857 = vmul.f32 %v4786, %v4856
          %vm4858 = vcmp.eq.f32.partialorder %v4786, inf
          %v4859 = vsel %vm4858, %v4786, %v4857
          %vm4860 = vcmp.eq.f32.partialorder %v4786, 0.0
          %v4861 = vand.u32 %v4786, 2147483648
          %v4862 = vsel %vm4860, %v4861, %v4859
          %v4863 = vrsqrt.pop %v4787
          %v4864 = vmul.f32 %v4787, %v4863
          %vm4865 = vcmp.eq.f32.partialorder %v4787, inf
          %v4866 = vsel %vm4865, %v4787, %v4864
          %vm4867 = vcmp.eq.f32.partialorder %v4787, 0.0
          %v4868 = vand.u32 %v4787, 2147483648
          %v4869 = vsel %vm4867, %v4868, %v4866
          %v4870 = vrsqrt.pop %v4788
          %v4871 = vmul.f32 %v4788, %v4870
          %vm4872 = vcmp.eq.f32.partialorder %v4788, inf
          %v4873 = vsel %vm4872, %v4788, %v4871
          %vm4874 = vcmp.eq.f32.partialorder %v4788, 0.0
          %v4875 = vand.u32 %v4788, 2147483648
          %v4876 = vsel %vm4874, %v4875, %v4873
          %v4877 = vrsqrt.pop %v4789
          %v4878 = vmul.f32 %v4789, %v4877
          %vm4879 = vcmp.eq.f32.partialorder %v4789, inf
          %v4880 = vsel %vm4879, %v4789, %v4878
          %vm4881 = vcmp.eq.f32.partialorder %v4789, 0.0
          %v4882 = vand.u32 %v4789, 2147483648
          %v4883 = vsel %vm4881, %v4882, %v4880
          %v4884 = vrsqrt.pop %v4790
          %v4885 = vmul.f32 %v4790, %v4884
          %vm4886 = vcmp.eq.f32.partialorder %v4790, inf
          %v4887 = vsel %vm4886, %v4790, %v4885
          %vm4888 = vcmp.eq.f32.partialorder %v4790, 0.0
          %v4889 = vand.u32 %v4790, 2147483648
          %v4890 = vsel %vm4888, %v4889, %v4887
          %v4891 = vrsqrt.pop %v4791
          %v4892 = vmul.f32 %v4791, %v4891
          %vm4893 = vcmp.eq.f32.partialorder %v4791, inf
          %v4894 = vsel %vm4893, %v4791, %v4892
          %vm4895 = vcmp.eq.f32.partialorder %v4791, 0.0
          %v4896 = vand.u32 %v4791, 2147483648
          %v4897 = vsel %vm4895, %v4896, %v4894
          %v4898 = vrsqrt.pop %v4792
          %v4899 = vmul.f32 %v4792, %v4898
          %vm4900 = vcmp.eq.f32.partialorder %v4792, inf
          %v4901 = vsel %vm4900, %v4792, %v4899
          %vm4902 = vcmp.eq.f32.partialorder %v4792, 0.0
          %v4903 = vand.u32 %v4792, 2147483648
          %v4904 = vsel %vm4902, %v4903, %v4901
          %v4905 = vrcp.pop %v4799
          %v4906 = vmul.f32 %v4697, %v4905
          %v4907 = vrcp.pop %v4806
          %v4908 = vmul.f32 %v4698, %v4907
          %v4909 = vrcp.pop %v4813
          %v4910 = vmul.f32 %v4699, %v4909
          %v4911 = vrcp.pop %v4820
          %v4912 = vmul.f32 %v4700, %v4911
          %v4913 = vrcp.pop %v4827
          %v4914 = vmul.f32 %v4701, %v4913
          %v4915 = vrcp.pop %v4834
          %v4916 = vmul.f32 %v4702, %v4915
          %v4917 = vrcp.pop %v4841
          %v4918 = vmul.f32 %v4703, %v4917
          %v4919 = vrcp.pop %v4848
          %v4920 = vmul.f32 %v4704, %v4919
          %v4921 = vrcp.pop %v4855
          %v4922 = vmul.f32 %v4705, %v4921
          %v4923 = vrcp.pop %v4862
          %v4924 = vmul.f32 %v4706, %v4923
          %v4925 = vrcp.pop %v4869
          %v4926 = vmul.f32 %v4707, %v4925
          %v4927 = vrcp.pop %v4876
          %v4928 = vmul.f32 %v4708, %v4927
          %v4929 = vrcp.pop %v4883
          %v4930 = vmul.f32 %v4709, %v4929
          %v4931 = vrcp.pop %v4890
          %v4932 = vmul.f32 %v4710, %v4931
          %v4933 = vrcp.pop %v4897
          %v4934 = vmul.f32 %v4711, %v4933
          %v4935 = vrcp.pop %v4904
          %v4936 = vmul.f32 %v4712, %v4935
          %v4938 = vlaneseq
          %v4939 = vshrl.u32 %v4938, 7
          %v4940 = vsub.s32 0, %v4939
          %v4941 = vrot.slane %v4646, %v4940
          %v4943 = vmul.f32 %v4906, %v4941
          %v4944 = vmul.f32 %v4908, %v4941
          %v4945 = vmul.f32 %v4910, %v4941
          %v4946 = vmul.f32 %v4912, %v4941
          %v4947 = vmul.f32 %v4914, %v4941
          %v4948 = vmul.f32 %v4916, %v4941
          %v4949 = vmul.f32 %v4918, %v4941
          %v4950 = vmul.f32 %v4920, %v4941
          %v4951 = vmul.f32 %v4922, %v4941
          %v4952 = vmul.f32 %v4924, %v4941
          %v4953 = vmul.f32 %v4926, %v4941
          %v4954 = vmul.f32 %v4928, %v4941
          %v4955 = vmul.f32 %v4930, %v4941
          %v4956 = vmul.f32 %v4932, %v4941
          %v4957 = vmul.f32 %v4934, %v4941
          %v4958 = vmul.f32 %v4936, %v4941
          %v4960 = vlaneseq
          %v4961 = vshrl.u32 %v4960, 7
          %v4962 = vsub.s32 0, %v4961
          %v4963 = vrot.slane %v4647, %v4962
          %v4965 = vadd.f32 %v4943, %v4963
          %v4966 = vadd.f32 %v4944, %v4963
          %v4967 = vadd.f32 %v4945, %v4963
          %v4968 = vadd.f32 %v4946, %v4963
          %v4969 = vadd.f32 %v4947, %v4963
          %v4970 = vadd.f32 %v4948, %v4963
          %v4971 = vadd.f32 %v4949, %v4963
          %v4972 = vadd.f32 %v4950, %v4963
          %v4973 = vadd.f32 %v4951, %v4963
          %v4974 = vadd.f32 %v4952, %v4963
          %v4975 = vadd.f32 %v4953, %v4963
          %v4976 = vadd.f32 %v4954, %v4963
          %v4977 = vadd.f32 %v4955, %v4963
          %v4978 = vadd.f32 %v4956, %v4963
          %v4979 = vadd.f32 %v4957, %v4963
          %v4980 = vadd.f32 %v4958, %v4963
          %4981 = vst [vmem:[%s653] sm:$0xff] %v4965
          %4982 = vst [vmem:[%s653 + $0x8] sm:$0xff] %v4966
          %4983 = vst [vmem:[%s653 + $0x10] sm:$0xff] %v4967
          %4984 = vst [vmem:[%s653 + $0x18] sm:$0xff] %v4968
          %4985 = vst [vmem:[%s653 + $0x20] sm:$0xff] %v4969
          %4986 = vst [vmem:[%s653 + $0x28] sm:$0xff] %v4970
          %4987 = vst [vmem:[%s653 + $0x30] sm:$0xff] %v4971
          %4988 = vst [vmem:[%s653 + $0x38] sm:$0xff] %v4972
          %4989 = vst [vmem:[%s653 + $0x40] sm:$0xff] %v4973
          %4990 = vst [vmem:[%s653 + $0x48] sm:$0xff] %v4974
          %4991 = vst [vmem:[%s653 + $0x50] sm:$0xff] %v4975
          %4992 = vst [vmem:[%s653 + $0x58] sm:$0xff] %v4976
          %4993 = vst [vmem:[%s653 + $0x60] sm:$0xff] %v4977
          %4994 = vst [vmem:[%s653 + $0x68] sm:$0xff] %v4978
          %4995 = vst [vmem:[%s653 + $0x70] sm:$0xff] %v4979
          %4996 = vst [vmem:[%s653 + $0x78] sm:$0xff] %v4980
        $region112: #{tpu_custom_call.1} parent=75 // pred_fallthru
          _
        %s4997 = sand.u32 %s375, 1
        %s4998 = scalar_lea.sflag [#allocation6], %s4997
        %s4999 = sand.u32 %s375, 1
        %s5000 = smul.addr %s4999, 128
        %s5001 = scalar_lea.vmem [#allocation16], %s5000
        // Predicated region
        $region113: #{tpu_custom_call.1} parent=75 // pred_check
          %p5002 = pneg %p385
        $region114: #{tpu_custom_call.1} parent=75 // pred_check_branch
          %5004 = sbr.rel (%p5002) target = $region116
        $region115: #{tpu_custom_call.1} parent=75 // pred_region
          %s5006 = ssub.s32 2048, 2048
          %5007 = vsyncadd %s4998, %s5006
          %s5008 = smul.addr %s40, 16
          %s5009 = smul.addr %s5008, 128
          %s5010 = scalar_lea.hbm %s14, %s5009
          %s5011 = sshll.u32 %s5001, 4
          %s5012 = int_to_ptr.vmem [resolvable:$true] %s5011
          %5017 = dma.vmem_to_hbm [thread:$0]  %s5012, 2048, %s5010, %s4998, 128, 128, 8
        $region116: #{tpu_custom_call.1} parent=75 // pred_fallthru
          _
      $region76: #{tpu_custom_call.1} parent=5 // pred_fallthru
        _
      %p5018 = scmp.le.s32.totalorder 2, %s31
      // Predicated region
      $region117: #{tpu_custom_call.1} parent=5 // pred_check
        %p5019 = pneg %p5018
      $region118: #{tpu_custom_call.1} parent=5 // pred_check_branch
        %5021 = sbr.rel (%p5019) target = $region120
      $region119: #{tpu_custom_call.1} parent=5 // pred_region
        %s5022 = ssub.s32 %s31, 2
        // Predicated region
        $region121: #{tpu_custom_call.1} parent=119 // pred_check
          %p5023 = pneg %p391
        $region122: #{tpu_custom_call.1} parent=119 // pred_check_branch
          %5025 = sbr.rel (%p5023) target = $region124
        $region123: #{tpu_custom_call.1} parent=119 // pred_region
          %s5026 = sand.u32 %s376, 1
          %s5027 = scalar_lea.sflag [#allocation6], %s5026
          %s5028 = sand.u32 %s376, 1
          %s5029 = smul.addr %s5028, 128
          %s5030 = scalar_lea.vmem [#allocation16], %s5029
          %5031 = dma.done %s5027, 2048
        $region124: #{tpu_custom_call.1} parent=119 // pred_fallthru
          _
      $region120: #{tpu_custom_call.1} parent=5 // pred_fallthru
        _
    $region6: #{tpu_custom_call.1} parent=1 // loop_footer
      %s35 = sadd.s32 1, %s31
    $region7: #{tpu_custom_call.1} parent=1 // loop_footer_branch
      %30 = sbr.rel target = $region3
    $region8: #{tpu_custom_call.1} parent=1 // loop_exit
      _
    %5032 = vsyncpa [#allocation5], 1
    %s5033 = scalar_lea.sflag [#allocation5], 1
    %5034 = vsyncpa %s5033, 1
    %5035 = vsyncpa [#allocation8], 1
    %5036 = vsyncpa [#allocation11], 1
    %5037 = vsyncpa [#allocation14], 1
    %s5038 = scalar_lea.sflag [#allocation14], 1
    %5039 = vsyncpa %s5038, 1
    %5040 = vsyncpa [#allocation6], 1
    %s5041 = scalar_lea.sflag [#allocation6], 1
    %5042 = vsyncpa %s5041, 1

</llo_original>
